<compile_context>
chip_gen: v7x
topology: tpu7x:2x2x1
jax: 0.10.0
libtpu: 0.0.40
codegen_flags: <defaults>
</compile_context>

<pallas_src>
import math

import jax
import jax.numpy as jnp
from jax.experimental import pallas as pl
from jax.experimental.pallas import tpu as pltpu


def _round_up(x, m):
    return (x + m - 1) // m * m


def _make_kernel(num_heads, d_pad, k_real, k_pad, l_real, l_pad):
    H, Dp, Kp = num_heads, d_pad, k_pad
    inv_k = 1.0 / k_real
    eps = 1e-5
    bf16, f32 = jnp.bfloat16, jnp.float32
    mask_k = k_pad > k_real          # embed dim is zero-padded -> mask LayerNorm center
    mask_l = l_pad > l_real          # key sequence is zero-padded -> mask scores

    def layer_norm(x, g, b):
        # Two-pass (x - mu)^2 variance (numerically safer than E[x^2] - mu^2).
        mu = jnp.sum(x, axis=-1, keepdims=True) * inv_k
        xc = x - mu
        if mask_k:
            lane = jax.lax.broadcasted_iota(jnp.int32, (1, Kp), 1)
            xc = jnp.where(lane < k_real, xc, 0.0)
        var = jnp.sum(xc * xc, axis=-1, keepdims=True) * inv_k
        return xc * jax.lax.rsqrt(var + eps) * g + b

    def kernel(q_ref, k_ref, v_ref,
               wq_ref, wk_ref, wv_ref, wo_ref, w1_ref, w2_ref,
               bq_ref, bk_ref, bv_ref, bo_ref, b1_ref, b2_ref,
               g1_ref, be1_ref, g2_ref, be2_ref,
               o_ref,
               kh_scr, vh_scr, qh_scr, ctx_scr):
        j = pl.program_id(1)

        # ---- K/V projection + head split: once per batch element, cached in VMEM. ----
        @pl.when(j == 0)
        def _():
            kp = (jnp.dot(k_ref[...], wk_ref[...], preferred_element_type=f32)
                  + bk_ref[...]).astype(bf16)                      # (Lpad, H*Dp)
            vp = (jnp.dot(v_ref[...], wv_ref[...], preferred_element_type=f32)
                  + bv_ref[...]).astype(bf16)
            for h in range(H):                                     # aligned lane slices
                sl = slice(h * Dp, (h + 1) * Dp)
                kh_scr[h] = kp[:, sl]
                vh_scr[h] = vp[:, sl]

        # ---- Q projection for this q tile (softmax scale folded into wq/bq). ----
        qp = (jnp.dot(q_ref[...], wq_ref[...], preferred_element_type=f32)
              + bq_ref[...]).astype(bf16)                          # (Lq, H*Dp)
        for h in range(H):
            qh_scr[h] = qp[:, h * Dp:(h + 1) * Dp]

        # ---- Attention: one batched matmul over all heads, unpadded head dim. ----
        s = jax.lax.dot_general(qh_scr[...], kh_scr[...],
                                (((2,), (2,)), ((0,), (0,))),
                                preferred_element_type=f32)        # (H, Lq, Lpad)
        if mask_l:
            col = jax.lax.broadcasted_iota(jnp.int32, (1, 1, l_pad), 2)
            s = jnp.where(col < l_real, s, -1e30)
        s = s - jnp.max(s, axis=-1, keepdims=True)
        p = jnp.exp(s)
        p = p * pl.reciprocal(jnp.sum(p, axis=-1, keepdims=True), approx=True)
        ctx = jax.lax.dot_general(p.astype(bf16), vh_scr[...],
                                  (((2,), (1,)), ((0,), (0,))),
                                  preferred_element_type=f32)      # (H, Lq, Dp)
        ctx = ctx.astype(bf16)
        for h in range(H):                                          # repack heads on lanes
            ctx_scr[:, h * Dp:(h + 1) * Dp] = ctx[h]

        attn = (jnp.dot(ctx_scr[...], wo_ref[...], preferred_element_type=f32)
                + bo_ref[...])                                      # (Lq, Kp) f32

        # ---- Residual + LayerNorm 1 (residual upcast from bf16 input). ----
        x = layer_norm(attn + q_ref[...].astype(f32), g1_ref[...], be1_ref[...])

        # ---- Feed-forward: Linear(K, 4K) -> ReLU -> Linear(4K, K). ----
        hid = jnp.maximum(
            jnp.dot(x.astype(bf16), w1_ref[...], preferred_element_type=f32)
            + b1_ref[...], 0.0)
        y = jnp.dot(hid.astype(bf16), w2_ref[...], preferred_element_type=f32) + b2_ref[...]

        # ---- Residual + LayerNorm 2. ----
        o_ref[...] = layer_norm(y + x, g2_ref[...], be2_ref[...]).astype(o_ref.dtype)

    return kernel


def _prep_kernel_params(params, num_heads, K, D, Kp, Dp, Fp):
    """Split / transpose / zero-pad the PyTorch-layout parameters for the kernel."""
    H = num_heads
    F = 4 * K
    HDp = H * Dp
    scale = 1.0 / math.sqrt(D)
    bf, f32 = jnp.bfloat16, jnp.float32

    in_w = params["in_proj_w"].astype(f32)          # (3K, K)
    in_b = params["in_proj_b"].astype(f32)          # (3K,)

    def qkv_weight(w_rows, mult=1.0):               # (K_out, K_in) -> (Kp, H*Dp)
        wt = (w_rows * mult).T.reshape(K, H, D)
        out = jnp.zeros((Kp, H, Dp), f32).at[:K, :, :D].set(wt)
        return out.reshape(Kp, HDp).astype(bf)

    def qkv_bias(b_rows, mult=1.0):
        b = (b_rows * mult).reshape(H, D)
        return jnp.zeros((1, H, Dp), f32).at[0, :, :D].set(b).reshape(1, HDp)

    # Softmax 1/sqrt(D) scale folded into the Q projection (weights prepped once).
    wq = qkv_weight(in_w[:K], scale)
    wk = qkv_weight(in_w[K:2 * K])
    wv = qkv_weight(in_w[2 * K:])
    bq = qkv_bias(in_b[:K], scale)
    bk = qkv_bias(in_b[K:2 * K])
    bv = qkv_bias(in_b[2 * K:])

    wo_t = params["out_w"].astype(f32).T.reshape(H, D, K)
    wo = jnp.zeros((H, Dp, Kp), f32).at[:, :D, :K].set(wo_t).reshape(HDp, Kp).astype(bf)
    bo = jnp.zeros((1, Kp), f32).at[0, :K].set(params["out_b"].astype(f32))

    w1 = jnp.zeros((Kp, Fp), f32).at[:K, :F].set(params["ff1_w"].astype(f32).T).astype(bf)
    b1 = jnp.zeros((1, Fp), f32).at[0, :F].set(params["ff1_b"].astype(f32))
    w2 = jnp.zeros((Fp, Kp), f32).at[:F, :K].set(params["ff2_w"].astype(f32).T).astype(bf)
    b2 = jnp.zeros((1, Kp), f32).at[0, :K].set(params["ff2_b"].astype(f32))

    def pad_vec(v):
        return jnp.zeros((1, Kp), f32).at[0, :K].set(v.astype(f32))

    return dict(wq=wq, wk=wk, wv=wv, wo=wo, w1=w1, w2=w2,
                bq=bq, bk=bk, bv=bv, bo=bo, b1=b1, b2=b2,
                g1=pad_vec(params["ln1_w"]), be1=pad_vec(params["ln1_b"]),
                g2=pad_vec(params["ln2_w"]), be2=pad_vec(params["ln2_b"]))


def transformer_block_forward(value, key, query, params, num_heads, *, max_q_tile=512):
    """Pallas forward for TransformerBlock. Inputs are (L, N, K) like PyTorch."""
    L, N, K = query.shape
    H = num_heads
    assert K % H == 0
    D = K // H
    Kp = _round_up(K, 128)              # lane-dense embed dim
    Dp = _round_up(D, 16)               # sublane-aligned head dim (NOT padded to 128)
    Fp = _round_up(4 * K, 128)          # lane-dense FFN hidden dim
    HDp = H * Dp
    bf16 = jnp.bfloat16

    # Per-chip VMEM budget (v7x: 64 MiB, v5e/v6e: 128 MiB).
    try:
        vmem_cap = int(pltpu.get_tpu_info().vmem_capacity_bytes)
    except Exception:
        vmem_cap = 128 * 1024 * 1024
    vmem_limit = min(vmem_cap * 3 // 4, 100 * 1024 * 1024)

    # ---- q-sequence tile: cap the (H, Lq, Lpad) f32 score block's VMEM footprint. ----
    max_q_tile = max(8, _round_up(max_q_tile, 8))
    score_budget = max(8 * 1024 * 1024, vmem_limit // 4)
    Lq = _round_up(L, 8) if _round_up(L, 8) <= max_q_tile else max_q_tile
    while Lq > 128 and H * Lq * _round_up(L, Lq) * 4 > score_budget:
        Lq = max(128, _round_up(Lq // 2, 8))
    Lpad = _round_up(L, Lq)
    n_q = Lpad // Lq
    # TODO(synk): for very long sequences, also tile the K/V length (flash-style online
    # softmax) instead of holding full-(Lpad) K/V blocks and score columns in VMEM.

    kparams = _prep_kernel_params(params, H, K, D, Kp, Dp, Fp)

    # Batch-major, bf16, zero-padded inputs (single fused XLA pass per tensor).
    def prep_in(x):
        x = jnp.transpose(x, (1, 0, 2)).astype(bf16)        # (N, L, K)
        return jnp.pad(x, ((0, 0), (0, Lpad - L), (0, Kp - K)))

    q_p, k_p, v_p = prep_in(query), prep_in(key), prep_in(value)

    kernel = _make_kernel(H, Dp, K, Kp, L, Lpad)

    # One batch element per grid step (leading dim squeezed): grid = (N, q tiles).
    # TODO(synk): when N == 1 the parallel axis has a single step, so one v7x core idles.
    q_spec = pl.BlockSpec((None, Lq, Kp), lambda n, j: (n, j, 0))
    kv_spec = pl.BlockSpec((None, Lpad, Kp), lambda n, j: (n, 0, 0))

    param_order = ("wq", "wk", "wv", "wo", "w1", "w2",
                   "bq", "bk", "bv", "bo", "b1", "b2",
                   "g1", "be1", "g2", "be2")
    param_arrays = [kparams[name] for name in param_order]

    scratch = [
        pltpu.VMEM((H, Lpad, Dp), bf16),    # cached K heads (per batch element)
        pltpu.VMEM((H, Lpad, Dp), bf16),    # cached V heads
        pltpu.VMEM((H, Lq, Dp), bf16),      # Q heads for the current q tile
        pltpu.VMEM((Lq, HDp), bf16),        # packed attention context
    ]

    flops = 2 * N * (3 * Lpad * Kp * HDp          # q/k/v projections
                     + 2 * H * Lpad * Lpad * Dp   # scores + p@v
                     + Lpad * HDp * Kp            # output projection
                     + 2 * Lpad * Kp * Fp)        # feed-forward
    cost = pl.CostEstimate(
        flops=flops,
        transcendentals=N * H * Lpad * Lpad,
        bytes_accessed=(3 * N * Lpad * Kp * 2 + N * Lpad * Kp * 4
                        + 2 * (4 * Kp * HDp + 2 * Kp * Fp)),
    )

    def build(single_buffer_weights):
        extra = {"pipeline_mode": pl.Buffered(1)} if single_buffer_weights else {}
        param_specs = [pl.BlockSpec(a.shape, lambda n, j: (0, 0), **extra)
                       for a in param_arrays]
        grid_spec = pltpu.PrefetchScalarGridSpec(
            num_scalar_prefetch=0,
            grid=(N, n_q),
            in_specs=[q_spec, kv_spec, kv_spec] + param_specs,
            out_specs=q_spec,
            scratch_shapes=scratch,
        )
        return pl.pallas_call(
            kernel,
            out_shape=jax.ShapeDtypeStruct((N, Lpad, Kp), jnp.float32),
            grid_spec=grid_spec,
            compiler_params=pltpu.CompilerParams(
                dimension_semantics=("parallel", "arbitrary"),
                vmem_limit_bytes=vmem_limit,
            ),
            cost_estimate=cost,
        )

    try:
        out_p = jax.block_until_ready(build(True)(q_p, k_p, v_p, *param_arrays))
    except Exception:
        # TODO(synk): single-buffered (pl.Buffered(1)) constant weights unsupported on
        # this jax version -- fall back to default double buffering.
        out_p = build(False)(q_p, k_p, v_p, *param_arrays)

    out = jnp.transpose(out_p, (1, 0, 2))           # back to (L, N, K)
    return out[:L, :, :K]


def init_params(rng, k, num_heads):
    """Deterministic synthetic parameters (PyTorch layout). Matmul weights stored in bf16."""
    keys = jax.random.split(rng, 6)
    s = 0.05
    bf = jnp.bfloat16
    return {
        "in_proj_w": (jax.random.normal(keys[0], (3 * k, k), jnp.float32) * s).astype(bf),
        "in_proj_b": jax.random.normal(keys[1], (3 * k,), jnp.float32) * s,
        "out_w": (jax.random.normal(keys[2], (k, k), jnp.float32) * s).astype(bf),
        "out_b": jax.random.normal(keys[3], (k,), jnp.float32) * s,
        "ff1_w": (jax.random.normal(keys[4], (4 * k, k), jnp.float32) * s).astype(bf),
        "ff1_b": jnp.zeros((4 * k,), jnp.float32),
        "ff2_w": (jax.random.normal(keys[5], (k, 4 * k), jnp.float32) * s).astype(bf),
        "ff2_b": jnp.zeros((k,), jnp.float32),
        "ln1_w": jnp.ones((k,), jnp.float32), "ln1_b": jnp.zeros((k,), jnp.float32),
        "ln2_w": jnp.ones((k,), jnp.float32), "ln2_b": jnp.zeros((k,), jnp.float32),
    }


def reference_forward(value, key, query, params, num_heads):
    """Pure-JAX f32 reference mirroring PyTorch MultiheadAttention + block semantics."""
    L, N, K = query.shape
    H = num_heads
    D = K // H
    scale = 1.0 / math.sqrt(D)
    eps = 1e-5
    f32 = lambda a: a.astype(jnp.float32)

    in_w = f32(params["in_proj_w"])
    in_b = params["in_proj_b"]
    qp = query @ in_w[0:K].T + in_b[0:K]
    kp = key @ in_w[K:2 * K].T + in_b[K:2 * K]
    vp = value @ in_w[2 * K:3 * K].T + in_b[2 * K:3 * K]

    def split(x):  # (L, N, K) -> (N, H, L, D)
        return jnp.transpose(x.reshape(L, N, H, D), (1, 2, 0, 3))

    qh, kh, vh = split(qp) * scale, split(kp), split(vp)
    s = jnp.einsum("nhld,nhmd->nhlm", qh, kh)
    p = jax.nn.softmax(s, axis=-1)
    o = jnp.einsum("nhlm,nhmd->nhld", p, vh)
    o = jnp.transpose(o, (2, 0, 1, 3)).reshape(L, N, K)
    attn = o @ f32(params["out_w"]).T + params["out_b"]

    def ln(x, w, b):
        mu = x.mean(-1, keepdims=True)
        var = ((x - mu) ** 2).mean(-1, keepdims=True)
        return (x - mu) / jnp.sqrt(var + eps) * w + b

    x = ln(attn + query, params["ln1_w"], params["ln1_b"])
    h = jnp.maximum(x @ f32(params["ff1_w"]).T + params["ff1_b"], 0.0)
    y = h @ f32(params["ff2_w"]).T + params["ff2_b"]
    return ln(y + x, params["ln2_w"], params["ln2_b"])


if __name__ == "__main__":
    # Shapes implied by the module's forward: (seq, batch, embed) inputs.
    SEQ, BATCH, K, HEADS = 8, 2, 32, 4

    root = jax.random.PRNGKey(0)
    kq, kk, kv, kpar = jax.random.split(root, 4)
    query = jax.random.normal(kq, (SEQ, BATCH, K), jnp.float32)
    key = jax.random.normal(kk, (SEQ, BATCH, K), jnp.float32)
    value = jax.random.normal(kv, (SEQ, BATCH, K), jnp.float32)
    params = init_params(kpar, K, HEADS)

    out = jax.block_until_ready(
        transformer_block_forward(value, key, query, params, HEADS))
    ref = reference_forward(value, key, query, params, HEADS)
    assert out.shape == (SEQ, BATCH, K)
    err = float(jnp.max(jnp.abs(out - ref)))
    # bf16 inputs / matmul operands + approx softmax reciprocal vs the f32 reference.
    assert err < 3e-2, err

    # Second tiny config exercises the multi-q-tile path (cached K/V head scratch) and
    # the unpadded head-dim path (K=128, D=64).
    SEQ2, BATCH2, K2, HEADS2 = 16, 2, 128, 2
    r2 = jax.random.split(jax.random.PRNGKey(0), 4)
    q2 = jax.random.normal(r2[0], (SEQ2, BATCH2, K2), jnp.float32)
    k2 = jax.random.normal(r2[1], (SEQ2, BATCH2, K2), jnp.float32)
    v2 = jax.random.normal(r2[2], (SEQ2, BATCH2, K2), jnp.float32)
    p2 = init_params(r2[3], K2, HEADS2)
    out2 = jax.block_until_ready(
        transformer_block_forward(v2, k2, q2, p2, HEADS2, max_q_tile=8))
    ref2 = reference_forward(v2, k2, q2, p2, HEADS2)
    assert out2.shape == (SEQ2, BATCH2, K2)
    err2 = float(jnp.max(jnp.abs(out2 - ref2)))
    assert err2 < 3e-2, err2

    print("KERNEL_OK")
</pallas_src>

<mosaic_0001>
module attributes {stable_mosaic.version = 11 : i64} {
  func.func @kernel(%arg0: i32, %arg1: i32, %arg2: memref<1x8x128xbf16, #tpu.memory_space<vmem>>, %arg3: memref<1x8x128xbf16, #tpu.memory_space<vmem>>, %arg4: memref<1x8x128xbf16, #tpu.memory_space<vmem>>, %arg5: memref<128x64xbf16, #tpu.memory_space<vmem>>, %arg6: memref<128x64xbf16, #tpu.memory_space<vmem>>, %arg7: memref<128x64xbf16, #tpu.memory_space<vmem>>, %arg8: memref<64x128xbf16, #tpu.memory_space<vmem>>, %arg9: memref<128x128xbf16, #tpu.memory_space<vmem>>, %arg10: memref<128x128xbf16, #tpu.memory_space<vmem>>, %arg11: memref<1x64xf32, #tpu.memory_space<vmem>>, %arg12: memref<1x64xf32, #tpu.memory_space<vmem>>, %arg13: memref<1x64xf32, #tpu.memory_space<vmem>>, %arg14: memref<1x128xf32, #tpu.memory_space<vmem>>, %arg15: memref<1x128xf32, #tpu.memory_space<vmem>>, %arg16: memref<1x128xf32, #tpu.memory_space<vmem>>, %arg17: memref<1x128xf32, #tpu.memory_space<vmem>>, %arg18: memref<1x128xf32, #tpu.memory_space<vmem>>, %arg19: memref<1x128xf32, #tpu.memory_space<vmem>>, %arg20: memref<1x128xf32, #tpu.memory_space<vmem>>, %arg21: memref<1x8x128xf32, #tpu.memory_space<vmem>>, %arg22: memref<4x8x16xbf16, #tpu.memory_space<vmem>>, %arg23: memref<4x8x16xbf16, #tpu.memory_space<vmem>>, %arg24: memref<4x8x16xbf16, #tpu.memory_space<vmem>>, %arg25: memref<8x64xbf16, #tpu.memory_space<vmem>>) attributes {dimension_semantics = [#tpu.dimension_semantics<parallel>, #tpu.dimension_semantics<arbitrary>], iteration_bounds = array<i64: 2, 1>, scalar_prefetch = 0 : i64, scratch_operands = 4 : i64, tpu.core_type = #tpu.core_type<tc>, window_params = [{transform_indices = @transform_0, window_bounds = array<i64: 1, 8, 128>}, {transform_indices = @transform_1, window_bounds = array<i64: 1, 8, 128>}, {transform_indices = @transform_2, window_bounds = array<i64: 1, 8, 128>}, {pipeline_mode = #tpu.pipeline_mode<synchronous>, transform_indices = @transform_3, window_bounds = array<i64: 128, 64>}, {pipeline_mode = #tpu.pipeline_mode<synchronous>, transform_indices = @transform_4, window_bounds = array<i64: 128, 64>}, {pipeline_mode = #tpu.pipeline_mode<synchronous>, transform_indices = @transform_5, window_bounds = array<i64: 128, 64>}, {pipeline_mode = #tpu.pipeline_mode<synchronous>, transform_indices = @transform_6, window_bounds = array<i64: 64, 128>}, {pipeline_mode = #tpu.pipeline_mode<synchronous>, transform_indices = @transform_7, window_bounds = array<i64: 128, 128>}, {pipeline_mode = #tpu.pipeline_mode<synchronous>, transform_indices = @transform_8, window_bounds = array<i64: 128, 128>}, {pipeline_mode = #tpu.pipeline_mode<synchronous>, transform_indices = @transform_9, window_bounds = array<i64: 1, 64>}, {pipeline_mode = #tpu.pipeline_mode<synchronous>, transform_indices = @transform_10, window_bounds = array<i64: 1, 64>}, {pipeline_mode = #tpu.pipeline_mode<synchronous>, transform_indices = @transform_11, window_bounds = array<i64: 1, 64>}, {pipeline_mode = #tpu.pipeline_mode<synchronous>, transform_indices = @transform_12, window_bounds = array<i64: 1, 128>}, {pipeline_mode = #tpu.pipeline_mode<synchronous>, transform_indices = @transform_13, window_bounds = array<i64: 1, 128>}, {pipeline_mode = #tpu.pipeline_mode<synchronous>, transform_indices = @transform_14, window_bounds = array<i64: 1, 128>}, {pipeline_mode = #tpu.pipeline_mode<synchronous>, transform_indices = @transform_15, window_bounds = array<i64: 1, 128>}, {pipeline_mode = #tpu.pipeline_mode<synchronous>, transform_indices = @transform_16, window_bounds = array<i64: 1, 128>}, {pipeline_mode = #tpu.pipeline_mode<synchronous>, transform_indices = @transform_17, window_bounds = array<i64: 1, 128>}, {pipeline_mode = #tpu.pipeline_mode<synchronous>, transform_indices = @transform_18, window_bounds = array<i64: 1, 128>}, {transform_indices = @transform_19, window_bounds = array<i64: 1, 8, 128>}]} {
    %c0_i32 = arith.constant 0 : i32
    %0 = arith.cmpi eq, %arg1, %c0_i32 : i32
    %1 = arith.extui %0 : i1 to i32
    %c0_i32_0 = arith.constant 0 : i32
    %2 = arith.cmpi ne, %1, %c0_i32_0 : i32
    scf.if %2 {
      %c0_79 = arith.constant 0 : index
      %c0_80 = arith.constant 0 : index
      %c0_81 = arith.constant 0 : index
      %142 = vector.load %arg3[%c0_79, %c0_80, %c0_81] : memref<1x8x128xbf16, #tpu.memory_space<vmem>>, vector<1x8x128xbf16>
      %143 = vector.shape_cast %142 : vector<1x8x128xbf16> to vector<8x128xbf16>
      %c0_82 = arith.constant 0 : index
      %c0_83 = arith.constant 0 : index
      %144 = vector.load %arg6[%c0_82, %c0_83] : memref<128x64xbf16, #tpu.memory_space<vmem>>, vector<128x64xbf16>
      %cst_84 = arith.constant dense<0.000000e+00> : vector<8x64xf32>
      %145 = tpu.matmul %143, %144, %cst_84 {dimension_numbers = #tpu.dot_dimension_numbers<[1], [0], [0], [1], [0, 0, 1, 1], [], []>} : vector<8x128xbf16>, vector<128x64xbf16>, vector<8x64xf32> -> vector<8x64xf32>
      %c0_85 = arith.constant 0 : index
      %c0_86 = arith.constant 0 : index
      %146 = vector.load %arg12[%c0_85, %c0_86] : memref<1x64xf32, #tpu.memory_space<vmem>>, vector<1x64xf32>
      %147 = vector.broadcast %146 : vector<1x64xf32> to vector<8x64xf32>
      %148 = arith.addf %145, %147 : vector<8x64xf32>
      %149 = arith.truncf %148 : vector<8x64xf32> to vector<8x64xbf16>
      %c0_87 = arith.constant 0 : index
      %c0_88 = arith.constant 0 : index
      %c0_89 = arith.constant 0 : index
      %150 = vector.load %arg4[%c0_87, %c0_88, %c0_89] : memref<1x8x128xbf16, #tpu.memory_space<vmem>>, vector<1x8x128xbf16>
      %151 = vector.shape_cast %150 : vector<1x8x128xbf16> to vector<8x128xbf16>
      %c0_90 = arith.constant 0 : index
      %c0_91 = arith.constant 0 : index
      %152 = vector.load %arg7[%c0_90, %c0_91] : memref<128x64xbf16, #tpu.memory_space<vmem>>, vector<128x64xbf16>
      %cst_92 = arith.constant dense<0.000000e+00> : vector<8x64xf32>
      %153 = tpu.matmul %151, %152, %cst_92 {dimension_numbers = #tpu.dot_dimension_numbers<[1], [0], [0], [1], [0, 0, 1, 1], [], []>} : vector<8x128xbf16>, vector<128x64xbf16>, vector<8x64xf32> -> vector<8x64xf32>
      %c0_93 = arith.constant 0 : index
      %c0_94 = arith.constant 0 : index
      %154 = vector.load %arg13[%c0_93, %c0_94] : memref<1x64xf32, #tpu.memory_space<vmem>>, vector<1x64xf32>
      %155 = vector.broadcast %154 : vector<1x64xf32> to vector<8x64xf32>
      %156 = arith.addf %153, %155 : vector<8x64xf32>
      %157 = arith.truncf %156 : vector<8x64xf32> to vector<8x64xbf16>
      %158 = vector.extract_strided_slice %149 {offsets = [0, 0], sizes = [8, 16], strides = [1, 1]} : vector<8x64xbf16> to vector<8x16xbf16>
      %c0_95 = arith.constant 0 : index
      %c0_96 = arith.constant 0 : index
      %c0_97 = arith.constant 0 : index
      %159 = vector.load %arg22[%c0_95, %c0_96, %c0_97] : memref<4x8x16xbf16, #tpu.memory_space<vmem>>, vector<1x8x16xbf16>
      %160 = vector.shape_cast %159 : vector<1x8x16xbf16> to vector<8x16xbf16>
      %161 = vector.shape_cast %158 : vector<8x16xbf16> to vector<1x8x16xbf16>
      tpu.vector_store %arg22[%c0_95, %c0_96, %c0_97], %161 {strides = array<i32>} : memref<4x8x16xbf16, #tpu.memory_space<vmem>>, vector<1x8x16xbf16>,
      %162 = vector.extract_strided_slice %157 {offsets = [0, 0], sizes = [8, 16], strides = [1, 1]} : vector<8x64xbf16> to vector<8x16xbf16>
      %c0_98 = arith.constant 0 : index
      %c0_99 = arith.constant 0 : index
      %c0_100 = arith.constant 0 : index
      %163 = vector.load %arg23[%c0_98, %c0_99, %c0_100] : memref<4x8x16xbf16, #tpu.memory_space<vmem>>, vector<1x8x16xbf16>
      %164 = vector.shape_cast %163 : vector<1x8x16xbf16> to vector<8x16xbf16>
      %165 = vector.shape_cast %162 : vector<8x16xbf16> to vector<1x8x16xbf16>
      tpu.vector_store %arg23[%c0_98, %c0_99, %c0_100], %165 {strides = array<i32>} : memref<4x8x16xbf16, #tpu.memory_space<vmem>>, vector<1x8x16xbf16>,
      %166 = vector.extract_strided_slice %149 {offsets = [0, 16], sizes = [8, 16], strides = [1, 1]} : vector<8x64xbf16> to vector<8x16xbf16>
      %c1_101 = arith.constant 1 : index
      %c0_102 = arith.constant 0 : index
      %c0_103 = arith.constant 0 : index
      %167 = vector.load %arg22[%c1_101, %c0_102, %c0_103] : memref<4x8x16xbf16, #tpu.memory_space<vmem>>, vector<1x8x16xbf16>
      %168 = vector.shape_cast %167 : vector<1x8x16xbf16> to vector<8x16xbf16>
      %169 = vector.shape_cast %166 : vector<8x16xbf16> to vector<1x8x16xbf16>
      tpu.vector_store %arg22[%c1_101, %c0_102, %c0_103], %169 {strides = array<i32>} : memref<4x8x16xbf16, #tpu.memory_space<vmem>>, vector<1x8x16xbf16>,
      %170 = vector.extract_strided_slice %157 {offsets = [0, 16], sizes = [8, 16], strides = [1, 1]} : vector<8x64xbf16> to vector<8x16xbf16>
      %c1_104 = arith.constant 1 : index
      %c0_105 = arith.constant 0 : index
      %c0_106 = arith.constant 0 : index
      %171 = vector.load %arg23[%c1_104, %c0_105, %c0_106] : memref<4x8x16xbf16, #tpu.memory_space<vmem>>, vector<1x8x16xbf16>
      %172 = vector.shape_cast %171 : vector<1x8x16xbf16> to vector<8x16xbf16>
      %173 = vector.shape_cast %170 : vector<8x16xbf16> to vector<1x8x16xbf16>
      tpu.vector_store %arg23[%c1_104, %c0_105, %c0_106], %173 {strides = array<i32>} : memref<4x8x16xbf16, #tpu.memory_space<vmem>>, vector<1x8x16xbf16>,
      %174 = vector.extract_strided_slice %149 {offsets = [0, 32], sizes = [8, 16], strides = [1, 1]} : vector<8x64xbf16> to vector<8x16xbf16>
      %c2_107 = arith.constant 2 : index
      %c0_108 = arith.constant 0 : index
      %c0_109 = arith.constant 0 : index
      %175 = vector.load %arg22[%c2_107, %c0_108, %c0_109] : memref<4x8x16xbf16, #tpu.memory_space<vmem>>, vector<1x8x16xbf16>
      %176 = vector.shape_cast %175 : vector<1x8x16xbf16> to vector<8x16xbf16>
      %177 = vector.shape_cast %174 : vector<8x16xbf16> to vector<1x8x16xbf16>
      tpu.vector_store %arg22[%c2_107, %c0_108, %c0_109], %177 {strides = array<i32>} : memref<4x8x16xbf16, #tpu.memory_space<vmem>>, vector<1x8x16xbf16>,
      %178 = vector.extract_strided_slice %157 {offsets = [0, 32], sizes = [8, 16], strides = [1, 1]} : vector<8x64xbf16> to vector<8x16xbf16>
      %c2_110 = arith.constant 2 : index
      %c0_111 = arith.constant 0 : index
      %c0_112 = arith.constant 0 : index
      %179 = vector.load %arg23[%c2_110, %c0_111, %c0_112] : memref<4x8x16xbf16, #tpu.memory_space<vmem>>, vector<1x8x16xbf16>
      %180 = vector.shape_cast %179 : vector<1x8x16xbf16> to vector<8x16xbf16>
      %181 = vector.shape_cast %178 : vector<8x16xbf16> to vector<1x8x16xbf16>
      tpu.vector_store %arg23[%c2_110, %c0_111, %c0_112], %181 {strides = array<i32>} : memref<4x8x16xbf16, #tpu.memory_space<vmem>>, vector<1x8x16xbf16>,
      %182 = vector.extract_strided_slice %149 {offsets = [0, 48], sizes = [8, 16], strides = [1, 1]} : vector<8x64xbf16> to vector<8x16xbf16>
      %c3_113 = arith.constant 3 : index
      %c0_114 = arith.constant 0 : index
      %c0_115 = arith.constant 0 : index
      %183 = vector.load %arg22[%c3_113, %c0_114, %c0_115] : memref<4x8x16xbf16, #tpu.memory_space<vmem>>, vector<1x8x16xbf16>
      %184 = vector.shape_cast %183 : vector<1x8x16xbf16> to vector<8x16xbf16>
      %185 = vector.shape_cast %182 : vector<8x16xbf16> to vector<1x8x16xbf16>
      tpu.vector_store %arg22[%c3_113, %c0_114, %c0_115], %185 {strides = array<i32>} : memref<4x8x16xbf16, #tpu.memory_space<vmem>>, vector<1x8x16xbf16>,
      %186 = vector.extract_strided_slice %157 {offsets = [0, 48], sizes = [8, 16], strides = [1, 1]} : vector<8x64xbf16> to vector<8x16xbf16>
      %c3_116 = arith.constant 3 : index
      %c0_117 = arith.constant 0 : index
      %c0_118 = arith.constant 0 : index
      %187 = vector.load %arg23[%c3_116, %c0_117, %c0_118] : memref<4x8x16xbf16, #tpu.memory_space<vmem>>, vector<1x8x16xbf16>
      %188 = vector.shape_cast %187 : vector<1x8x16xbf16> to vector<8x16xbf16>
      %189 = vector.shape_cast %186 : vector<8x16xbf16> to vector<1x8x16xbf16>
      tpu.vector_store %arg23[%c3_116, %c0_117, %c0_118], %189 {strides = array<i32>} : memref<4x8x16xbf16, #tpu.memory_space<vmem>>, vector<1x8x16xbf16>,
    } else {
    }
    %c0 = arith.constant 0 : index
    %c0_1 = arith.constant 0 : index
    %c0_2 = arith.constant 0 : index
    %3 = vector.load %arg2[%c0, %c0_1, %c0_2] : memref<1x8x128xbf16, #tpu.memory_space<vmem>>, vector<1x8x128xbf16>
    %4 = vector.shape_cast %3 : vector<1x8x128xbf16> to vector<8x128xbf16>
    %c0_3 = arith.constant 0 : index
    %c0_4 = arith.constant 0 : index
    %5 = vector.load %arg5[%c0_3, %c0_4] : memref<128x64xbf16, #tpu.memory_space<vmem>>, vector<128x64xbf16>
    %cst = arith.constant dense<0.000000e+00> : vector<8x64xf32>
    %6 = tpu.matmul %4, %5, %cst {dimension_numbers = #tpu.dot_dimension_numbers<[1], [0], [0], [1], [0, 0, 1, 1], [], []>} : vector<8x128xbf16>, vector<128x64xbf16>, vector<8x64xf32> -> vector<8x64xf32>
    %c0_5 = arith.constant 0 : index
    %c0_6 = arith.constant 0 : index
    %7 = vector.load %arg11[%c0_5, %c0_6] : memref<1x64xf32, #tpu.memory_space<vmem>>, vector<1x64xf32>
    %8 = vector.broadcast %7 : vector<1x64xf32> to vector<8x64xf32>
    %9 = arith.addf %6, %8 : vector<8x64xf32>
    %10 = arith.truncf %9 : vector<8x64xf32> to vector<8x64xbf16>
    %11 = vector.extract_strided_slice %10 {offsets = [0, 0], sizes = [8, 16], strides = [1, 1]} : vector<8x64xbf16> to vector<8x16xbf16>
    %c0_7 = arith.constant 0 : index
    %c0_8 = arith.constant 0 : index
    %c0_9 = arith.constant 0 : index
    %12 = vector.load %arg24[%c0_7, %c0_8, %c0_9] : memref<4x8x16xbf16, #tpu.memory_space<vmem>>, vector<1x8x16xbf16>
    %13 = vector.shape_cast %12 : vector<1x8x16xbf16> to vector<8x16xbf16>
    %14 = vector.shape_cast %11 : vector<8x16xbf16> to vector<1x8x16xbf16>
    tpu.vector_store %arg24[%c0_7, %c0_8, %c0_9], %14 {strides = array<i32>} : memref<4x8x16xbf16, #tpu.memory_space<vmem>>, vector<1x8x16xbf16>,
    %15 = vector.extract_strided_slice %10 {offsets = [0, 16], sizes = [8, 16], strides = [1, 1]} : vector<8x64xbf16> to vector<8x16xbf16>
    %c1 = arith.constant 1 : index
    %c0_10 = arith.constant 0 : index
    %c0_11 = arith.constant 0 : index
    %16 = vector.load %arg24[%c1, %c0_10, %c0_11] : memref<4x8x16xbf16, #tpu.memory_space<vmem>>, vector<1x8x16xbf16>
    %17 = vector.shape_cast %16 : vector<1x8x16xbf16> to vector<8x16xbf16>
    %18 = vector.shape_cast %15 : vector<8x16xbf16> to vector<1x8x16xbf16>
    tpu.vector_store %arg24[%c1, %c0_10, %c0_11], %18 {strides = array<i32>} : memref<4x8x16xbf16, #tpu.memory_space<vmem>>, vector<1x8x16xbf16>,
    %19 = vector.extract_strided_slice %10 {offsets = [0, 32], sizes = [8, 16], strides = [1, 1]} : vector<8x64xbf16> to vector<8x16xbf16>
    %c2 = arith.constant 2 : index
    %c0_12 = arith.constant 0 : index
    %c0_13 = arith.constant 0 : index
    %20 = vector.load %arg24[%c2, %c0_12, %c0_13] : memref<4x8x16xbf16, #tpu.memory_space<vmem>>, vector<1x8x16xbf16>
    %21 = vector.shape_cast %20 : vector<1x8x16xbf16> to vector<8x16xbf16>
    %22 = vector.shape_cast %19 : vector<8x16xbf16> to vector<1x8x16xbf16>
    tpu.vector_store %arg24[%c2, %c0_12, %c0_13], %22 {strides = array<i32>} : memref<4x8x16xbf16, #tpu.memory_space<vmem>>, vector<1x8x16xbf16>,
    %23 = vector.extract_strided_slice %10 {offsets = [0, 48], sizes = [8, 16], strides = [1, 1]} : vector<8x64xbf16> to vector<8x16xbf16>
    %c3 = arith.constant 3 : index
    %c0_14 = arith.constant 0 : index
    %c0_15 = arith.constant 0 : index
    %24 = vector.load %arg24[%c3, %c0_14, %c0_15] : memref<4x8x16xbf16, #tpu.memory_space<vmem>>, vector<1x8x16xbf16>
    %25 = vector.shape_cast %24 : vector<1x8x16xbf16> to vector<8x16xbf16>
    %26 = vector.shape_cast %23 : vector<8x16xbf16> to vector<1x8x16xbf16>
    tpu.vector_store %arg24[%c3, %c0_14, %c0_15], %26 {strides = array<i32>} : memref<4x8x16xbf16, #tpu.memory_space<vmem>>, vector<1x8x16xbf16>,
    %c0_16 = arith.constant 0 : index
    %c0_17 = arith.constant 0 : index
    %c0_18 = arith.constant 0 : index
    %27 = vector.load %arg24[%c0_16, %c0_17, %c0_18] : memref<4x8x16xbf16, #tpu.memory_space<vmem>>, vector<4x8x16xbf16>
    %c0_19 = arith.constant 0 : index
    %c0_20 = arith.constant 0 : index
    %c0_21 = arith.constant 0 : index
    %28 = vector.load %arg22[%c0_19, %c0_20, %c0_21] : memref<4x8x16xbf16, #tpu.memory_space<vmem>>, vector<4x8x16xbf16>
    %cst_22 = arith.constant dense<0.000000e+00> : vector<4x8x8xf32>
    %29 = tpu.matmul %27, %28, %cst_22 {dimension_numbers = #tpu.dot_dimension_numbers<[2], [2], [1], [1], [0, 0, 0, 1, 1, 1], [0], [0]>} : vector<4x8x16xbf16>, vector<4x8x16xbf16>, vector<4x8x8xf32> -> vector<4x8x8xf32>
    %cst_23 = arith.constant dense<0xFF800000> : vector<4x8xf32>
    %30 = vector.multi_reduction <maximumf>, %29, %cst_23 [2] : vector<4x8x8xf32> to vector<4x8xf32>
    %31 = vector.shape_cast %30 : vector<4x8xf32> to vector<4x8x1xf32>
    %32 = vector.broadcast %31 : vector<4x8x1xf32> to vector<4x8x8xf32>
    %33 = arith.subf %29, %32 : vector<4x8x8xf32>
    %34 = math.exp %33 : vector<4x8x8xf32>
    %cst_24 = arith.constant dense<0.000000e+00> : vector<4x8xf32>
    %35 = vector.multi_reduction <add>, %34, %cst_24 [2] : vector<4x8x8xf32> to vector<4x8xf32>
    %36 = vector.shape_cast %35 : vector<4x8xf32> to vector<4x8x1xf32>
    %37 = tpu.reciprocal %36 {approx = true} : vector<4x8x1xf32> -> vector<4x8x1xf32>
    %38 = vector.broadcast %37 : vector<4x8x1xf32> to vector<4x8x8xf32>
    %39 = arith.mulf %34, %38 : vector<4x8x8xf32>
    %40 = arith.truncf %39 : vector<4x8x8xf32> to vector<4x8x8xbf16>
    %c0_25 = arith.constant 0 : index
    %c0_26 = arith.constant 0 : index
    %c0_27 = arith.constant 0 : index
    %41 = vector.load %arg23[%c0_25, %c0_26, %c0_27] : memref<4x8x16xbf16, #tpu.memory_space<vmem>>, vector<4x8x16xbf16>
    %cst_28 = arith.constant dense<0.000000e+00> : vector<4x8x16xf32>
    %42 = tpu.matmul %40, %41, %cst_28 {dimension_numbers = #tpu.dot_dimension_numbers<[2], [1], [1], [2], [0, 0, 0, 1, 1, 2], [0], [0]>} : vector<4x8x8xbf16>, vector<4x8x16xbf16>, vector<4x8x16xf32> -> vector<4x8x16xf32>
    %43 = arith.truncf %42 : vector<4x8x16xf32> to vector<4x8x16xbf16>
    %44 = vector.extract_strided_slice %43 {offsets = [0, 0, 0], sizes = [1, 8, 16], strides = [1, 1, 1]} : vector<4x8x16xbf16> to vector<1x8x16xbf16>
    %45 = vector.shape_cast %44 : vector<1x8x16xbf16> to vector<8x16xbf16>
    %c0_29 = arith.constant 0 : index
    %c0_30 = arith.constant 0 : index
    %46 = vector.load %arg25[%c0_29, %c0_30] : memref<8x64xbf16, #tpu.memory_space<vmem>>, vector<8x16xbf16>
    tpu.vector_store %arg25[%c0_29, %c0_30], %45 {strides = array<i32>} : memref<8x64xbf16, #tpu.memory_space<vmem>>, vector<8x16xbf16>,
    %47 = vector.extract_strided_slice %43 {offsets = [1, 0, 0], sizes = [1, 8, 16], strides = [1, 1, 1]} : vector<4x8x16xbf16> to vector<1x8x16xbf16>
    %48 = vector.shape_cast %47 : vector<1x8x16xbf16> to vector<8x16xbf16>
    %c0_31 = arith.constant 0 : index
    %c16 = arith.constant 16 : index
    %49 = vector.load %arg25[%c0_31, %c16] : memref<8x64xbf16, #tpu.memory_space<vmem>>, vector<8x16xbf16>
    tpu.vector_store %arg25[%c0_31, %c16], %48 {strides = array<i32>} : memref<8x64xbf16, #tpu.memory_space<vmem>>, vector<8x16xbf16>,
    %50 = vector.extract_strided_slice %43 {offsets = [2, 0, 0], sizes = [1, 8, 16], strides = [1, 1, 1]} : vector<4x8x16xbf16> to vector<1x8x16xbf16>
    %51 = vector.shape_cast %50 : vector<1x8x16xbf16> to vector<8x16xbf16>
    %c0_32 = arith.constant 0 : index
    %c32 = arith.constant 32 : index
    %52 = vector.load %arg25[%c0_32, %c32] : memref<8x64xbf16, #tpu.memory_space<vmem>>, vector<8x16xbf16>
    tpu.vector_store %arg25[%c0_32, %c32], %51 {strides = array<i32>} : memref<8x64xbf16, #tpu.memory_space<vmem>>, vector<8x16xbf16>,
    %53 = vector.extract_strided_slice %43 {offsets = [3, 0, 0], sizes = [1, 8, 16], strides = [1, 1, 1]} : vector<4x8x16xbf16> to vector<1x8x16xbf16>
    %54 = vector.shape_cast %53 : vector<1x8x16xbf16> to vector<8x16xbf16>
    %c0_33 = arith.constant 0 : index
    %c48 = arith.constant 48 : index
    %55 = vector.load %arg25[%c0_33, %c48] : memref<8x64xbf16, #tpu.memory_space<vmem>>, vector<8x16xbf16>
    tpu.vector_store %arg25[%c0_33, %c48], %54 {strides = array<i32>} : memref<8x64xbf16, #tpu.memory_space<vmem>>, vector<8x16xbf16>,
    %c0_34 = arith.constant 0 : index
    %c0_35 = arith.constant 0 : index
    %56 = vector.load %arg25[%c0_34, %c0_35] : memref<8x64xbf16, #tpu.memory_space<vmem>>, vector<8x64xbf16>
    %c0_36 = arith.constant 0 : index
    %c0_37 = arith.constant 0 : index
    %57 = vector.load %arg8[%c0_36, %c0_37] : memref<64x128xbf16, #tpu.memory_space<vmem>>, vector<64x128xbf16>
    %cst_38 = arith.constant dense<0.000000e+00> : vector<8x128xf32>
    %58 = tpu.matmul %56, %57, %cst_38 {dimension_numbers = #tpu.dot_dimension_numbers<[1], [0], [0], [1], [0, 0, 1, 1], [], []>} : vector<8x64xbf16>, vector<64x128xbf16>, vector<8x128xf32> -> vector<8x128xf32>
    %c0_39 = arith.constant 0 : index
    %c0_40 = arith.constant 0 : index
    %59 = vector.load %arg14[%c0_39, %c0_40] : memref<1x128xf32, #tpu.memory_space<vmem>>, vector<1x128xf32>
    %60 = vector.broadcast %59 : vector<1x128xf32> to vector<8x128xf32>
    %61 = arith.addf %58, %60 : vector<8x128xf32>
    %c0_41 = arith.constant 0 : index
    %c0_42 = arith.constant 0 : index
    %c0_43 = arith.constant 0 : index
    %62 = vector.load %arg2[%c0_41, %c0_42, %c0_43] : memref<1x8x128xbf16, #tpu.memory_space<vmem>>, vector<1x8x128xbf16>
    %63 = vector.shape_cast %62 : vector<1x8x128xbf16> to vector<8x128xbf16>
    %64 = arith.extf %63 : vector<8x128xbf16> to vector<8x128xf32>
    %65 = arith.addf %61, %64 : vector<8x128xf32>
    %c0_44 = arith.constant 0 : index
    %c0_45 = arith.constant 0 : index
    %66 = vector.load %arg17[%c0_44, %c0_45] : memref<1x128xf32, #tpu.memory_space<vmem>>, vector<1x128xf32>
    %c0_46 = arith.constant 0 : index
    %c0_47 = arith.constant 0 : index
    %67 = vector.load %arg18[%c0_46, %c0_47] : memref<1x128xf32, #tpu.memory_space<vmem>>, vector<1x128xf32>
    %cst_48 = arith.constant dense<0.000000e+00> : vector<8xf32>
    %68 = vector.multi_reduction <add>, %65, %cst_48 [1] : vector<8x128xf32> to vector<8xf32>
    %69 = vector.shape_cast %68 : vector<8xf32> to vector<8x1xf32>
    %cst_49 = arith.constant 3.125000e-02 : f32
    %70 = vector.broadcast %cst_49 : f32 to vector<8x1xf32>
    %71 = arith.mulf %69, %70 : vector<8x1xf32>
    %72 = vector.broadcast %71 : vector<8x1xf32> to vector<8x128xf32>
    %73 = arith.subf %65, %72 : vector<8x128xf32>
    %74 = tpu.iota {dimensions = array<i32: 1>} : vector<1x128xi32>
    %c32_i32 = arith.constant 32 : i32
    %75 = vector.broadcast %c32_i32 : i32 to vector<1x128xi32>
    %76 = arith.cmpi slt, %74, %75 : vector<1x128xi32>
    %cst_50 = arith.constant 0.000000e+00 : f32
    %77 = vector.shape_cast %76 : vector<1x128xi1> to vector<1x128xi1>
    %78 = vector.broadcast %77 : vector<1x128xi1> to vector<8x128xi1>
    %79 = vector.broadcast %cst_50 : f32 to vector<8x128xf32>
    %80 = arith.select %78, %73, %79 : vector<8x128xi1>, vector<8x128xf32>
    %81 = arith.mulf %80, %80 : vector<8x128xf32>
    %cst_51 = arith.constant dense<0.000000e+00> : vector<8xf32>
    %82 = vector.multi_reduction <add>, %81, %cst_51 [1] : vector<8x128xf32> to vector<8xf32>
    %83 = vector.shape_cast %82 : vector<8xf32> to vector<8x1xf32>
    %cst_52 = arith.constant 3.125000e-02 : f32
    %84 = vector.broadcast %cst_52 : f32 to vector<8x1xf32>
    %85 = arith.mulf %83, %84 : vector<8x1xf32>
    %cst_53 = arith.constant 9.99999974E-6 : f32
    %86 = vector.broadcast %cst_53 : f32 to vector<8x1xf32>
    %87 = arith.addf %85, %86 : vector<8x1xf32>
    %88 = math.rsqrt %87 : vector<8x1xf32>
    %89 = vector.broadcast %88 : vector<8x1xf32> to vector<8x128xf32>
    %90 = arith.mulf %80, %89 : vector<8x128xf32>
    %91 = vector.broadcast %66 : vector<1x128xf32> to vector<8x128xf32>
    %92 = arith.mulf %90, %91 : vector<8x128xf32>
    %93 = vector.broadcast %67 : vector<1x128xf32> to vector<8x128xf32>
    %94 = arith.addf %92, %93 : vector<8x128xf32>
    %95 = arith.truncf %94 : vector<8x128xf32> to vector<8x128xbf16>
    %c0_54 = arith.constant 0 : index
    %c0_55 = arith.constant 0 : index
    %96 = vector.load %arg9[%c0_54, %c0_55] : memref<128x128xbf16, #tpu.memory_space<vmem>>, vector<128x128xbf16>
    %cst_56 = arith.constant dense<0.000000e+00> : vector<8x128xf32>
    %97 = tpu.matmul %95, %96, %cst_56 {dimension_numbers = #tpu.dot_dimension_numbers<[1], [0], [0], [1], [0, 0, 1, 1], [], []>} : vector<8x128xbf16>, vector<128x128xbf16>, vector<8x128xf32> -> vector<8x128xf32>
    %c0_57 = arith.constant 0 : index
    %c0_58 = arith.constant 0 : index
    %98 = vector.load %arg15[%c0_57, %c0_58] : memref<1x128xf32, #tpu.memory_space<vmem>>, vector<1x128xf32>
    %99 = vector.broadcast %98 : vector<1x128xf32> to vector<8x128xf32>
    %100 = arith.addf %97, %99 : vector<8x128xf32>
    %cst_59 = arith.constant 0.000000e+00 : f32
    %101 = vector.broadcast %cst_59 : f32 to vector<8x128xf32>
    %102 = arith.maximumf %100, %101 : vector<8x128xf32>
    %103 = arith.truncf %102 : vector<8x128xf32> to vector<8x128xbf16>
    %c0_60 = arith.constant 0 : index
    %c0_61 = arith.constant 0 : index
    %104 = vector.load %arg10[%c0_60, %c0_61] : memref<128x128xbf16, #tpu.memory_space<vmem>>, vector<128x128xbf16>
    %cst_62 = arith.constant dense<0.000000e+00> : vector<8x128xf32>
    %105 = tpu.matmul %103, %104, %cst_62 {dimension_numbers = #tpu.dot_dimension_numbers<[1], [0], [0], [1], [0, 0, 1, 1], [], []>} : vector<8x128xbf16>, vector<128x128xbf16>, vector<8x128xf32> -> vector<8x128xf32>
    %c0_63 = arith.constant 0 : index
    %c0_64 = arith.constant 0 : index
    %106 = vector.load %arg16[%c0_63, %c0_64] : memref<1x128xf32, #tpu.memory_space<vmem>>, vector<1x128xf32>
    %107 = vector.broadcast %106 : vector<1x128xf32> to vector<8x128xf32>
    %108 = arith.addf %105, %107 : vector<8x128xf32>
    %109 = arith.addf %108, %94 : vector<8x128xf32>
    %c0_65 = arith.constant 0 : index
    %c0_66 = arith.constant 0 : index
    %110 = vector.load %arg19[%c0_65, %c0_66] : memref<1x128xf32, #tpu.memory_space<vmem>>, vector<1x128xf32>
    %c0_67 = arith.constant 0 : index
    %c0_68 = arith.constant 0 : index
    %111 = vector.load %arg20[%c0_67, %c0_68] : memref<1x128xf32, #tpu.memory_space<vmem>>, vector<1x128xf32>
    %cst_69 = arith.constant dense<0.000000e+00> : vector<8xf32>
    %112 = vector.multi_reduction <add>, %109, %cst_69 [1] : vector<8x128xf32> to vector<8xf32>
    %113 = vector.shape_cast %112 : vector<8xf32> to vector<8x1xf32>
    %cst_70 = arith.constant 3.125000e-02 : f32
    %114 = vector.broadcast %cst_70 : f32 to vector<8x1xf32>
    %115 = arith.mulf %113, %114 : vector<8x1xf32>
    %116 = vector.broadcast %115 : vector<8x1xf32> to vector<8x128xf32>
    %117 = arith.subf %109, %116 : vector<8x128xf32>
    %118 = tpu.iota {dimensions = array<i32: 1>} : vector<1x128xi32>
    %c32_i32_71 = arith.constant 32 : i32
    %119 = vector.broadcast %c32_i32_71 : i32 to vector<1x128xi32>
    %120 = arith.cmpi slt, %118, %119 : vector<1x128xi32>
    %cst_72 = arith.constant 0.000000e+00 : f32
    %121 = vector.shape_cast %120 : vector<1x128xi1> to vector<1x128xi1>
    %122 = vector.broadcast %121 : vector<1x128xi1> to vector<8x128xi1>
    %123 = vector.broadcast %cst_72 : f32 to vector<8x128xf32>
    %124 = arith.select %122, %117, %123 : vector<8x128xi1>, vector<8x128xf32>
    %125 = arith.mulf %124, %124 : vector<8x128xf32>
    %cst_73 = arith.constant dense<0.000000e+00> : vector<8xf32>
    %126 = vector.multi_reduction <add>, %125, %cst_73 [1] : vector<8x128xf32> to vector<8xf32>
    %127 = vector.shape_cast %126 : vector<8xf32> to vector<8x1xf32>
    %cst_74 = arith.constant 3.125000e-02 : f32
    %128 = vector.broadcast %cst_74 : f32 to vector<8x1xf32>
    %129 = arith.mulf %127, %128 : vector<8x1xf32>
    %cst_75 = arith.constant 9.99999974E-6 : f32
    %130 = vector.broadcast %cst_75 : f32 to vector<8x1xf32>
    %131 = arith.addf %129, %130 : vector<8x1xf32>
    %132 = math.rsqrt %131 : vector<8x1xf32>
    %133 = vector.broadcast %132 : vector<8x1xf32> to vector<8x128xf32>
    %134 = arith.mulf %124, %133 : vector<8x128xf32>
    %135 = vector.broadcast %110 : vector<1x128xf32> to vector<8x128xf32>
    %136 = arith.mulf %134, %135 : vector<8x128xf32>
    %137 = vector.broadcast %111 : vector<1x128xf32> to vector<8x128xf32>
    %138 = arith.addf %136, %137 : vector<8x128xf32>
    %c0_76 = arith.constant 0 : index
    %c0_77 = arith.constant 0 : index
    %c0_78 = arith.constant 0 : index
    %139 = vector.load %arg21[%c0_76, %c0_77, %c0_78] : memref<1x8x128xf32, #tpu.memory_space<vmem>>, vector<1x8x128xf32>
    %140 = vector.shape_cast %139 : vector<1x8x128xf32> to vector<8x128xf32>
    %141 = vector.shape_cast %138 : vector<8x128xf32> to vector<1x8x128xf32>
    tpu.vector_store %arg21[%c0_76, %c0_77, %c0_78], %141 {strides = array<i32>} : memref<1x8x128xf32, #tpu.memory_space<vmem>>, vector<1x8x128xf32>,
    return
  }
  func.func @transform_0(%arg0: i32, %arg1: i32) -> (i32, i32, i32) {
    %c0_i32 = arith.constant 0 : i32
    %c0_i32_0 = arith.constant 0 : i32
    return %arg0, %arg1, %c0_i32 : i32, i32, i32
  }
  func.func @transform_1(%arg0: i32, %arg1: i32) -> (i32, i32, i32) {
    %c0_i32 = arith.constant 0 : i32
    %c0_i32_0 = arith.constant 0 : i32
    %c0_i32_1 = arith.constant 0 : i32
    return %arg0, %c0_i32, %c0_i32_0 : i32, i32, i32
  }
  func.func @transform_2(%arg0: i32, %arg1: i32) -> (i32, i32, i32) {
    %c0_i32 = arith.constant 0 : i32
    %c0_i32_0 = arith.constant 0 : i32
    %c0_i32_1 = arith.constant 0 : i32
    return %arg0, %c0_i32, %c0_i32_0 : i32, i32, i32
  }
  func.func @transform_3(%arg0: i32, %arg1: i32) -> (i32, i32) {
    %c0_i32 = arith.constant 0 : i32
    %c0_i32_0 = arith.constant 0 : i32
    %c0_i32_1 = arith.constant 0 : i32
    return %c0_i32, %c0_i32_0 : i32, i32
  }
  func.func @transform_4(%arg0: i32, %arg1: i32) -> (i32, i32) {
    %c0_i32 = arith.constant 0 : i32
    %c0_i32_0 = arith.constant 0 : i32
    %c0_i32_1 = arith.constant 0 : i32
    return %c0_i32, %c0_i32_0 : i32, i32
  }
  func.func @transform_5(%arg0: i32, %arg1: i32) -> (i32, i32) {
    %c0_i32 = arith.constant 0 : i32
    %c0_i32_0 = arith.constant 0 : i32
    %c0_i32_1 = arith.constant 0 : i32
    return %c0_i32, %c0_i32_0 : i32, i32
  }
  func.func @transform_6(%arg0: i32, %arg1: i32) -> (i32, i32) {
    %c0_i32 = arith.constant 0 : i32
    %c0_i32_0 = arith.constant 0 : i32
    %c0_i32_1 = arith.constant 0 : i32
    return %c0_i32, %c0_i32_0 : i32, i32
  }
  func.func @transform_7(%arg0: i32, %arg1: i32) -> (i32, i32) {
    %c0_i32 = arith.constant 0 : i32
    %c0_i32_0 = arith.constant 0 : i32
    %c0_i32_1 = arith.constant 0 : i32
    return %c0_i32, %c0_i32_0 : i32, i32
  }
  func.func @transform_8(%arg0: i32, %arg1: i32) -> (i32, i32) {
    %c0_i32 = arith.constant 0 : i32
    %c0_i32_0 = arith.constant 0 : i32
    %c0_i32_1 = arith.constant 0 : i32
    return %c0_i32, %c0_i32_0 : i32, i32
  }
  func.func @transform_9(%arg0: i32, %arg1: i32) -> (i32, i32) {
    %c0_i32 = arith.constant 0 : i32
    %c0_i32_0 = arith.constant 0 : i32
    %c0_i32_1 = arith.constant 0 : i32
    return %c0_i32, %c0_i32_0 : i32, i32
  }
  func.func @transform_10(%arg0: i32, %arg1: i32) -> (i32, i32) {
    %c0_i32 = arith.constant 0 : i32
    %c0_i32_0 = arith.constant 0 : i32
    %c0_i32_1 = arith.constant 0 : i32
    return %c0_i32, %c0_i32_0 : i32, i32
  }
  func.func @transform_11(%arg0: i32, %arg1: i32) -> (i32, i32) {
    %c0_i32 = arith.constant 0 : i32
    %c0_i32_0 = arith.constant 0 : i32
    %c0_i32_1 = arith.constant 0 : i32
    return %c0_i32, %c0_i32_0 : i32, i32
  }
  func.func @transform_12(%arg0: i32, %arg1: i32) -> (i32, i32) {
    %c0_i32 = arith.constant 0 : i32
    %c0_i32_0 = arith.constant 0 : i32
    %c0_i32_1 = arith.constant 0 : i32
    return %c0_i32, %c0_i32_0 : i32, i32
  }
  func.func @transform_13(%arg0: i32, %arg1: i32) -> (i32, i32) {
    %c0_i32 = arith.constant 0 : i32
    %c0_i32_0 = arith.constant 0 : i32
    %c0_i32_1 = arith.constant 0 : i32
    return %c0_i32, %c0_i32_0 : i32, i32
  }
  func.func @transform_14(%arg0: i32, %arg1: i32) -> (i32, i32) {
    %c0_i32 = arith.constant 0 : i32
    %c0_i32_0 = arith.constant 0 : i32
    %c0_i32_1 = arith.constant 0 : i32
    return %c0_i32, %c0_i32_0 : i32, i32
  }
  func.func @transform_15(%arg0: i32, %arg1: i32) -> (i32, i32) {
    %c0_i32 = arith.constant 0 : i32
    %c0_i32_0 = arith.constant 0 : i32
    %c0_i32_1 = arith.constant 0 : i32
    return %c0_i32, %c0_i32_0 : i32, i32
  }
  func.func @transform_16(%arg0: i32, %arg1: i32) -> (i32, i32) {
    %c0_i32 = arith.constant 0 : i32
    %c0_i32_0 = arith.constant 0 : i32
    %c0_i32_1 = arith.constant 0 : i32
    return %c0_i32, %c0_i32_0 : i32, i32
  }
  func.func @transform_17(%arg0: i32, %arg1: i32) -> (i32, i32) {
    %c0_i32 = arith.constant 0 : i32
    %c0_i32_0 = arith.constant 0 : i32
    %c0_i32_1 = arith.constant 0 : i32
    return %c0_i32, %c0_i32_0 : i32, i32
  }
  func.func @transform_18(%arg0: i32, %arg1: i32) -> (i32, i32) {
    %c0_i32 = arith.constant 0 : i32
    %c0_i32_0 = arith.constant 0 : i32
    %c0_i32_1 = arith.constant 0 : i32
    return %c0_i32, %c0_i32_0 : i32, i32
  }
  func.func @transform_19(%arg0: i32, %arg1: i32) -> (i32, i32, i32) {
    %c0_i32 = arith.constant 0 : i32
    %c0_i32_0 = arith.constant 0 : i32
    return %arg0, %arg1, %c0_i32 : i32, i32, i32
  }
}

module attributes {stable_mosaic.version = 11 : i64} {
  func.func @kernel(%arg0: i32, %arg1: i32, %arg2: memref<1x8x128xbf16, #tpu.memory_space<vmem>>, %arg3: memref<1x8x128xbf16, #tpu.memory_space<vmem>>, %arg4: memref<1x8x128xbf16, #tpu.memory_space<vmem>>, %arg5: memref<128x64xbf16, #tpu.memory_space<vmem>>, %arg6: memref<128x64xbf16, #tpu.memory_space<vmem>>, %arg7: memref<128x64xbf16, #tpu.memory_space<vmem>>, %arg8: memref<64x128xbf16, #tpu.memory_space<vmem>>, %arg9: memref<128x128xbf16, #tpu.memory_space<vmem>>, %arg10: memref<128x128xbf16, #tpu.memory_space<vmem>>, %arg11: memref<1x64xf32, #tpu.memory_space<vmem>>, %arg12: memref<1x64xf32, #tpu.memory_space<vmem>>, %arg13: memref<1x64xf32, #tpu.memory_space<vmem>>, %arg14: memref<1x128xf32, #tpu.memory_space<vmem>>, %arg15: memref<1x128xf32, #tpu.memory_space<vmem>>, %arg16: memref<1x128xf32, #tpu.memory_space<vmem>>, %arg17: memref<1x128xf32, #tpu.memory_space<vmem>>, %arg18: memref<1x128xf32, #tpu.memory_space<vmem>>, %arg19: memref<1x128xf32, #tpu.memory_space<vmem>>, %arg20: memref<1x128xf32, #tpu.memory_space<vmem>>, %arg21: memref<1x8x128xf32, #tpu.memory_space<vmem>>, %arg22: memref<4x8x16xbf16, #tpu.memory_space<vmem>>, %arg23: memref<4x8x16xbf16, #tpu.memory_space<vmem>>, %arg24: memref<4x8x16xbf16, #tpu.memory_space<vmem>>, %arg25: memref<8x64xbf16, #tpu.memory_space<vmem>>) attributes {dimension_semantics = [#tpu.dimension_semantics<parallel>, #tpu.dimension_semantics<arbitrary>], iteration_bounds = array<i64: 2, 1>, scalar_prefetch = 0 : i64, scratch_operands = 4 : i64, tpu.core_type = #tpu.core_type<tc>, window_params = [{transform_indices = @transform_0, window_bounds = array<i64: 1, 8, 128>}, {transform_indices = @transform_1, window_bounds = array<i64: 1, 8, 128>}, {transform_indices = @transform_2, window_bounds = array<i64: 1, 8, 128>}, {pipeline_mode = #tpu.pipeline_mode<synchronous>, transform_indices = @transform_3, window_bounds = array<i64: 128, 64>}, {pipeline_mode = #tpu.pipeline_mode<synchronous>, transform_indices = @transform_4, window_bounds = array<i64: 128, 64>}, {pipeline_mode = #tpu.pipeline_mode<synchronous>, transform_indices = @transform_5, window_bounds = array<i64: 128, 64>}, {pipeline_mode = #tpu.pipeline_mode<synchronous>, transform_indices = @transform_6, window_bounds = array<i64: 64, 128>}, {pipeline_mode = #tpu.pipeline_mode<synchronous>, transform_indices = @transform_7, window_bounds = array<i64: 128, 128>}, {pipeline_mode = #tpu.pipeline_mode<synchronous>, transform_indices = @transform_8, window_bounds = array<i64: 128, 128>}, {pipeline_mode = #tpu.pipeline_mode<synchronous>, transform_indices = @transform_9, window_bounds = array<i64: 1, 64>}, {pipeline_mode = #tpu.pipeline_mode<synchronous>, transform_indices = @transform_10, window_bounds = array<i64: 1, 64>}, {pipeline_mode = #tpu.pipeline_mode<synchronous>, transform_indices = @transform_11, window_bounds = array<i64: 1, 64>}, {pipeline_mode = #tpu.pipeline_mode<synchronous>, transform_indices = @transform_12, window_bounds = array<i64: 1, 128>}, {pipeline_mode = #tpu.pipeline_mode<synchronous>, transform_indices = @transform_13, window_bounds = array<i64: 1, 128>}, {pipeline_mode = #tpu.pipeline_mode<synchronous>, transform_indices = @transform_14, window_bounds = array<i64: 1, 128>}, {pipeline_mode = #tpu.pipeline_mode<synchronous>, transform_indices = @transform_15, window_bounds = array<i64: 1, 128>}, {pipeline_mode = #tpu.pipeline_mode<synchronous>, transform_indices = @transform_16, window_bounds = array<i64: 1, 128>}, {pipeline_mode = #tpu.pipeline_mode<synchronous>, transform_indices = @transform_17, window_bounds = array<i64: 1, 128>}, {pipeline_mode = #tpu.pipeline_mode<synchronous>, transform_indices = @transform_18, window_bounds = array<i64: 1, 128>}, {transform_indices = @transform_19, window_bounds = array<i64: 1, 8, 128>}]} {
    %c0_i32 = arith.constant 0 : i32
    %0 = arith.cmpi eq, %arg1, %c0_i32 : i32
    %1 = arith.extui %0 : i1 to i32
    %c0_i32_0 = arith.constant 0 : i32
    %2 = arith.cmpi ne, %1, %c0_i32_0 : i32
    scf.if %2 {
      %c0_79 = arith.constant 0 : index
      %c0_80 = arith.constant 0 : index
      %c0_81 = arith.constant 0 : index
      %142 = vector.load %arg3[%c0_79, %c0_80, %c0_81] : memref<1x8x128xbf16, #tpu.memory_space<vmem>>, vector<1x8x128xbf16>
      %143 = vector.shape_cast %142 : vector<1x8x128xbf16> to vector<8x128xbf16>
      %c0_82 = arith.constant 0 : index
      %c0_83 = arith.constant 0 : index
      %144 = vector.load %arg6[%c0_82, %c0_83] : memref<128x64xbf16, #tpu.memory_space<vmem>>, vector<128x64xbf16>
      %cst_84 = arith.constant dense<0.000000e+00> : vector<8x64xf32>
      %145 = tpu.matmul %143, %144, %cst_84 {dimension_numbers = #tpu.dot_dimension_numbers<[1], [0], [0], [1], [0, 0, 1, 1], [], []>} : vector<8x128xbf16>, vector<128x64xbf16>, vector<8x64xf32> -> vector<8x64xf32>
      %c0_85 = arith.constant 0 : index
      %c0_86 = arith.constant 0 : index
      %146 = vector.load %arg12[%c0_85, %c0_86] : memref<1x64xf32, #tpu.memory_space<vmem>>, vector<1x64xf32>
      %147 = vector.broadcast %146 : vector<1x64xf32> to vector<8x64xf32>
      %148 = arith.addf %145, %147 : vector<8x64xf32>
      %149 = arith.truncf %148 : vector<8x64xf32> to vector<8x64xbf16>
      %c0_87 = arith.constant 0 : index
      %c0_88 = arith.constant 0 : index
      %c0_89 = arith.constant 0 : index
      %150 = vector.load %arg4[%c0_87, %c0_88, %c0_89] : memref<1x8x128xbf16, #tpu.memory_space<vmem>>, vector<1x8x128xbf16>
      %151 = vector.shape_cast %150 : vector<1x8x128xbf16> to vector<8x128xbf16>
      %c0_90 = arith.constant 0 : index
      %c0_91 = arith.constant 0 : index
      %152 = vector.load %arg7[%c0_90, %c0_91] : memref<128x64xbf16, #tpu.memory_space<vmem>>, vector<128x64xbf16>
      %cst_92 = arith.constant dense<0.000000e+00> : vector<8x64xf32>
      %153 = tpu.matmul %151, %152, %cst_92 {dimension_numbers = #tpu.dot_dimension_numbers<[1], [0], [0], [1], [0, 0, 1, 1], [], []>} : vector<8x128xbf16>, vector<128x64xbf16>, vector<8x64xf32> -> vector<8x64xf32>
      %c0_93 = arith.constant 0 : index
      %c0_94 = arith.constant 0 : index
      %154 = vector.load %arg13[%c0_93, %c0_94] : memref<1x64xf32, #tpu.memory_space<vmem>>, vector<1x64xf32>
      %155 = vector.broadcast %154 : vector<1x64xf32> to vector<8x64xf32>
      %156 = arith.addf %153, %155 : vector<8x64xf32>
      %157 = arith.truncf %156 : vector<8x64xf32> to vector<8x64xbf16>
      %158 = vector.extract_strided_slice %149 {offsets = [0, 0], sizes = [8, 16], strides = [1, 1]} : vector<8x64xbf16> to vector<8x16xbf16>
      %c0_95 = arith.constant 0 : index
      %c0_96 = arith.constant 0 : index
      %c0_97 = arith.constant 0 : index
      %159 = vector.load %arg22[%c0_95, %c0_96, %c0_97] : memref<4x8x16xbf16, #tpu.memory_space<vmem>>, vector<1x8x16xbf16>
      %160 = vector.shape_cast %159 : vector<1x8x16xbf16> to vector<8x16xbf16>
      %161 = vector.shape_cast %158 : vector<8x16xbf16> to vector<1x8x16xbf16>
      tpu.vector_store %arg22[%c0_95, %c0_96, %c0_97], %161 {strides = array<i32>} : memref<4x8x16xbf16, #tpu.memory_space<vmem>>, vector<1x8x16xbf16>,
      %162 = vector.extract_strided_slice %157 {offsets = [0, 0], sizes = [8, 16], strides = [1, 1]} : vector<8x64xbf16> to vector<8x16xbf16>
      %c0_98 = arith.constant 0 : index
      %c0_99 = arith.constant 0 : index
      %c0_100 = arith.constant 0 : index
      %163 = vector.load %arg23[%c0_98, %c0_99, %c0_100] : memref<4x8x16xbf16, #tpu.memory_space<vmem>>, vector<1x8x16xbf16>
      %164 = vector.shape_cast %163 : vector<1x8x16xbf16> to vector<8x16xbf16>
      %165 = vector.shape_cast %162 : vector<8x16xbf16> to vector<1x8x16xbf16>
      tpu.vector_store %arg23[%c0_98, %c0_99, %c0_100], %165 {strides = array<i32>} : memref<4x8x16xbf16, #tpu.memory_space<vmem>>, vector<1x8x16xbf16>,
      %166 = vector.extract_strided_slice %149 {offsets = [0, 16], sizes = [8, 16], strides = [1, 1]} : vector<8x64xbf16> to vector<8x16xbf16>
      %c1_101 = arith.constant 1 : index
      %c0_102 = arith.constant 0 : index
      %c0_103 = arith.constant 0 : index
      %167 = vector.load %arg22[%c1_101, %c0_102, %c0_103] : memref<4x8x16xbf16, #tpu.memory_space<vmem>>, vector<1x8x16xbf16>
      %168 = vector.shape_cast %167 : vector<1x8x16xbf16> to vector<8x16xbf16>
      %169 = vector.shape_cast %166 : vector<8x16xbf16> to vector<1x8x16xbf16>
      tpu.vector_store %arg22[%c1_101, %c0_102, %c0_103], %169 {strides = array<i32>} : memref<4x8x16xbf16, #tpu.memory_space<vmem>>, vector<1x8x16xbf16>,
      %170 = vector.extract_strided_slice %157 {offsets = [0, 16], sizes = [8, 16], strides = [1, 1]} : vector<8x64xbf16> to vector<8x16xbf16>
      %c1_104 = arith.constant 1 : index
      %c0_105 = arith.constant 0 : index
      %c0_106 = arith.constant 0 : index
      %171 = vector.load %arg23[%c1_104, %c0_105, %c0_106] : memref<4x8x16xbf16, #tpu.memory_space<vmem>>, vector<1x8x16xbf16>
      %172 = vector.shape_cast %171 : vector<1x8x16xbf16> to vector<8x16xbf16>
      %173 = vector.shape_cast %170 : vector<8x16xbf16> to vector<1x8x16xbf16>
      tpu.vector_store %arg23[%c1_104, %c0_105, %c0_106], %173 {strides = array<i32>} : memref<4x8x16xbf16, #tpu.memory_space<vmem>>, vector<1x8x16xbf16>,
      %174 = vector.extract_strided_slice %149 {offsets = [0, 32], sizes = [8, 16], strides = [1, 1]} : vector<8x64xbf16> to vector<8x16xbf16>
      %c2_107 = arith.constant 2 : index
      %c0_108 = arith.constant 0 : index
      %c0_109 = arith.constant 0 : index
      %175 = vector.load %arg22[%c2_107, %c0_108, %c0_109] : memref<4x8x16xbf16, #tpu.memory_space<vmem>>, vector<1x8x16xbf16>
      %176 = vector.shape_cast %175 : vector<1x8x16xbf16> to vector<8x16xbf16>
      %177 = vector.shape_cast %174 : vector<8x16xbf16> to vector<1x8x16xbf16>
      tpu.vector_store %arg22[%c2_107, %c0_108, %c0_109], %177 {strides = array<i32>} : memref<4x8x16xbf16, #tpu.memory_space<vmem>>, vector<1x8x16xbf16>,
      %178 = vector.extract_strided_slice %157 {offsets = [0, 32], sizes = [8, 16], strides = [1, 1]} : vector<8x64xbf16> to vector<8x16xbf16>
      %c2_110 = arith.constant 2 : index
      %c0_111 = arith.constant 0 : index
      %c0_112 = arith.constant 0 : index
      %179 = vector.load %arg23[%c2_110, %c0_111, %c0_112] : memref<4x8x16xbf16, #tpu.memory_space<vmem>>, vector<1x8x16xbf16>
      %180 = vector.shape_cast %179 : vector<1x8x16xbf16> to vector<8x16xbf16>
      %181 = vector.shape_cast %178 : vector<8x16xbf16> to vector<1x8x16xbf16>
      tpu.vector_store %arg23[%c2_110, %c0_111, %c0_112], %181 {strides = array<i32>} : memref<4x8x16xbf16, #tpu.memory_space<vmem>>, vector<1x8x16xbf16>,
      %182 = vector.extract_strided_slice %149 {offsets = [0, 48], sizes = [8, 16], strides = [1, 1]} : vector<8x64xbf16> to vector<8x16xbf16>
      %c3_113 = arith.constant 3 : index
      %c0_114 = arith.constant 0 : index
      %c0_115 = arith.constant 0 : index
      %183 = vector.load %arg22[%c3_113, %c0_114, %c0_115] : memref<4x8x16xbf16, #tpu.memory_space<vmem>>, vector<1x8x16xbf16>
      %184 = vector.shape_cast %183 : vector<1x8x16xbf16> to vector<8x16xbf16>
      %185 = vector.shape_cast %182 : vector<8x16xbf16> to vector<1x8x16xbf16>
      tpu.vector_store %arg22[%c3_113, %c0_114, %c0_115], %185 {strides = array<i32>} : memref<4x8x16xbf16, #tpu.memory_space<vmem>>, vector<1x8x16xbf16>,
      %186 = vector.extract_strided_slice %157 {offsets = [0, 48], sizes = [8, 16], strides = [1, 1]} : vector<8x64xbf16> to vector<8x16xbf16>
      %c3_116 = arith.constant 3 : index
      %c0_117 = arith.constant 0 : index
      %c0_118 = arith.constant 0 : index
      %187 = vector.load %arg23[%c3_116, %c0_117, %c0_118] : memref<4x8x16xbf16, #tpu.memory_space<vmem>>, vector<1x8x16xbf16>
      %188 = vector.shape_cast %187 : vector<1x8x16xbf16> to vector<8x16xbf16>
      %189 = vector.shape_cast %186 : vector<8x16xbf16> to vector<1x8x16xbf16>
      tpu.vector_store %arg23[%c3_116, %c0_117, %c0_118], %189 {strides = array<i32>} : memref<4x8x16xbf16, #tpu.memory_space<vmem>>, vector<1x8x16xbf16>,
    } else {
    }
    %c0 = arith.constant 0 : index
    %c0_1 = arith.constant 0 : index
    %c0_2 = arith.constant 0 : index
    %3 = vector.load %arg2[%c0, %c0_1, %c0_2] : memref<1x8x128xbf16, #tpu.memory_space<vmem>>, vector<1x8x128xbf16>
    %4 = vector.shape_cast %3 : vector<1x8x128xbf16> to vector<8x128xbf16>
    %c0_3 = arith.constant 0 : index
    %c0_4 = arith.constant 0 : index
    %5 = vector.load %arg5[%c0_3, %c0_4] : memref<128x64xbf16, #tpu.memory_space<vmem>>, vector<128x64xbf16>
    %cst = arith.constant dense<0.000000e+00> : vector<8x64xf32>
    %6 = tpu.matmul %4, %5, %cst {dimension_numbers = #tpu.dot_dimension_numbers<[1], [0], [0], [1], [0, 0, 1, 1], [], []>} : vector<8x128xbf16>, vector<128x64xbf16>, vector<8x64xf32> -> vector<8x64xf32>
    %c0_5 = arith.constant 0 : index
    %c0_6 = arith.constant 0 : index
    %7 = vector.load %arg11[%c0_5, %c0_6] : memref<1x64xf32, #tpu.memory_space<vmem>>, vector<1x64xf32>
    %8 = vector.broadcast %7 : vector<1x64xf32> to vector<8x64xf32>
    %9 = arith.addf %6, %8 : vector<8x64xf32>
    %10 = arith.truncf %9 : vector<8x64xf32> to vector<8x64xbf16>
    %11 = vector.extract_strided_slice %10 {offsets = [0, 0], sizes = [8, 16], strides = [1, 1]} : vector<8x64xbf16> to vector<8x16xbf16>
    %c0_7 = arith.constant 0 : index
    %c0_8 = arith.constant 0 : index
    %c0_9 = arith.constant 0 : index
    %12 = vector.load %arg24[%c0_7, %c0_8, %c0_9] : memref<4x8x16xbf16, #tpu.memory_space<vmem>>, vector<1x8x16xbf16>
    %13 = vector.shape_cast %12 : vector<1x8x16xbf16> to vector<8x16xbf16>
    %14 = vector.shape_cast %11 : vector<8x16xbf16> to vector<1x8x16xbf16>
    tpu.vector_store %arg24[%c0_7, %c0_8, %c0_9], %14 {strides = array<i32>} : memref<4x8x16xbf16, #tpu.memory_space<vmem>>, vector<1x8x16xbf16>,
    %15 = vector.extract_strided_slice %10 {offsets = [0, 16], sizes = [8, 16], strides = [1, 1]} : vector<8x64xbf16> to vector<8x16xbf16>
    %c1 = arith.constant 1 : index
    %c0_10 = arith.constant 0 : index
    %c0_11 = arith.constant 0 : index
    %16 = vector.load %arg24[%c1, %c0_10, %c0_11] : memref<4x8x16xbf16, #tpu.memory_space<vmem>>, vector<1x8x16xbf16>
    %17 = vector.shape_cast %16 : vector<1x8x16xbf16> to vector<8x16xbf16>
    %18 = vector.shape_cast %15 : vector<8x16xbf16> to vector<1x8x16xbf16>
    tpu.vector_store %arg24[%c1, %c0_10, %c0_11], %18 {strides = array<i32>} : memref<4x8x16xbf16, #tpu.memory_space<vmem>>, vector<1x8x16xbf16>,
    %19 = vector.extract_strided_slice %10 {offsets = [0, 32], sizes = [8, 16], strides = [1, 1]} : vector<8x64xbf16> to vector<8x16xbf16>
    %c2 = arith.constant 2 : index
    %c0_12 = arith.constant 0 : index
    %c0_13 = arith.constant 0 : index
    %20 = vector.load %arg24[%c2, %c0_12, %c0_13] : memref<4x8x16xbf16, #tpu.memory_space<vmem>>, vector<1x8x16xbf16>
    %21 = vector.shape_cast %20 : vector<1x8x16xbf16> to vector<8x16xbf16>
    %22 = vector.shape_cast %19 : vector<8x16xbf16> to vector<1x8x16xbf16>
    tpu.vector_store %arg24[%c2, %c0_12, %c0_13], %22 {strides = array<i32>} : memref<4x8x16xbf16, #tpu.memory_space<vmem>>, vector<1x8x16xbf16>,
    %23 = vector.extract_strided_slice %10 {offsets = [0, 48], sizes = [8, 16], strides = [1, 1]} : vector<8x64xbf16> to vector<8x16xbf16>
    %c3 = arith.constant 3 : index
    %c0_14 = arith.constant 0 : index
    %c0_15 = arith.constant 0 : index
    %24 = vector.load %arg24[%c3, %c0_14, %c0_15] : memref<4x8x16xbf16, #tpu.memory_space<vmem>>, vector<1x8x16xbf16>
    %25 = vector.shape_cast %24 : vector<1x8x16xbf16> to vector<8x16xbf16>
    %26 = vector.shape_cast %23 : vector<8x16xbf16> to vector<1x8x16xbf16>
    tpu.vector_store %arg24[%c3, %c0_14, %c0_15], %26 {strides = array<i32>} : memref<4x8x16xbf16, #tpu.memory_space<vmem>>, vector<1x8x16xbf16>,
    %c0_16 = arith.constant 0 : index
    %c0_17 = arith.constant 0 : index
    %c0_18 = arith.constant 0 : index
    %27 = vector.load %arg24[%c0_16, %c0_17, %c0_18] : memref<4x8x16xbf16, #tpu.memory_space<vmem>>, vector<4x8x16xbf16>
    %c0_19 = arith.constant 0 : index
    %c0_20 = arith.constant 0 : index
    %c0_21 = arith.constant 0 : index
    %28 = vector.load %arg22[%c0_19, %c0_20, %c0_21] : memref<4x8x16xbf16, #tpu.memory_space<vmem>>, vector<4x8x16xbf16>
    %cst_22 = arith.constant dense<0.000000e+00> : vector<4x8x8xf32>
    %29 = tpu.matmul %27, %28, %cst_22 {dimension_numbers = #tpu.dot_dimension_numbers<[2], [2], [1], [1], [0, 0, 0, 1, 1, 1], [0], [0]>} : vector<4x8x16xbf16>, vector<4x8x16xbf16>, vector<4x8x8xf32> -> vector<4x8x8xf32>
    %cst_23 = arith.constant dense<0xFF800000> : vector<4x8xf32>
    %30 = vector.multi_reduction <maximumf>, %29, %cst_23 [2] : vector<4x8x8xf32> to vector<4x8xf32>
    %31 = vector.shape_cast %30 : vector<4x8xf32> to vector<4x8x1xf32>
    %32 = vector.broadcast %31 : vector<4x8x1xf32> to vector<4x8x8xf32>
    %33 = arith.subf %29, %32 : vector<4x8x8xf32>
    %34 = math.exp %33 : vector<4x8x8xf32>
    %cst_24 = arith.constant dense<0.000000e+00> : vector<4x8xf32>
    %35 = vector.multi_reduction <add>, %34, %cst_24 [2] : vector<4x8x8xf32> to vector<4x8xf32>
    %36 = vector.shape_cast %35 : vector<4x8xf32> to vector<4x8x1xf32>
    %37 = tpu.reciprocal %36 {approx = true} : vector<4x8x1xf32> -> vector<4x8x1xf32>
    %38 = vector.broadcast %37 : vector<4x8x1xf32> to vector<4x8x8xf32>
    %39 = arith.mulf %34, %38 : vector<4x8x8xf32>
    %40 = arith.truncf %39 : vector<4x8x8xf32> to vector<4x8x8xbf16>
    %c0_25 = arith.constant 0 : index
    %c0_26 = arith.constant 0 : index
    %c0_27 = arith.constant 0 : index
    %41 = vector.load %arg23[%c0_25, %c0_26, %c0_27] : memref<4x8x16xbf16, #tpu.memory_space<vmem>>, vector<4x8x16xbf16>
    %cst_28 = arith.constant dense<0.000000e+00> : vector<4x8x16xf32>
    %42 = tpu.matmul %40, %41, %cst_28 {dimension_numbers = #tpu.dot_dimension_numbers<[2], [1], [1], [2], [0, 0, 0, 1, 1, 2], [0], [0]>} : vector<4x8x8xbf16>, vector<4x8x16xbf16>, vector<4x8x16xf32> -> vector<4x8x16xf32>
    %43 = arith.truncf %42 : vector<4x8x16xf32> to vector<4x8x16xbf16>
    %44 = vector.extract_strided_slice %43 {offsets = [0, 0, 0], sizes = [1, 8, 16], strides = [1, 1, 1]} : vector<4x8x16xbf16> to vector<1x8x16xbf16>
    %45 = vector.shape_cast %44 : vector<1x8x16xbf16> to vector<8x16xbf16>
    %c0_29 = arith.constant 0 : index
    %c0_30 = arith.constant 0 : index
    %46 = vector.load %arg25[%c0_29, %c0_30] : memref<8x64xbf16, #tpu.memory_space<vmem>>, vector<8x16xbf16>
    tpu.vector_store %arg25[%c0_29, %c0_30], %45 {strides = array<i32>} : memref<8x64xbf16, #tpu.memory_space<vmem>>, vector<8x16xbf16>,
    %47 = vector.extract_strided_slice %43 {offsets = [1, 0, 0], sizes = [1, 8, 16], strides = [1, 1, 1]} : vector<4x8x16xbf16> to vector<1x8x16xbf16>
    %48 = vector.shape_cast %47 : vector<1x8x16xbf16> to vector<8x16xbf16>
    %c0_31 = arith.constant 0 : index
    %c16 = arith.constant 16 : index
    %49 = vector.load %arg25[%c0_31, %c16] : memref<8x64xbf16, #tpu.memory_space<vmem>>, vector<8x16xbf16>
    tpu.vector_store %arg25[%c0_31, %c16], %48 {strides = array<i32>} : memref<8x64xbf16, #tpu.memory_space<vmem>>, vector<8x16xbf16>,
    %50 = vector.extract_strided_slice %43 {offsets = [2, 0, 0], sizes = [1, 8, 16], strides = [1, 1, 1]} : vector<4x8x16xbf16> to vector<1x8x16xbf16>
    %51 = vector.shape_cast %50 : vector<1x8x16xbf16> to vector<8x16xbf16>
    %c0_32 = arith.constant 0 : index
    %c32 = arith.constant 32 : index
    %52 = vector.load %arg25[%c0_32, %c32] : memref<8x64xbf16, #tpu.memory_space<vmem>>, vector<8x16xbf16>
    tpu.vector_store %arg25[%c0_32, %c32], %51 {strides = array<i32>} : memref<8x64xbf16, #tpu.memory_space<vmem>>, vector<8x16xbf16>,
    %53 = vector.extract_strided_slice %43 {offsets = [3, 0, 0], sizes = [1, 8, 16], strides = [1, 1, 1]} : vector<4x8x16xbf16> to vector<1x8x16xbf16>
    %54 = vector.shape_cast %53 : vector<1x8x16xbf16> to vector<8x16xbf16>
    %c0_33 = arith.constant 0 : index
    %c48 = arith.constant 48 : index
    %55 = vector.load %arg25[%c0_33, %c48] : memref<8x64xbf16, #tpu.memory_space<vmem>>, vector<8x16xbf16>
    tpu.vector_store %arg25[%c0_33, %c48], %54 {strides = array<i32>} : memref<8x64xbf16, #tpu.memory_space<vmem>>, vector<8x16xbf16>,
    %c0_34 = arith.constant 0 : index
    %c0_35 = arith.constant 0 : index
    %56 = vector.load %arg25[%c0_34, %c0_35] : memref<8x64xbf16, #tpu.memory_space<vmem>>, vector<8x64xbf16>
    %c0_36 = arith.constant 0 : index
    %c0_37 = arith.constant 0 : index
    %57 = vector.load %arg8[%c0_36, %c0_37] : memref<64x128xbf16, #tpu.memory_space<vmem>>, vector<64x128xbf16>
    %cst_38 = arith.constant dense<0.000000e+00> : vector<8x128xf32>
    %58 = tpu.matmul %56, %57, %cst_38 {dimension_numbers = #tpu.dot_dimension_numbers<[1], [0], [0], [1], [0, 0, 1, 1], [], []>} : vector<8x64xbf16>, vector<64x128xbf16>, vector<8x128xf32> -> vector<8x128xf32>
    %c0_39 = arith.constant 0 : index
    %c0_40 = arith.constant 0 : index
    %59 = vector.load %arg14[%c0_39, %c0_40] : memref<1x128xf32, #tpu.memory_space<vmem>>, vector<1x128xf32>
    %60 = vector.broadcast %59 : vector<1x128xf32> to vector<8x128xf32>
    %61 = arith.addf %58, %60 : vector<8x128xf32>
    %c0_41 = arith.constant 0 : index
    %c0_42 = arith.constant 0 : index
    %c0_43 = arith.constant 0 : index
    %62 = vector.load %arg2[%c0_41, %c0_42, %c0_43] : memref<1x8x128xbf16, #tpu.memory_space<vmem>>, vector<1x8x128xbf16>
    %63 = vector.shape_cast %62 : vector<1x8x128xbf16> to vector<8x128xbf16>
    %64 = arith.extf %63 : vector<8x128xbf16> to vector<8x128xf32>
    %65 = arith.addf %61, %64 : vector<8x128xf32>
    %c0_44 = arith.constant 0 : index
    %c0_45 = arith.constant 0 : index
    %66 = vector.load %arg17[%c0_44, %c0_45] : memref<1x128xf32, #tpu.memory_space<vmem>>, vector<1x128xf32>
    %c0_46 = arith.constant 0 : index
    %c0_47 = arith.constant 0 : index
    %67 = vector.load %arg18[%c0_46, %c0_47] : memref<1x128xf32, #tpu.memory_space<vmem>>, vector<1x128xf32>
    %cst_48 = arith.constant dense<0.000000e+00> : vector<8xf32>
    %68 = vector.multi_reduction <add>, %65, %cst_48 [1] : vector<8x128xf32> to vector<8xf32>
    %69 = vector.shape_cast %68 : vector<8xf32> to vector<8x1xf32>
    %cst_49 = arith.constant 3.125000e-02 : f32
    %70 = vector.broadcast %cst_49 : f32 to vector<8x1xf32>
    %71 = arith.mulf %69, %70 : vector<8x1xf32>
    %72 = vector.broadcast %71 : vector<8x1xf32> to vector<8x128xf32>
    %73 = arith.subf %65, %72 : vector<8x128xf32>
    %74 = tpu.iota {dimensions = array<i32: 1>} : vector<1x128xi32>
    %c32_i32 = arith.constant 32 : i32
    %75 = vector.broadcast %c32_i32 : i32 to vector<1x128xi32>
    %76 = arith.cmpi slt, %74, %75 : vector<1x128xi32>
    %cst_50 = arith.constant 0.000000e+00 : f32
    %77 = vector.shape_cast %76 : vector<1x128xi1> to vector<1x128xi1>
    %78 = vector.broadcast %77 : vector<1x128xi1> to vector<8x128xi1>
    %79 = vector.broadcast %cst_50 : f32 to vector<8x128xf32>
    %80 = arith.select %78, %73, %79 : vector<8x128xi1>, vector<8x128xf32>
    %81 = arith.mulf %80, %80 : vector<8x128xf32>
    %cst_51 = arith.constant dense<0.000000e+00> : vector<8xf32>
    %82 = vector.multi_reduction <add>, %81, %cst_51 [1] : vector<8x128xf32> to vector<8xf32>
    %83 = vector.shape_cast %82 : vector<8xf32> to vector<8x1xf32>
    %cst_52 = arith.constant 3.125000e-02 : f32
    %84 = vector.broadcast %cst_52 : f32 to vector<8x1xf32>
    %85 = arith.mulf %83, %84 : vector<8x1xf32>
    %cst_53 = arith.constant 9.99999974E-6 : f32
    %86 = vector.broadcast %cst_53 : f32 to vector<8x1xf32>
    %87 = arith.addf %85, %86 : vector<8x1xf32>
    %88 = math.rsqrt %87 : vector<8x1xf32>
    %89 = vector.broadcast %88 : vector<8x1xf32> to vector<8x128xf32>
    %90 = arith.mulf %80, %89 : vector<8x128xf32>
    %91 = vector.broadcast %66 : vector<1x128xf32> to vector<8x128xf32>
    %92 = arith.mulf %90, %91 : vector<8x128xf32>
    %93 = vector.broadcast %67 : vector<1x128xf32> to vector<8x128xf32>
    %94 = arith.addf %92, %93 : vector<8x128xf32>
    %95 = arith.truncf %94 : vector<8x128xf32> to vector<8x128xbf16>
    %c0_54 = arith.constant 0 : index
    %c0_55 = arith.constant 0 : index
    %96 = vector.load %arg9[%c0_54, %c0_55] : memref<128x128xbf16, #tpu.memory_space<vmem>>, vector<128x128xbf16>
    %cst_56 = arith.constant dense<0.000000e+00> : vector<8x128xf32>
    %97 = tpu.matmul %95, %96, %cst_56 {dimension_numbers = #tpu.dot_dimension_numbers<[1], [0], [0], [1], [0, 0, 1, 1], [], []>} : vector<8x128xbf16>, vector<128x128xbf16>, vector<8x128xf32> -> vector<8x128xf32>
    %c0_57 = arith.constant 0 : index
    %c0_58 = arith.constant 0 : index
    %98 = vector.load %arg15[%c0_57, %c0_58] : memref<1x128xf32, #tpu.memory_space<vmem>>, vector<1x128xf32>
    %99 = vector.broadcast %98 : vector<1x128xf32> to vector<8x128xf32>
    %100 = arith.addf %97, %99 : vector<8x128xf32>
    %cst_59 = arith.constant 0.000000e+00 : f32
    %101 = vector.broadcast %cst_59 : f32 to vector<8x128xf32>
    %102 = arith.maximumf %100, %101 : vector<8x128xf32>
    %103 = arith.truncf %102 : vector<8x128xf32> to vector<8x128xbf16>
    %c0_60 = arith.constant 0 : index
    %c0_61 = arith.constant 0 : index
    %104 = vector.load %arg10[%c0_60, %c0_61] : memref<128x128xbf16, #tpu.memory_space<vmem>>, vector<128x128xbf16>
    %cst_62 = arith.constant dense<0.000000e+00> : vector<8x128xf32>
    %105 = tpu.matmul %103, %104, %cst_62 {dimension_numbers = #tpu.dot_dimension_numbers<[1], [0], [0], [1], [0, 0, 1, 1], [], []>} : vector<8x128xbf16>, vector<128x128xbf16>, vector<8x128xf32> -> vector<8x128xf32>
    %c0_63 = arith.constant 0 : index
    %c0_64 = arith.constant 0 : index
    %106 = vector.load %arg16[%c0_63, %c0_64] : memref<1x128xf32, #tpu.memory_space<vmem>>, vector<1x128xf32>
    %107 = vector.broadcast %106 : vector<1x128xf32> to vector<8x128xf32>
    %108 = arith.addf %105, %107 : vector<8x128xf32>
    %109 = arith.addf %108, %94 : vector<8x128xf32>
    %c0_65 = arith.constant 0 : index
    %c0_66 = arith.constant 0 : index
    %110 = vector.load %arg19[%c0_65, %c0_66] : memref<1x128xf32, #tpu.memory_space<vmem>>, vector<1x128xf32>
    %c0_67 = arith.constant 0 : index
    %c0_68 = arith.constant 0 : index
    %111 = vector.load %arg20[%c0_67, %c0_68] : memref<1x128xf32, #tpu.memory_space<vmem>>, vector<1x128xf32>
    %cst_69 = arith.constant dense<0.000000e+00> : vector<8xf32>
    %112 = vector.multi_reduction <add>, %109, %cst_69 [1] : vector<8x128xf32> to vector<8xf32>
    %113 = vector.shape_cast %112 : vector<8xf32> to vector<8x1xf32>
    %cst_70 = arith.constant 3.125000e-02 : f32
    %114 = vector.broadcast %cst_70 : f32 to vector<8x1xf32>
    %115 = arith.mulf %113, %114 : vector<8x1xf32>
    %116 = vector.broadcast %115 : vector<8x1xf32> to vector<8x128xf32>
    %117 = arith.subf %109, %116 : vector<8x128xf32>
    %118 = tpu.iota {dimensions = array<i32: 1>} : vector<1x128xi32>
    %c32_i32_71 = arith.constant 32 : i32
    %119 = vector.broadcast %c32_i32_71 : i32 to vector<1x128xi32>
    %120 = arith.cmpi slt, %118, %119 : vector<1x128xi32>
    %cst_72 = arith.constant 0.000000e+00 : f32
    %121 = vector.shape_cast %120 : vector<1x128xi1> to vector<1x128xi1>
    %122 = vector.broadcast %121 : vector<1x128xi1> to vector<8x128xi1>
    %123 = vector.broadcast %cst_72 : f32 to vector<8x128xf32>
    %124 = arith.select %122, %117, %123 : vector<8x128xi1>, vector<8x128xf32>
    %125 = arith.mulf %124, %124 : vector<8x128xf32>
    %cst_73 = arith.constant dense<0.000000e+00> : vector<8xf32>
    %126 = vector.multi_reduction <add>, %125, %cst_73 [1] : vector<8x128xf32> to vector<8xf32>
    %127 = vector.shape_cast %126 : vector<8xf32> to vector<8x1xf32>
    %cst_74 = arith.constant 3.125000e-02 : f32
    %128 = vector.broadcast %cst_74 : f32 to vector<8x1xf32>
    %129 = arith.mulf %127, %128 : vector<8x1xf32>
    %cst_75 = arith.constant 9.99999974E-6 : f32
    %130 = vector.broadcast %cst_75 : f32 to vector<8x1xf32>
    %131 = arith.addf %129, %130 : vector<8x1xf32>
    %132 = math.rsqrt %131 : vector<8x1xf32>
    %133 = vector.broadcast %132 : vector<8x1xf32> to vector<8x128xf32>
    %134 = arith.mulf %124, %133 : vector<8x128xf32>
    %135 = vector.broadcast %110 : vector<1x128xf32> to vector<8x128xf32>
    %136 = arith.mulf %134, %135 : vector<8x128xf32>
    %137 = vector.broadcast %111 : vector<1x128xf32> to vector<8x128xf32>
    %138 = arith.addf %136, %137 : vector<8x128xf32>
    %c0_76 = arith.constant 0 : index
    %c0_77 = arith.constant 0 : index
    %c0_78 = arith.constant 0 : index
    %139 = vector.load %arg21[%c0_76, %c0_77, %c0_78] : memref<1x8x128xf32, #tpu.memory_space<vmem>>, vector<1x8x128xf32>
    %140 = vector.shape_cast %139 : vector<1x8x128xf32> to vector<8x128xf32>
    %141 = vector.shape_cast %138 : vector<8x128xf32> to vector<1x8x128xf32>
    tpu.vector_store %arg21[%c0_76, %c0_77, %c0_78], %141 {strides = array<i32>} : memref<1x8x128xf32, #tpu.memory_space<vmem>>, vector<1x8x128xf32>,
    return
  }
  func.func @transform_0(%arg0: i32, %arg1: i32) -> (i32, i32, i32) {
    %c0_i32 = arith.constant 0 : i32
    %c0_i32_0 = arith.constant 0 : i32
    return %arg0, %arg1, %c0_i32 : i32, i32, i32
  }
  func.func @transform_1(%arg0: i32, %arg1: i32) -> (i32, i32, i32) {
    %c0_i32 = arith.constant 0 : i32
    %c0_i32_0 = arith.constant 0 : i32
    %c0_i32_1 = arith.constant 0 : i32
    return %arg0, %c0_i32, %c0_i32_0 : i32, i32, i32
  }
  func.func @transform_2(%arg0: i32, %arg1: i32) -> (i32, i32, i32) {
    %c0_i32 = arith.constant 0 : i32
    %c0_i32_0 = arith.constant 0 : i32
    %c0_i32_1 = arith.constant 0 : i32
    return %arg0, %c0_i32, %c0_i32_0 : i32, i32, i32
  }
  func.func @transform_3(%arg0: i32, %arg1: i32) -> (i32, i32) {
    %c0_i32 = arith.constant 0 : i32
    %c0_i32_0 = arith.constant 0 : i32
    %c0_i32_1 = arith.constant 0 : i32
    return %c0_i32, %c0_i32_0 : i32, i32
  }
  func.func @transform_4(%arg0: i32, %arg1: i32) -> (i32, i32) {
    %c0_i32 = arith.constant 0 : i32
    %c0_i32_0 = arith.constant 0 : i32
    %c0_i32_1 = arith.constant 0 : i32
    return %c0_i32, %c0_i32_0 : i32, i32
  }
  func.func @transform_5(%arg0: i32, %arg1: i32) -> (i32, i32) {
    %c0_i32 = arith.constant 0 : i32
    %c0_i32_0 = arith.constant 0 : i32
    %c0_i32_1 = arith.constant 0 : i32
    return %c0_i32, %c0_i32_0 : i32, i32
  }
  func.func @transform_6(%arg0: i32, %arg1: i32) -> (i32, i32) {
    %c0_i32 = arith.constant 0 : i32
    %c0_i32_0 = arith.constant 0 : i32
    %c0_i32_1 = arith.constant 0 : i32
    return %c0_i32, %c0_i32_0 : i32, i32
  }
  func.func @transform_7(%arg0: i32, %arg1: i32) -> (i32, i32) {
    %c0_i32 = arith.constant 0 : i32
    %c0_i32_0 = arith.constant 0 : i32
    %c0_i32_1 = arith.constant 0 : i32
    return %c0_i32, %c0_i32_0 : i32, i32
  }
  func.func @transform_8(%arg0: i32, %arg1: i32) -> (i32, i32) {
    %c0_i32 = arith.constant 0 : i32
    %c0_i32_0 = arith.constant 0 : i32
    %c0_i32_1 = arith.constant 0 : i32
    return %c0_i32, %c0_i32_0 : i32, i32
  }
  func.func @transform_9(%arg0: i32, %arg1: i32) -> (i32, i32) {
    %c0_i32 = arith.constant 0 : i32
    %c0_i32_0 = arith.constant 0 : i32
    %c0_i32_1 = arith.constant 0 : i32
    return %c0_i32, %c0_i32_0 : i32, i32
  }
  func.func @transform_10(%arg0: i32, %arg1: i32) -> (i32, i32) {
    %c0_i32 = arith.constant 0 : i32
    %c0_i32_0 = arith.constant 0 : i32
    %c0_i32_1 = arith.constant 0 : i32
    return %c0_i32, %c0_i32_0 : i32, i32
  }
  func.func @transform_11(%arg0: i32, %arg1: i32) -> (i32, i32) {
    %c0_i32 = arith.constant 0 : i32
    %c0_i32_0 = arith.constant 0 : i32
    %c0_i32_1 = arith.constant 0 : i32
    return %c0_i32, %c0_i32_0 : i32, i32
  }
  func.func @transform_12(%arg0: i32, %arg1: i32) -> (i32, i32) {
    %c0_i32 = arith.constant 0 : i32
    %c0_i32_0 = arith.constant 0 : i32
    %c0_i32_1 = arith.constant 0 : i32
    return %c0_i32, %c0_i32_0 : i32, i32
  }
  func.func @transform_13(%arg0: i32, %arg1: i32) -> (i32, i32) {
    %c0_i32 = arith.constant 0 : i32
    %c0_i32_0 = arith.constant 0 : i32
    %c0_i32_1 = arith.constant 0 : i32
    return %c0_i32, %c0_i32_0 : i32, i32
  }
  func.func @transform_14(%arg0: i32, %arg1: i32) -> (i32, i32) {
    %c0_i32 = arith.constant 0 : i32
    %c0_i32_0 = arith.constant 0 : i32
    %c0_i32_1 = arith.constant 0 : i32
    return %c0_i32, %c0_i32_0 : i32, i32
  }
  func.func @transform_15(%arg0: i32, %arg1: i32) -> (i32, i32) {
    %c0_i32 = arith.constant 0 : i32
    %c0_i32_0 = arith.constant 0 : i32
    %c0_i32_1 = arith.constant 0 : i32
    return %c0_i32, %c0_i32_0 : i32, i32
  }
  func.func @transform_16(%arg0: i32, %arg1: i32) -> (i32, i32) {
    %c0_i32 = arith.constant 0 : i32
    %c0_i32_0 = arith.constant 0 : i32
    %c0_i32_1 = arith.constant 0 : i32
    return %c0_i32, %c0_i32_0 : i32, i32
  }
  func.func @transform_17(%arg0: i32, %arg1: i32) -> (i32, i32) {
    %c0_i32 = arith.constant 0 : i32
    %c0_i32_0 = arith.constant 0 : i32
    %c0_i32_1 = arith.constant 0 : i32
    return %c0_i32, %c0_i32_0 : i32, i32
  }
  func.func @transform_18(%arg0: i32, %arg1: i32) -> (i32, i32) {
    %c0_i32 = arith.constant 0 : i32
    %c0_i32_0 = arith.constant 0 : i32
    %c0_i32_1 = arith.constant 0 : i32
    return %c0_i32, %c0_i32_0 : i32, i32
  }
  func.func @transform_19(%arg0: i32, %arg1: i32) -> (i32, i32, i32) {
    %c0_i32 = arith.constant 0 : i32
    %c0_i32_0 = arith.constant 0 : i32
    return %arg0, %arg1, %c0_i32 : i32, i32, i32
  }
}

</mosaic_0001>

<llo_original>
// kernel: tpu_custom_call.1
$region0: #{tpu_custom_call.1}
  #allocation0 [shape = 'u32[]', space=smem, size = 0x4, offset = 0x4, fixed_abs, tag = 'smem constant byte address 0x4 - core index']
  #allocation1 [shape = 'u32[144,128]{1,0:T(1,128)}', space=vmem, size = 0x12000, scoped, tag = 'internal scratch']
  #allocation2 [shape = 'bf16[4,8,16]{2,1,0:T(8,128)(2,1)}', space=vmem, size = 0x2000, scoped, tag = 'scratch operand']
  #allocation3 [shape = 'bf16[4,8,16]{2,1,0:T(8,128)(2,1)}', space=vmem, size = 0x2000, scoped, tag = 'scratch operand']
  #allocation4 [shape = 'bf16[4,8,16]{2,1,0:T(8,128)(2,1)}', space=vmem, size = 0x2000, scoped, tag = 'scratch operand']
  #allocation5 [shape = 'bf16[8,64]{1,0:T(8,128)(2,1)}', space=vmem, size = 0x800, scoped, tag = 'scratch operand']
  %s0 = inlined_call_operand.hbm [shape: bf16[2,8,128], index: 0, kind: input, shape index: {}]
  %s1 = inlined_call_operand.hbm [shape: bf16[2,8,128], index: 1, kind: input, shape index: {}]
  %s2 = inlined_call_operand.hbm [shape: bf16[2,8,128], index: 2, kind: input, shape index: {}]
  %s3 = inlined_call_operand.hbm [shape: bf16[128,64], index: 3, kind: input, shape index: {}]
  %s4 = inlined_call_operand.hbm [shape: bf16[128,64], index: 4, kind: input, shape index: {}]
  %s5 = inlined_call_operand.hbm [shape: bf16[128,64], index: 5, kind: input, shape index: {}]
  %s6 = inlined_call_operand.hbm [shape: bf16[64,128], index: 6, kind: input, shape index: {}]
  %s7 = inlined_call_operand.hbm [shape: bf16[128,128], index: 7, kind: input, shape index: {}]
  %s8 = inlined_call_operand.hbm [shape: bf16[128,128], index: 8, kind: input, shape index: {}]
  %s9 = inlined_call_operand.hbm [shape: f32[1,64], index: 9, kind: input, shape index: {}]
  %s10 = inlined_call_operand.hbm [shape: f32[1,64], index: 10, kind: input, shape index: {}]
  %s11 = inlined_call_operand.hbm [shape: f32[1,64], index: 11, kind: input, shape index: {}]
  %s12 = inlined_call_operand.hbm [shape: f32[1,128], index: 12, kind: input, shape index: {}]
  %s13 = inlined_call_operand.hbm [shape: f32[1,128], index: 13, kind: input, shape index: {}]
  %s14 = inlined_call_operand.hbm [shape: f32[1,128], index: 14, kind: input, shape index: {}]
  %s15 = inlined_call_operand.hbm [shape: f32[1,128], index: 15, kind: input, shape index: {}]
  %s16 = inlined_call_operand.hbm [shape: f32[1,128], index: 16, kind: input, shape index: {}]
  %s17 = inlined_call_operand.hbm [shape: f32[1,128], index: 17, kind: input, shape index: {}]
  %s18 = inlined_call_operand.hbm [shape: f32[1,128], index: 18, kind: input, shape index: {}]
  %s19 = inlined_call_operand.hbm [shape: f32[2,8,128], index: 19, kind: output, shape index: {}]
  %s20 = sld [smem:[#allocation0]]
  $region189: #{tpu_custom_call.1} parent=0
    _
  %s22 = ssub.s32 1, %s20
  %s23 = scalar_select 0, %s22, %s20
  $region1: #{tpu_custom_call.1} parent=0
    #allocation6 [shape = 'u8[4096]{0}', space=vmem, size = 0x1000, scoped, tag = 'input window, operand 0']
    #allocation7 [shape = 's32[2]{0}', space=sflag, size = 0x8, scoped, tag = 'scoped memory for tpu_custom_call.1']
    #allocation8 [shape = 's32[2]{0}', space=sflag, size = 0x8, scoped, tag = 'scoped memory for tpu_custom_call.1']
    #allocation9 [shape = 'u8[4096]{0}', space=vmem, size = 0x1000, scoped, tag = 'input window, operand 1']
    #allocation10 [shape = 's32[2]{0}', space=sflag, size = 0x8, scoped, tag = 'scoped memory for tpu_custom_call.1']
    #allocation11 [shape = 'u8[4096]{0}', space=vmem, size = 0x1000, scoped, tag = 'input window, operand 2']
    #allocation12 [shape = 'u8[32768]{0}', space=vmem, size = 0x8000, scoped, tag = 'input window, operand 3, single buffered']
    #allocation13 [shape = 's32[1]{0}', space=sflag, size = 0x4, scoped, tag = 'scoped memory for tpu_custom_call.1']
    #allocation14 [shape = 'u8[32768]{0}', space=vmem, size = 0x8000, scoped, tag = 'input window, operand 4, single buffered']
    #allocation15 [shape = 'u8[32768]{0}', space=vmem, size = 0x8000, scoped, tag = 'input window, operand 5, single buffered']
    #allocation16 [shape = 's32[1]{0}', space=sflag, size = 0x4, scoped, tag = 'scoped memory for tpu_custom_call.1']
    #allocation17 [shape = 'u8[16384]{0}', space=vmem, size = 0x4000, scoped, tag = 'input window, operand 6, single buffered']
    #allocation18 [shape = 'u8[32768]{0}', space=vmem, size = 0x8000, scoped, tag = 'input window, operand 7, single buffered']
    #allocation19 [shape = 's32[1]{0}', space=sflag, size = 0x4, scoped, tag = 'scoped memory for tpu_custom_call.1']
    #allocation20 [shape = 'u8[32768]{0}', space=vmem, size = 0x8000, scoped, tag = 'input window, operand 8, single buffered']
    #allocation21 [shape = 'u8[512]{0}', space=vmem, size = 0x400, scoped, tag = 'input window, operand 9, single buffered']
    #allocation22 [shape = 's32[1]{0}', space=sflag, size = 0x4, scoped, tag = 'scoped memory for tpu_custom_call.1']
    #allocation23 [shape = 'u8[512]{0}', space=vmem, size = 0x400, scoped, tag = 'input window, operand 10, single buffered']
    #allocation24 [shape = 'u8[512]{0}', space=vmem, size = 0x400, scoped, tag = 'input window, operand 11, single buffered']
    #allocation25 [shape = 's32[1]{0}', space=sflag, size = 0x4, scoped, tag = 'scoped memory for tpu_custom_call.1']
    #allocation26 [shape = 'u8[512]{0}', space=vmem, size = 0x400, scoped, tag = 'input window, operand 12, single buffered']
    #allocation27 [shape = 'u8[512]{0}', space=vmem, size = 0x400, scoped, tag = 'input window, operand 13, single buffered']
    #allocation28 [shape = 's32[1]{0}', space=sflag, size = 0x4, scoped, tag = 'scoped memory for tpu_custom_call.1']
    #allocation29 [shape = 'u8[512]{0}', space=vmem, size = 0x400, scoped, tag = 'input window, operand 14, single buffered']
    #allocation30 [shape = 'u8[512]{0}', space=vmem, size = 0x400, scoped, tag = 'input window, operand 15, single buffered']
    #allocation31 [shape = 's32[1]{0}', space=sflag, size = 0x4, scoped, tag = 'scoped memory for tpu_custom_call.1']
    #allocation32 [shape = 'u8[512]{0}', space=vmem, size = 0x400, scoped, tag = 'input window, operand 16, single buffered']
    #allocation33 [shape = 'u8[512]{0}', space=vmem, size = 0x400, scoped, tag = 'input window, operand 17, single buffered']
    #allocation34 [shape = 's32[1]{0}', space=sflag, size = 0x4, scoped, tag = 'scoped memory for tpu_custom_call.1']
    #allocation35 [shape = 'u8[512]{0}', space=vmem, size = 0x400, scoped, tag = 'input window, operand 18, single buffered']
    #allocation36 [shape = 'u8[8192]{0}', space=vmem, size = 0x2000, scoped, tag = 'output window, operand 0']
    %24 = vsyncpa [#allocation7], 0
    %s25 = scalar_lea.sflag [#allocation7], 1
    %26 = vsyncpa %s25, 0
    %27 = vsyncpa [#allocation10], 0
    %s28 = scalar_lea.sflag [#allocation10], 1
    %29 = vsyncpa %s28, 0
    %30 = vsyncpa [#allocation13], 0
    %31 = vsyncpa [#allocation16], 0
    %32 = vsyncpa [#allocation19], 0
    %33 = vsyncpa [#allocation22], 0
    %34 = vsyncpa [#allocation25], 0
    %35 = vsyncpa [#allocation28], 0
    %36 = vsyncpa [#allocation31], 0
    %37 = vsyncpa [#allocation34], 0
    %38 = vsyncpa [#allocation8], 0
    %s39 = scalar_lea.sflag [#allocation8], 1
    %40 = vsyncpa %s39, 0
    loop: start=0, step=1, limit=4
    $region2: #{tpu_custom_call.1} parent=1 // loop_pre_header
      _
    $region3: #{tpu_custom_call.1} parent=1 // loop_header
      %s42 = sphi 0, %s46
      %p43 = scmp.ge.s32.totalorder %s42, 4
      %s49 = sphi 0, %s61
      %s50 = sphi 0, %s57
      %s51 = sphi 0, %s49
      %s52 = sphi 0, %s50
      %s53 = sphi 0, %s51
      %s54 = sphi 0, %s52
      %s66 = sphi 0, %s68
      %s69 = sphi 0, %s66
      %s70 = sphi 0, %s69
      %s86 = sphi 0, %s70
      %s92 = sphi 0, %s94
      %s95 = sphi 0, %s92
      %s96 = sphi 0, %s95
      %s112 = sphi 0, %s96
      %s118 = sphi 0, %s120
      %s121 = sphi 0, %s118
      %s122 = sphi 0, %s121
      %s138 = sphi 0, %s122
      %s142 = sphi 0, %s142
      %s144 = sphi 0, %s142
      %s145 = sphi 0, %s144
      %s159 = sphi 0, %s145
      %s163 = sphi 0, %s163
      %s165 = sphi 0, %s163
      %s166 = sphi 0, %s165
      %s180 = sphi 0, %s166
      %s184 = sphi 0, %s184
      %s186 = sphi 0, %s184
      %s187 = sphi 0, %s186
      %s201 = sphi 0, %s187
      %s205 = sphi 0, %s205
      %s207 = sphi 0, %s205
      %s208 = sphi 0, %s207
      %s222 = sphi 0, %s208
      %s226 = sphi 0, %s226
      %s228 = sphi 0, %s226
      %s229 = sphi 0, %s228
      %s243 = sphi 0, %s229
      %s247 = sphi 0, %s247
      %s249 = sphi 0, %s247
      %s250 = sphi 0, %s249
      %s264 = sphi 0, %s250
      %s268 = sphi 0, %s268
      %s270 = sphi 0, %s268
      %s271 = sphi 0, %s270
      %s285 = sphi 0, %s271
      %s289 = sphi 0, %s289
      %s291 = sphi 0, %s289
      %s292 = sphi 0, %s291
      %s306 = sphi 0, %s292
      %s310 = sphi 0, %s310
      %s312 = sphi 0, %s310
      %s313 = sphi 0, %s312
      %s327 = sphi 0, %s313
      %s331 = sphi 0, %s331
      %s333 = sphi 0, %s331
      %s334 = sphi 0, %s333
      %s348 = sphi 0, %s334
      %s352 = sphi 0, %s352
      %s354 = sphi 0, %s352
      %s355 = sphi 0, %s354
      %s369 = sphi 0, %s355
      %s373 = sphi 0, %s373
      %s375 = sphi 0, %s373
      %s376 = sphi 0, %s375
      %s390 = sphi 0, %s376
      %s394 = sphi 0, %s394
      %s396 = sphi 0, %s394
      %s397 = sphi 0, %s396
      %s411 = sphi 0, %s397
      %s415 = sphi 0, %s415
      %s417 = sphi 0, %s415
      %s418 = sphi 0, %s417
      %s432 = sphi 0, %s418
      %s436 = sphi 0, %s436
      %s438 = sphi 0, %s436
      %s439 = sphi 0, %s438
      %s453 = sphi 0, %s439
      %s457 = sphi 0, %s457
      %s459 = sphi 0, %s457
      %s460 = sphi 0, %s459
      %s474 = sphi 0, %s460
      %s482 = sphi 0, %s484
      %s485 = sphi 0, %s482
      %s486 = sphi 0, %s485
      %s502 = sphi 0, %s486
    $region4: #{tpu_custom_call.1} parent=1 // loop_header_branch
      %45 = sbr.rel (%p43) target = $region8
    $region5: #{tpu_custom_call.1} parent=1 // loop_body
      %s47 = ssub.s32 %s42, 1
      %s48 = ssub.s32 %s42, 2
      %s55 = sadd.s32 1, %s50
      %p56 = scmp.ge.s32.totalorder %s55, 1
      %s57 = scalar_select %p56, 0, %s55
      %s58 = sadd.s32 1, %s49
      %s59 = scalar_select %p56, %s58, %s49
      %p60 = scmp.ge.s32.totalorder %s59, 2
      %s61 = scalar_select %p60, 0, %s59
      %s62 = ssub.s32 %s49, %s61
      %s63 = ssub.s32 %s50, %s57
      %s64 = sor.u32 %s62, %s63
      %p65 = scmp.eq.s32.totalorder %s64, 0
      %s67 = sadd.s32 %s66, 1
      %s68 = scalar_select %p65, %s66, %s67
      %p71 = pneg %p65
      %p72 = scmp.eq.s32.totalorder %s42, 1
      %p73 = por %p71, %p72
      %p74 = scmp.ne.s32.totalorder %s66, %s69
      %p75 = scmp.eq.s32.totalorder %s42, 0
      %p76 = por %p74, %p75
      %p77 = scmp.ne.s32.totalorder %s66, %s69
      %p78 = scmp.eq.s32.totalorder %s47, 1
      %p79 = por %p77, %p78
      %p80 = scmp.ne.s32.totalorder %s69, %s70
      %p81 = scmp.eq.s32.totalorder %s47, 0
      %p82 = por %p80, %p81
      %p83 = scmp.ne.s32.totalorder %s69, %s70
      %p84 = scmp.eq.s32.totalorder %s48, 1
      %p85 = por %p83, %p84
      %p87 = scmp.ne.s32.totalorder %s70, %s86
      %p88 = scmp.eq.s32.totalorder %s48, 0
      %p89 = por %p87, %p88
      %s90 = ssub.s32 %s49, %s61
      %p91 = scmp.eq.s32.totalorder %s90, 0
      %s93 = sadd.s32 %s92, 1
      %s94 = scalar_select %p91, %s92, %s93
      %p97 = pneg %p91
      %p98 = scmp.eq.s32.totalorder %s42, 1
      %p99 = por %p97, %p98
      %p100 = scmp.ne.s32.totalorder %s92, %s95
      %p101 = scmp.eq.s32.totalorder %s42, 0
      %p102 = por %p100, %p101
      %p103 = scmp.ne.s32.totalorder %s92, %s95
      %p104 = scmp.eq.s32.totalorder %s47, 1
      %p105 = por %p103, %p104
      %p106 = scmp.ne.s32.totalorder %s95, %s96
      %p107 = scmp.eq.s32.totalorder %s47, 0
      %p108 = por %p106, %p107
      %p109 = scmp.ne.s32.totalorder %s95, %s96
      %p110 = scmp.eq.s32.totalorder %s48, 1
      %p111 = por %p109, %p110
      %p113 = scmp.ne.s32.totalorder %s96, %s112
      %p114 = scmp.eq.s32.totalorder %s48, 0
      %p115 = por %p113, %p114
      %s116 = ssub.s32 %s49, %s61
      %p117 = scmp.eq.s32.totalorder %s116, 0
      %s119 = sadd.s32 %s118, 1
      %s120 = scalar_select %p117, %s118, %s119
      %p123 = pneg %p117
      %p124 = scmp.eq.s32.totalorder %s42, 1
      %p125 = por %p123, %p124
      %p126 = scmp.ne.s32.totalorder %s118, %s121
      %p127 = scmp.eq.s32.totalorder %s42, 0
      %p128 = por %p126, %p127
      %p129 = scmp.ne.s32.totalorder %s118, %s121
      %p130 = scmp.eq.s32.totalorder %s47, 1
      %p131 = por %p129, %p130
      %p132 = scmp.ne.s32.totalorder %s121, %s122
      %p133 = scmp.eq.s32.totalorder %s47, 0
      %p134 = por %p132, %p133
      %p135 = scmp.ne.s32.totalorder %s121, %s122
      %p136 = scmp.eq.s32.totalorder %s48, 1
      %p137 = por %p135, %p136
      %p139 = scmp.ne.s32.totalorder %s122, %s138
      %p140 = scmp.eq.s32.totalorder %s48, 0
      %p141 = por %p139, %p140
      %s143 = sadd.s32 %s142, 1
      %p146 = scmp.eq.s32.totalorder %s42, 1
      %p147 = scmp.ne.s32.totalorder %s142, %s144
      %p148 = scmp.eq.s32.totalorder %s42, 0
      %p149 = por %p147, %p148
      %p150 = scmp.ne.s32.totalorder %s142, %s144
      %p151 = scmp.eq.s32.totalorder %s47, 1
      %p152 = por %p150, %p151
      %p153 = scmp.ne.s32.totalorder %s144, %s145
      %p154 = scmp.eq.s32.totalorder %s47, 0
      %p155 = por %p153, %p154
      %p156 = scmp.ne.s32.totalorder %s144, %s145
      %p157 = scmp.eq.s32.totalorder %s48, 1
      %p158 = por %p156, %p157
      %p160 = scmp.ne.s32.totalorder %s145, %s159
      %p161 = scmp.eq.s32.totalorder %s48, 0
      %p162 = por %p160, %p161
      %s164 = sadd.s32 %s163, 1
      %p167 = scmp.eq.s32.totalorder %s42, 1
      %p168 = scmp.ne.s32.totalorder %s163, %s165
      %p169 = scmp.eq.s32.totalorder %s42, 0
      %p170 = por %p168, %p169
      %p171 = scmp.ne.s32.totalorder %s163, %s165
      %p172 = scmp.eq.s32.totalorder %s47, 1
      %p173 = por %p171, %p172
      %p174 = scmp.ne.s32.totalorder %s165, %s166
      %p175 = scmp.eq.s32.totalorder %s47, 0
      %p176 = por %p174, %p175
      %p177 = scmp.ne.s32.totalorder %s165, %s166
      %p178 = scmp.eq.s32.totalorder %s48, 1
      %p179 = por %p177, %p178
      %p181 = scmp.ne.s32.totalorder %s166, %s180
      %p182 = scmp.eq.s32.totalorder %s48, 0
      %p183 = por %p181, %p182
      %s185 = sadd.s32 %s184, 1
      %p188 = scmp.eq.s32.totalorder %s42, 1
      %p189 = scmp.ne.s32.totalorder %s184, %s186
      %p190 = scmp.eq.s32.totalorder %s42, 0
      %p191 = por %p189, %p190
      %p192 = scmp.ne.s32.totalorder %s184, %s186
      %p193 = scmp.eq.s32.totalorder %s47, 1
      %p194 = por %p192, %p193
      %p195 = scmp.ne.s32.totalorder %s186, %s187
      %p196 = scmp.eq.s32.totalorder %s47, 0
      %p197 = por %p195, %p196
      %p198 = scmp.ne.s32.totalorder %s186, %s187
      %p199 = scmp.eq.s32.totalorder %s48, 1
      %p200 = por %p198, %p199
      %p202 = scmp.ne.s32.totalorder %s187, %s201
      %p203 = scmp.eq.s32.totalorder %s48, 0
      %p204 = por %p202, %p203
      %s206 = sadd.s32 %s205, 1
      %p209 = scmp.eq.s32.totalorder %s42, 1
      %p210 = scmp.ne.s32.totalorder %s205, %s207
      %p211 = scmp.eq.s32.totalorder %s42, 0
      %p212 = por %p210, %p211
      %p213 = scmp.ne.s32.totalorder %s205, %s207
      %p214 = scmp.eq.s32.totalorder %s47, 1
      %p215 = por %p213, %p214
      %p216 = scmp.ne.s32.totalorder %s207, %s208
      %p217 = scmp.eq.s32.totalorder %s47, 0
      %p218 = por %p216, %p217
      %p219 = scmp.ne.s32.totalorder %s207, %s208
      %p220 = scmp.eq.s32.totalorder %s48, 1
      %p221 = por %p219, %p220
      %p223 = scmp.ne.s32.totalorder %s208, %s222
      %p224 = scmp.eq.s32.totalorder %s48, 0
      %p225 = por %p223, %p224
      %s227 = sadd.s32 %s226, 1
      %p230 = scmp.eq.s32.totalorder %s42, 1
      %p231 = scmp.ne.s32.totalorder %s226, %s228
      %p232 = scmp.eq.s32.totalorder %s42, 0
      %p233 = por %p231, %p232
      %p234 = scmp.ne.s32.totalorder %s226, %s228
      %p235 = scmp.eq.s32.totalorder %s47, 1
      %p236 = por %p234, %p235
      %p237 = scmp.ne.s32.totalorder %s228, %s229
      %p238 = scmp.eq.s32.totalorder %s47, 0
      %p239 = por %p237, %p238
      %p240 = scmp.ne.s32.totalorder %s228, %s229
      %p241 = scmp.eq.s32.totalorder %s48, 1
      %p242 = por %p240, %p241
      %p244 = scmp.ne.s32.totalorder %s229, %s243
      %p245 = scmp.eq.s32.totalorder %s48, 0
      %p246 = por %p244, %p245
      %s248 = sadd.s32 %s247, 1
      %p251 = scmp.eq.s32.totalorder %s42, 1
      %p252 = scmp.ne.s32.totalorder %s247, %s249
      %p253 = scmp.eq.s32.totalorder %s42, 0
      %p254 = por %p252, %p253
      %p255 = scmp.ne.s32.totalorder %s247, %s249
      %p256 = scmp.eq.s32.totalorder %s47, 1
      %p257 = por %p255, %p256
      %p258 = scmp.ne.s32.totalorder %s249, %s250
      %p259 = scmp.eq.s32.totalorder %s47, 0
      %p260 = por %p258, %p259
      %p261 = scmp.ne.s32.totalorder %s249, %s250
      %p262 = scmp.eq.s32.totalorder %s48, 1
      %p263 = por %p261, %p262
      %p265 = scmp.ne.s32.totalorder %s250, %s264
      %p266 = scmp.eq.s32.totalorder %s48, 0
      %p267 = por %p265, %p266
      %s269 = sadd.s32 %s268, 1
      %p272 = scmp.eq.s32.totalorder %s42, 1
      %p273 = scmp.ne.s32.totalorder %s268, %s270
      %p274 = scmp.eq.s32.totalorder %s42, 0
      %p275 = por %p273, %p274
      %p276 = scmp.ne.s32.totalorder %s268, %s270
      %p277 = scmp.eq.s32.totalorder %s47, 1
      %p278 = por %p276, %p277
      %p279 = scmp.ne.s32.totalorder %s270, %s271
      %p280 = scmp.eq.s32.totalorder %s47, 0
      %p281 = por %p279, %p280
      %p282 = scmp.ne.s32.totalorder %s270, %s271
      %p283 = scmp.eq.s32.totalorder %s48, 1
      %p284 = por %p282, %p283
      %p286 = scmp.ne.s32.totalorder %s271, %s285
      %p287 = scmp.eq.s32.totalorder %s48, 0
      %p288 = por %p286, %p287
      %s290 = sadd.s32 %s289, 1
      %p293 = scmp.eq.s32.totalorder %s42, 1
      %p294 = scmp.ne.s32.totalorder %s289, %s291
      %p295 = scmp.eq.s32.totalorder %s42, 0
      %p296 = por %p294, %p295
      %p297 = scmp.ne.s32.totalorder %s289, %s291
      %p298 = scmp.eq.s32.totalorder %s47, 1
      %p299 = por %p297, %p298
      %p300 = scmp.ne.s32.totalorder %s291, %s292
      %p301 = scmp.eq.s32.totalorder %s47, 0
      %p302 = por %p300, %p301
      %p303 = scmp.ne.s32.totalorder %s291, %s292
      %p304 = scmp.eq.s32.totalorder %s48, 1
      %p305 = por %p303, %p304
      %p307 = scmp.ne.s32.totalorder %s292, %s306
      %p308 = scmp.eq.s32.totalorder %s48, 0
      %p309 = por %p307, %p308
      %s311 = sadd.s32 %s310, 1
      %p314 = scmp.eq.s32.totalorder %s42, 1
      %p315 = scmp.ne.s32.totalorder %s310, %s312
      %p316 = scmp.eq.s32.totalorder %s42, 0
      %p317 = por %p315, %p316
      %p318 = scmp.ne.s32.totalorder %s310, %s312
      %p319 = scmp.eq.s32.totalorder %s47, 1
      %p320 = por %p318, %p319
      %p321 = scmp.ne.s32.totalorder %s312, %s313
      %p322 = scmp.eq.s32.totalorder %s47, 0
      %p323 = por %p321, %p322
      %p324 = scmp.ne.s32.totalorder %s312, %s313
      %p325 = scmp.eq.s32.totalorder %s48, 1
      %p326 = por %p324, %p325
      %p328 = scmp.ne.s32.totalorder %s313, %s327
      %p329 = scmp.eq.s32.totalorder %s48, 0
      %p330 = por %p328, %p329
      %s332 = sadd.s32 %s331, 1
      %p335 = scmp.eq.s32.totalorder %s42, 1
      %p336 = scmp.ne.s32.totalorder %s331, %s333
      %p337 = scmp.eq.s32.totalorder %s42, 0
      %p338 = por %p336, %p337
      %p339 = scmp.ne.s32.totalorder %s331, %s333
      %p340 = scmp.eq.s32.totalorder %s47, 1
      %p341 = por %p339, %p340
      %p342 = scmp.ne.s32.totalorder %s333, %s334
      %p343 = scmp.eq.s32.totalorder %s47, 0
      %p344 = por %p342, %p343
      %p345 = scmp.ne.s32.totalorder %s333, %s334
      %p346 = scmp.eq.s32.totalorder %s48, 1
      %p347 = por %p345, %p346
      %p349 = scmp.ne.s32.totalorder %s334, %s348
      %p350 = scmp.eq.s32.totalorder %s48, 0
      %p351 = por %p349, %p350
      %s353 = sadd.s32 %s352, 1
      %p356 = scmp.eq.s32.totalorder %s42, 1
      %p357 = scmp.ne.s32.totalorder %s352, %s354
      %p358 = scmp.eq.s32.totalorder %s42, 0
      %p359 = por %p357, %p358
      %p360 = scmp.ne.s32.totalorder %s352, %s354
      %p361 = scmp.eq.s32.totalorder %s47, 1
      %p362 = por %p360, %p361
      %p363 = scmp.ne.s32.totalorder %s354, %s355
      %p364 = scmp.eq.s32.totalorder %s47, 0
      %p365 = por %p363, %p364
      %p366 = scmp.ne.s32.totalorder %s354, %s355
      %p367 = scmp.eq.s32.totalorder %s48, 1
      %p368 = por %p366, %p367
      %p370 = scmp.ne.s32.totalorder %s355, %s369
      %p371 = scmp.eq.s32.totalorder %s48, 0
      %p372 = por %p370, %p371
      %s374 = sadd.s32 %s373, 1
      %p377 = scmp.eq.s32.totalorder %s42, 1
      %p378 = scmp.ne.s32.totalorder %s373, %s375
      %p379 = scmp.eq.s32.totalorder %s42, 0
      %p380 = por %p378, %p379
      %p381 = scmp.ne.s32.totalorder %s373, %s375
      %p382 = scmp.eq.s32.totalorder %s47, 1
      %p383 = por %p381, %p382
      %p384 = scmp.ne.s32.totalorder %s375, %s376
      %p385 = scmp.eq.s32.totalorder %s47, 0
      %p386 = por %p384, %p385
      %p387 = scmp.ne.s32.totalorder %s375, %s376
      %p388 = scmp.eq.s32.totalorder %s48, 1
      %p389 = por %p387, %p388
      %p391 = scmp.ne.s32.totalorder %s376, %s390
      %p392 = scmp.eq.s32.totalorder %s48, 0
      %p393 = por %p391, %p392
      %s395 = sadd.s32 %s394, 1
      %p398 = scmp.eq.s32.totalorder %s42, 1
      %p399 = scmp.ne.s32.totalorder %s394, %s396
      %p400 = scmp.eq.s32.totalorder %s42, 0
      %p401 = por %p399, %p400
      %p402 = scmp.ne.s32.totalorder %s394, %s396
      %p403 = scmp.eq.s32.totalorder %s47, 1
      %p404 = por %p402, %p403
      %p405 = scmp.ne.s32.totalorder %s396, %s397
      %p406 = scmp.eq.s32.totalorder %s47, 0
      %p407 = por %p405, %p406
      %p408 = scmp.ne.s32.totalorder %s396, %s397
      %p409 = scmp.eq.s32.totalorder %s48, 1
      %p410 = por %p408, %p409
      %p412 = scmp.ne.s32.totalorder %s397, %s411
      %p413 = scmp.eq.s32.totalorder %s48, 0
      %p414 = por %p412, %p413
      %s416 = sadd.s32 %s415, 1
      %p419 = scmp.eq.s32.totalorder %s42, 1
      %p420 = scmp.ne.s32.totalorder %s415, %s417
      %p421 = scmp.eq.s32.totalorder %s42, 0
      %p422 = por %p420, %p421
      %p423 = scmp.ne.s32.totalorder %s415, %s417
      %p424 = scmp.eq.s32.totalorder %s47, 1
      %p425 = por %p423, %p424
      %p426 = scmp.ne.s32.totalorder %s417, %s418
      %p427 = scmp.eq.s32.totalorder %s47, 0
      %p428 = por %p426, %p427
      %p429 = scmp.ne.s32.totalorder %s417, %s418
      %p430 = scmp.eq.s32.totalorder %s48, 1
      %p431 = por %p429, %p430
      %p433 = scmp.ne.s32.totalorder %s418, %s432
      %p434 = scmp.eq.s32.totalorder %s48, 0
      %p435 = por %p433, %p434
      %s437 = sadd.s32 %s436, 1
      %p440 = scmp.eq.s32.totalorder %s42, 1
      %p441 = scmp.ne.s32.totalorder %s436, %s438
      %p442 = scmp.eq.s32.totalorder %s42, 0
      %p443 = por %p441, %p442
      %p444 = scmp.ne.s32.totalorder %s436, %s438
      %p445 = scmp.eq.s32.totalorder %s47, 1
      %p446 = por %p444, %p445
      %p447 = scmp.ne.s32.totalorder %s438, %s439
      %p448 = scmp.eq.s32.totalorder %s47, 0
      %p449 = por %p447, %p448
      %p450 = scmp.ne.s32.totalorder %s438, %s439
      %p451 = scmp.eq.s32.totalorder %s48, 1
      %p452 = por %p450, %p451
      %p454 = scmp.ne.s32.totalorder %s439, %s453
      %p455 = scmp.eq.s32.totalorder %s48, 0
      %p456 = por %p454, %p455
      %s458 = sadd.s32 %s457, 1
      %p461 = scmp.eq.s32.totalorder %s42, 1
      %p462 = scmp.ne.s32.totalorder %s457, %s459
      %p463 = scmp.eq.s32.totalorder %s42, 0
      %p464 = por %p462, %p463
      %p465 = scmp.ne.s32.totalorder %s457, %s459
      %p466 = scmp.eq.s32.totalorder %s47, 1
      %p467 = por %p465, %p466
      %p468 = scmp.ne.s32.totalorder %s459, %s460
      %p469 = scmp.eq.s32.totalorder %s47, 0
      %p470 = por %p468, %p469
      %p471 = scmp.ne.s32.totalorder %s459, %s460
      %p472 = scmp.eq.s32.totalorder %s48, 1
      %p473 = por %p471, %p472
      %p475 = scmp.ne.s32.totalorder %s460, %s474
      %p476 = scmp.eq.s32.totalorder %s48, 0
      %p477 = por %p475, %p476
      %s478 = ssub.s32 %s49, %s61
      %s479 = ssub.s32 %s50, %s57
      %s480 = sor.u32 %s478, %s479
      %p481 = scmp.eq.s32.totalorder %s480, 0
      %s483 = sadd.s32 %s482, 1
      %s484 = scalar_select %p481, %s482, %s483
      %p487 = pneg %p481
      %p488 = scmp.eq.s32.totalorder %s42, 1
      %p489 = por %p487, %p488
      %p490 = scmp.ne.s32.totalorder %s482, %s485
      %p491 = scmp.eq.s32.totalorder %s42, 0
      %p492 = por %p490, %p491
      %p493 = scmp.ne.s32.totalorder %s482, %s485
      %p494 = scmp.eq.s32.totalorder %s47, 1
      %p495 = por %p493, %p494
      %p496 = scmp.ne.s32.totalorder %s485, %s486
      %p497 = scmp.eq.s32.totalorder %s47, 0
      %p498 = por %p496, %p497
      %p499 = scmp.ne.s32.totalorder %s485, %s486
      %p500 = scmp.eq.s32.totalorder %s48, 1
      %p501 = por %p499, %p500
      %p503 = scmp.ne.s32.totalorder %s486, %s502
      %p504 = scmp.eq.s32.totalorder %s48, 0
      %p505 = por %p503, %p504
      %p506 = scmp.le.s32.totalorder 1, %s42
      %p507 = scmp.lt.s32.totalorder %s42, 3
      %p508 = pnand %p506, %p507
      %p509 = pneg %p508
      // Predicated region
      $region9: #{tpu_custom_call.1} parent=5 // pred_check
        _
      $region10: #{tpu_custom_call.1} parent=5 // pred_check_branch
        %511 = sbr.rel (%p508) target = $region12
      $region11: #{tpu_custom_call.1} parent=5 // pred_region
        %s512 = ssub.s32 %s42, 1
        // Predicated region
        $region13: #{tpu_custom_call.1} parent=11 // pred_check
          %p513 = pneg %p155
        $region14: #{tpu_custom_call.1} parent=11 // pred_check_branch
          %515 = sbr.rel (%p513) target = $region16
        $region15: #{tpu_custom_call.1} parent=11 // pred_region
          %s517 = ssub.s32 1024, 1024
          %518 = vsyncadd [#allocation13], %s517
          %s519 = sshll.u32 [#allocation12], 4
          %s520 = int_to_ptr.vmem [resolvable:$true] %s519
          %525 = dma.hbm_to_vmem [thread:$0]  %s3, 1024, %s520, [#allocation13], 64, 64, 4
        $region16: #{tpu_custom_call.1} parent=11 // pred_fallthru
          _
        // Predicated region
        $region17: #{tpu_custom_call.1} parent=11 // pred_check
          %p526 = pneg %p176
        $region18: #{tpu_custom_call.1} parent=11 // pred_check_branch
          %528 = sbr.rel (%p526) target = $region20
        $region19: #{tpu_custom_call.1} parent=11 // pred_region
          %s530 = ssub.s32 1024, 1024
          %531 = vsyncadd [#allocation13], %s530
          %s532 = sshll.u32 [#allocation14], 4
          %s533 = int_to_ptr.vmem [resolvable:$true] %s532
          %538 = dma.hbm_to_vmem [thread:$0]  %s4, 1024, %s533, [#allocation13], 64, 64, 4
        $region20: #{tpu_custom_call.1} parent=11 // pred_fallthru
          _
        // Predicated region
        $region21: #{tpu_custom_call.1} parent=11 // pred_check
          %p539 = pneg %p197
        $region22: #{tpu_custom_call.1} parent=11 // pred_check_branch
          %541 = sbr.rel (%p539) target = $region24
        $region23: #{tpu_custom_call.1} parent=11 // pred_region
          %s543 = ssub.s32 1024, 1024
          %544 = vsyncadd [#allocation16], %s543
          %s545 = sshll.u32 [#allocation15], 4
          %s546 = int_to_ptr.vmem [resolvable:$true] %s545
          %551 = dma.hbm_to_vmem [thread:$0]  %s5, 1024, %s546, [#allocation16], 64, 64, 4
        $region24: #{tpu_custom_call.1} parent=11 // pred_fallthru
          _
        // Predicated region
        $region25: #{tpu_custom_call.1} parent=11 // pred_check
          %p552 = pneg %p218
        $region26: #{tpu_custom_call.1} parent=11 // pred_check_branch
          %554 = sbr.rel (%p552) target = $region28
        $region27: #{tpu_custom_call.1} parent=11 // pred_region
          %s556 = ssub.s32 512, 512
          %557 = vsyncadd [#allocation16], %s556
          %s558 = sshll.u32 [#allocation17], 4
          %s559 = int_to_ptr.vmem [resolvable:$true] %s558
          %564 = dma.hbm_to_vmem [thread:$0]  %s6, 512, %s559, [#allocation16], 64, 64, 4
        $region28: #{tpu_custom_call.1} parent=11 // pred_fallthru
          _
        // Predicated region
        $region29: #{tpu_custom_call.1} parent=11 // pred_check
          %p565 = pneg %p239
        $region30: #{tpu_custom_call.1} parent=11 // pred_check_branch
          %567 = sbr.rel (%p565) target = $region32
        $region31: #{tpu_custom_call.1} parent=11 // pred_region
          %s569 = ssub.s32 1024, 1024
          %570 = vsyncadd [#allocation19], %s569
          %s571 = sshll.u32 [#allocation18], 4
          %s572 = int_to_ptr.vmem [resolvable:$true] %s571
          %577 = dma.hbm_to_vmem [thread:$0]  %s7, 1024, %s572, [#allocation19], 64, 64, 4
        $region32: #{tpu_custom_call.1} parent=11 // pred_fallthru
          _
        // Predicated region
        $region33: #{tpu_custom_call.1} parent=11 // pred_check
          %p578 = pneg %p260
        $region34: #{tpu_custom_call.1} parent=11 // pred_check_branch
          %580 = sbr.rel (%p578) target = $region36
        $region35: #{tpu_custom_call.1} parent=11 // pred_region
          %s582 = ssub.s32 1024, 1024
          %583 = vsyncadd [#allocation19], %s582
          %s584 = sshll.u32 [#allocation20], 4
          %s585 = int_to_ptr.vmem [resolvable:$true] %s584
          %590 = dma.hbm_to_vmem [thread:$0]  %s8, 1024, %s585, [#allocation19], 64, 64, 4
        $region36: #{tpu_custom_call.1} parent=11 // pred_fallthru
          _
        // Predicated region
        $region37: #{tpu_custom_call.1} parent=11 // pred_check
          %p591 = pneg %p281
        $region38: #{tpu_custom_call.1} parent=11 // pred_check_branch
          %593 = sbr.rel (%p591) target = $region40
        $region39: #{tpu_custom_call.1} parent=11 // pred_region
          %s595 = ssub.s32 16, 16
          %596 = vsyncadd [#allocation22], %s595
          %s598 = sshll.u32 [#allocation21], 4
          %s599 = int_to_ptr.vmem [resolvable:$true] %s598
          %601 = dma.hbm_to_vmem [thread:$0]  %s9, 16, %s599, [#allocation22]
        $region40: #{tpu_custom_call.1} parent=11 // pred_fallthru
          _
        // Predicated region
        $region41: #{tpu_custom_call.1} parent=11 // pred_check
          %p602 = pneg %p302
        $region42: #{tpu_custom_call.1} parent=11 // pred_check_branch
          %604 = sbr.rel (%p602) target = $region44
        $region43: #{tpu_custom_call.1} parent=11 // pred_region
          %s606 = ssub.s32 16, 16
          %607 = vsyncadd [#allocation22], %s606
          %s609 = sshll.u32 [#allocation23], 4
          %s610 = int_to_ptr.vmem [resolvable:$true] %s609
          %612 = dma.hbm_to_vmem [thread:$0]  %s10, 16, %s610, [#allocation22]
        $region44: #{tpu_custom_call.1} parent=11 // pred_fallthru
          _
        // Predicated region
        $region45: #{tpu_custom_call.1} parent=11 // pred_check
          %p613 = pneg %p323
        $region46: #{tpu_custom_call.1} parent=11 // pred_check_branch
          %615 = sbr.rel (%p613) target = $region48
        $region47: #{tpu_custom_call.1} parent=11 // pred_region
          %s617 = ssub.s32 16, 16
          %618 = vsyncadd [#allocation25], %s617
          %s620 = sshll.u32 [#allocation24], 4
          %s621 = int_to_ptr.vmem [resolvable:$true] %s620
          %623 = dma.hbm_to_vmem [thread:$0]  %s11, 16, %s621, [#allocation25]
        $region48: #{tpu_custom_call.1} parent=11 // pred_fallthru
          _
        // Predicated region
        $region49: #{tpu_custom_call.1} parent=11 // pred_check
          %p624 = pneg %p344
        $region50: #{tpu_custom_call.1} parent=11 // pred_check_branch
          %626 = sbr.rel (%p624) target = $region52
        $region51: #{tpu_custom_call.1} parent=11 // pred_region
          %s628 = ssub.s32 16, 16
          %629 = vsyncadd [#allocation25], %s628
          %s631 = sshll.u32 [#allocation26], 4
          %s632 = int_to_ptr.vmem [resolvable:$true] %s631
          %634 = dma.hbm_to_vmem [thread:$0]  %s12, 16, %s632, [#allocation25]
        $region52: #{tpu_custom_call.1} parent=11 // pred_fallthru
          _
        // Predicated region
        $region53: #{tpu_custom_call.1} parent=11 // pred_check
          %p635 = pneg %p365
        $region54: #{tpu_custom_call.1} parent=11 // pred_check_branch
          %637 = sbr.rel (%p635) target = $region56
        $region55: #{tpu_custom_call.1} parent=11 // pred_region
          %s639 = ssub.s32 16, 16
          %640 = vsyncadd [#allocation28], %s639
          %s642 = sshll.u32 [#allocation27], 4
          %s643 = int_to_ptr.vmem [resolvable:$true] %s642
          %645 = dma.hbm_to_vmem [thread:$0]  %s13, 16, %s643, [#allocation28]
        $region56: #{tpu_custom_call.1} parent=11 // pred_fallthru
          _
        // Predicated region
        $region57: #{tpu_custom_call.1} parent=11 // pred_check
          %p646 = pneg %p386
        $region58: #{tpu_custom_call.1} parent=11 // pred_check_branch
          %648 = sbr.rel (%p646) target = $region60
        $region59: #{tpu_custom_call.1} parent=11 // pred_region
          %s650 = ssub.s32 16, 16
          %651 = vsyncadd [#allocation28], %s650
          %s653 = sshll.u32 [#allocation29], 4
          %s654 = int_to_ptr.vmem [resolvable:$true] %s653
          %656 = dma.hbm_to_vmem [thread:$0]  %s14, 16, %s654, [#allocation28]
        $region60: #{tpu_custom_call.1} parent=11 // pred_fallthru
          _
        // Predicated region
        $region61: #{tpu_custom_call.1} parent=11 // pred_check
          %p657 = pneg %p407
        $region62: #{tpu_custom_call.1} parent=11 // pred_check_branch
          %659 = sbr.rel (%p657) target = $region64
        $region63: #{tpu_custom_call.1} parent=11 // pred_region
          %s661 = ssub.s32 16, 16
          %662 = vsyncadd [#allocation31], %s661
          %s664 = sshll.u32 [#allocation30], 4
          %s665 = int_to_ptr.vmem [resolvable:$true] %s664
          %667 = dma.hbm_to_vmem [thread:$0]  %s15, 16, %s665, [#allocation31]
        $region64: #{tpu_custom_call.1} parent=11 // pred_fallthru
          _
        // Predicated region
        $region65: #{tpu_custom_call.1} parent=11 // pred_check
          %p668 = pneg %p428
        $region66: #{tpu_custom_call.1} parent=11 // pred_check_branch
          %670 = sbr.rel (%p668) target = $region68
        $region67: #{tpu_custom_call.1} parent=11 // pred_region
          %s672 = ssub.s32 16, 16
          %673 = vsyncadd [#allocation31], %s672
          %s675 = sshll.u32 [#allocation32], 4
          %s676 = int_to_ptr.vmem [resolvable:$true] %s675
          %678 = dma.hbm_to_vmem [thread:$0]  %s16, 16, %s676, [#allocation31]
        $region68: #{tpu_custom_call.1} parent=11 // pred_fallthru
          _
        // Predicated region
        $region69: #{tpu_custom_call.1} parent=11 // pred_check
          %p679 = pneg %p449
        $region70: #{tpu_custom_call.1} parent=11 // pred_check_branch
          %681 = sbr.rel (%p679) target = $region72
        $region71: #{tpu_custom_call.1} parent=11 // pred_region
          %s683 = ssub.s32 16, 16
          %684 = vsyncadd [#allocation34], %s683
          %s686 = sshll.u32 [#allocation33], 4
          %s687 = int_to_ptr.vmem [resolvable:$true] %s686
          %689 = dma.hbm_to_vmem [thread:$0]  %s17, 16, %s687, [#allocation34]
        $region72: #{tpu_custom_call.1} parent=11 // pred_fallthru
          _
        // Predicated region
        $region73: #{tpu_custom_call.1} parent=11 // pred_check
          %p690 = pneg %p470
        $region74: #{tpu_custom_call.1} parent=11 // pred_check_branch
          %692 = sbr.rel (%p690) target = $region76
        $region75: #{tpu_custom_call.1} parent=11 // pred_region
          %s694 = ssub.s32 16, 16
          %695 = vsyncadd [#allocation34], %s694
          %s697 = sshll.u32 [#allocation35], 4
          %s698 = int_to_ptr.vmem [resolvable:$true] %s697
          %700 = dma.hbm_to_vmem [thread:$0]  %s18, 16, %s698, [#allocation34]
        $region76: #{tpu_custom_call.1} parent=11 // pred_fallthru
          _
      $region12: #{tpu_custom_call.1} parent=5 // pred_fallthru
        _
      %p701 = scmp.lt.s32.totalorder %s42, 2
      // Predicated region
      $region77: #{tpu_custom_call.1} parent=5 // pred_check
        %p702 = pneg %p701
      $region78: #{tpu_custom_call.1} parent=5 // pred_check_branch
        %704 = sbr.rel (%p702) target = $region80
      $region79: #{tpu_custom_call.1} parent=5 // pred_region
        // Predicated region
        $region81: #{tpu_custom_call.1} parent=79 // pred_check
          %p705 = pneg %p76
        $region82: #{tpu_custom_call.1} parent=79 // pred_check_branch
          %707 = sbr.rel (%p705) target = $region84
        $region83: #{tpu_custom_call.1} parent=79 // pred_region
          %s708 = sand.u32 %s66, 1
          %s709 = scalar_lea.sflag [#allocation7], %s708
          %s710 = sand.u32 %s66, 1
          %s711 = smul.addr %s710, 4
          %s712 = scalar_lea.vmem [#allocation6], %s711
          %s714 = ssub.s32 64, 64
          %715 = vsyncadd %s709, %s714
          %s716 = sadd.s32 %s50, %s49
          %s717 = smul.addr %s716, 64
          %s718 = scalar_lea.hbm %s0, %s717
          %s720 = sshll.u32 %s712, 4
          %s721 = int_to_ptr.vmem [resolvable:$true] %s720
          %723 = dma.hbm_to_vmem [thread:$0]  %s718, 64, %s721, %s709
        $region84: #{tpu_custom_call.1} parent=79 // pred_fallthru
          _
        // Predicated region
        $region85: #{tpu_custom_call.1} parent=79 // pred_check
          %p724 = pneg %p102
        $region86: #{tpu_custom_call.1} parent=79 // pred_check_branch
          %726 = sbr.rel (%p724) target = $region88
        $region87: #{tpu_custom_call.1} parent=79 // pred_region
          %s727 = sand.u32 %s42, 1
          %s728 = scalar_lea.sflag [#allocation10], %s727
          %s729 = sand.u32 %s92, 1
          %s730 = smul.addr %s729, 4
          %s731 = scalar_lea.vmem [#allocation9], %s730
          %s733 = ssub.s32 64, 64
          %734 = vsyncadd %s728, %s733
          %s735 = smul.addr %s49, 64
          %s736 = scalar_lea.hbm %s1, %s735
          %s738 = sshll.u32 %s731, 4
          %s739 = int_to_ptr.vmem [resolvable:$true] %s738
          %741 = dma.hbm_to_vmem [thread:$0]  %s736, 64, %s739, %s728
        $region88: #{tpu_custom_call.1} parent=79 // pred_fallthru
          _
        // Predicated region
        $region89: #{tpu_custom_call.1} parent=79 // pred_check
          %p742 = pneg %p128
        $region90: #{tpu_custom_call.1} parent=79 // pred_check_branch
          %744 = sbr.rel (%p742) target = $region92
        $region91: #{tpu_custom_call.1} parent=79 // pred_region
          %s745 = sand.u32 %s42, 1
          %s746 = scalar_lea.sflag [#allocation10], %s745
          %s747 = sand.u32 %s118, 1
          %s748 = smul.addr %s747, 4
          %s749 = scalar_lea.vmem [#allocation11], %s748
          %s751 = ssub.s32 64, 64
          %752 = vsyncadd %s746, %s751
          %s753 = smul.addr %s49, 64
          %s754 = scalar_lea.hbm %s2, %s753
          %s756 = sshll.u32 %s749, 4
          %s757 = int_to_ptr.vmem [resolvable:$true] %s756
          %759 = dma.hbm_to_vmem [thread:$0]  %s754, 64, %s757, %s746
        $region92: #{tpu_custom_call.1} parent=79 // pred_fallthru
          _
      $region80: #{tpu_custom_call.1} parent=5 // pred_fallthru
        _
      %p760 = scmp.le.s32.totalorder 1, %s42
      %p761 = scmp.lt.s32.totalorder %s42, 3
      %p762 = pnand %p760, %p761
      %p763 = pneg %p762
      // Predicated region
      $region93: #{tpu_custom_call.1} parent=5 // pred_check
        _
      $region94: #{tpu_custom_call.1} parent=5 // pred_check_branch
        %765 = sbr.rel (%p762) target = $region96
      $region95: #{tpu_custom_call.1} parent=5 // pred_region
        %s766 = ssub.s32 %s42, 1
        %s767 = sand.u32 %s69, 1
        %s768 = scalar_lea.sflag [#allocation7], %s767
        %s769 = sand.u32 %s69, 1
        %s770 = smul.addr %s769, 4
        %s771 = scalar_lea.vmem [#allocation6], %s770
        // Predicated region
        $region97: #{tpu_custom_call.1} parent=95 // pred_check
          %p772 = pneg %p82
        $region98: #{tpu_custom_call.1} parent=95 // pred_check_branch
          %774 = sbr.rel (%p772) target = $region100
        $region99: #{tpu_custom_call.1} parent=95 // pred_region
          %775 = dma.done %s768, 64
        $region100: #{tpu_custom_call.1} parent=95 // pred_fallthru
          _
        %s776 = sand.u32 %s47, 1
        %s777 = scalar_lea.sflag [#allocation10], %s776
        %s778 = sand.u32 %s95, 1
        %s779 = smul.addr %s778, 4
        %s780 = scalar_lea.vmem [#allocation9], %s779
        // Predicated region
        $region101: #{tpu_custom_call.1} parent=95 // pred_check
          %p781 = pneg %p108
        $region102: #{tpu_custom_call.1} parent=95 // pred_check_branch
          %783 = sbr.rel (%p781) target = $region104
        $region103: #{tpu_custom_call.1} parent=95 // pred_region
          %784 = dma.done %s777, 64
        $region104: #{tpu_custom_call.1} parent=95 // pred_fallthru
          _
        %s785 = sand.u32 %s47, 1
        %s786 = scalar_lea.sflag [#allocation10], %s785
        %s787 = sand.u32 %s121, 1
        %s788 = smul.addr %s787, 4
        %s789 = scalar_lea.vmem [#allocation11], %s788
        // Predicated region
        $region105: #{tpu_custom_call.1} parent=95 // pred_check
          %p790 = pneg %p134
        $region106: #{tpu_custom_call.1} parent=95 // pred_check_branch
          %792 = sbr.rel (%p790) target = $region108
        $region107: #{tpu_custom_call.1} parent=95 // pred_region
          %793 = dma.done %s786, 64
        $region108: #{tpu_custom_call.1} parent=95 // pred_fallthru
          _
        // Predicated region
        $region109: #{tpu_custom_call.1} parent=95 // pred_check
          %p794 = pneg %p155
        $region110: #{tpu_custom_call.1} parent=95 // pred_check_branch
          %796 = sbr.rel (%p794) target = $region112
        $region111: #{tpu_custom_call.1} parent=95 // pred_region
          %797 = dma.done [#allocation13], 1024
        $region112: #{tpu_custom_call.1} parent=95 // pred_fallthru
          _
        // Predicated region
        $region113: #{tpu_custom_call.1} parent=95 // pred_check
          %p798 = pneg %p176
        $region114: #{tpu_custom_call.1} parent=95 // pred_check_branch
          %800 = sbr.rel (%p798) target = $region116
        $region115: #{tpu_custom_call.1} parent=95 // pred_region
          %801 = dma.done [#allocation13], 1024
        $region116: #{tpu_custom_call.1} parent=95 // pred_fallthru
          _
        // Predicated region
        $region117: #{tpu_custom_call.1} parent=95 // pred_check
          %p802 = pneg %p197
        $region118: #{tpu_custom_call.1} parent=95 // pred_check_branch
          %804 = sbr.rel (%p802) target = $region120
        $region119: #{tpu_custom_call.1} parent=95 // pred_region
          %805 = dma.done [#allocation16], 1024
        $region120: #{tpu_custom_call.1} parent=95 // pred_fallthru
          _
        // Predicated region
        $region121: #{tpu_custom_call.1} parent=95 // pred_check
          %p806 = pneg %p218
        $region122: #{tpu_custom_call.1} parent=95 // pred_check_branch
          %808 = sbr.rel (%p806) target = $region124
        $region123: #{tpu_custom_call.1} parent=95 // pred_region
          %809 = dma.done [#allocation16], 512
        $region124: #{tpu_custom_call.1} parent=95 // pred_fallthru
          _
        // Predicated region
        $region125: #{tpu_custom_call.1} parent=95 // pred_check
          %p810 = pneg %p239
        $region126: #{tpu_custom_call.1} parent=95 // pred_check_branch
          %812 = sbr.rel (%p810) target = $region128
        $region127: #{tpu_custom_call.1} parent=95 // pred_region
          %813 = dma.done [#allocation19], 1024
        $region128: #{tpu_custom_call.1} parent=95 // pred_fallthru
          _
        // Predicated region
        $region129: #{tpu_custom_call.1} parent=95 // pred_check
          %p814 = pneg %p260
        $region130: #{tpu_custom_call.1} parent=95 // pred_check_branch
          %816 = sbr.rel (%p814) target = $region132
        $region131: #{tpu_custom_call.1} parent=95 // pred_region
          %817 = dma.done [#allocation19], 1024
        $region132: #{tpu_custom_call.1} parent=95 // pred_fallthru
          _
        // Predicated region
        $region133: #{tpu_custom_call.1} parent=95 // pred_check
          %p818 = pneg %p281
        $region134: #{tpu_custom_call.1} parent=95 // pred_check_branch
          %820 = sbr.rel (%p818) target = $region136
        $region135: #{tpu_custom_call.1} parent=95 // pred_region
          %821 = dma.done [#allocation22], 16
        $region136: #{tpu_custom_call.1} parent=95 // pred_fallthru
          _
        // Predicated region
        $region137: #{tpu_custom_call.1} parent=95 // pred_check
          %p822 = pneg %p302
        $region138: #{tpu_custom_call.1} parent=95 // pred_check_branch
          %824 = sbr.rel (%p822) target = $region140
        $region139: #{tpu_custom_call.1} parent=95 // pred_region
          %825 = dma.done [#allocation22], 16
        $region140: #{tpu_custom_call.1} parent=95 // pred_fallthru
          _
        // Predicated region
        $region141: #{tpu_custom_call.1} parent=95 // pred_check
          %p826 = pneg %p323
        $region142: #{tpu_custom_call.1} parent=95 // pred_check_branch
          %828 = sbr.rel (%p826) target = $region144
        $region143: #{tpu_custom_call.1} parent=95 // pred_region
          %829 = dma.done [#allocation25], 16
        $region144: #{tpu_custom_call.1} parent=95 // pred_fallthru
          _
        // Predicated region
        $region145: #{tpu_custom_call.1} parent=95 // pred_check
          %p830 = pneg %p344
        $region146: #{tpu_custom_call.1} parent=95 // pred_check_branch
          %832 = sbr.rel (%p830) target = $region148
        $region147: #{tpu_custom_call.1} parent=95 // pred_region
          %833 = dma.done [#allocation25], 16
        $region148: #{tpu_custom_call.1} parent=95 // pred_fallthru
          _
        // Predicated region
        $region149: #{tpu_custom_call.1} parent=95 // pred_check
          %p834 = pneg %p365
        $region150: #{tpu_custom_call.1} parent=95 // pred_check_branch
          %836 = sbr.rel (%p834) target = $region152
        $region151: #{tpu_custom_call.1} parent=95 // pred_region
          %837 = dma.done [#allocation28], 16
        $region152: #{tpu_custom_call.1} parent=95 // pred_fallthru
          _
        // Predicated region
        $region153: #{tpu_custom_call.1} parent=95 // pred_check
          %p838 = pneg %p386
        $region154: #{tpu_custom_call.1} parent=95 // pred_check_branch
          %840 = sbr.rel (%p838) target = $region156
        $region155: #{tpu_custom_call.1} parent=95 // pred_region
          %841 = dma.done [#allocation28], 16
        $region156: #{tpu_custom_call.1} parent=95 // pred_fallthru
          _
        // Predicated region
        $region157: #{tpu_custom_call.1} parent=95 // pred_check
          %p842 = pneg %p407
        $region158: #{tpu_custom_call.1} parent=95 // pred_check_branch
          %844 = sbr.rel (%p842) target = $region160
        $region159: #{tpu_custom_call.1} parent=95 // pred_region
          %845 = dma.done [#allocation31], 16
        $region160: #{tpu_custom_call.1} parent=95 // pred_fallthru
          _
        // Predicated region
        $region161: #{tpu_custom_call.1} parent=95 // pred_check
          %p846 = pneg %p428
        $region162: #{tpu_custom_call.1} parent=95 // pred_check_branch
          %848 = sbr.rel (%p846) target = $region164
        $region163: #{tpu_custom_call.1} parent=95 // pred_region
          %849 = dma.done [#allocation31], 16
        $region164: #{tpu_custom_call.1} parent=95 // pred_fallthru
          _
        // Predicated region
        $region165: #{tpu_custom_call.1} parent=95 // pred_check
          %p850 = pneg %p449
        $region166: #{tpu_custom_call.1} parent=95 // pred_check_branch
          %852 = sbr.rel (%p850) target = $region168
        $region167: #{tpu_custom_call.1} parent=95 // pred_region
          %853 = dma.done [#allocation34], 16
        $region168: #{tpu_custom_call.1} parent=95 // pred_fallthru
          _
        // Predicated region
        $region169: #{tpu_custom_call.1} parent=95 // pred_check
          %p854 = pneg %p470
        $region170: #{tpu_custom_call.1} parent=95 // pred_check_branch
          %856 = sbr.rel (%p854) target = $region172
        $region171: #{tpu_custom_call.1} parent=95 // pred_region
          %857 = dma.done [#allocation34], 16
        $region172: #{tpu_custom_call.1} parent=95 // pred_fallthru
          _
        %s858 = sand.u32 %s69, 1
        %s859 = scalar_lea.sflag [#allocation7], %s858
        %s860 = sand.u32 %s69, 1
        %s861 = smul.addr %s860, 4
        %s862 = scalar_lea.vmem [#allocation6], %s861
        %p863 = pneg %p82
        %p864 = pneg %p79
        %s865 = sand.u32 %s47, 1
        %s866 = scalar_lea.sflag [#allocation10], %s865
        %s867 = sand.u32 %s95, 1
        %s868 = smul.addr %s867, 4
        %s869 = scalar_lea.vmem [#allocation9], %s868
        %p870 = pneg %p108
        %p871 = pneg %p105
        %s872 = sand.u32 %s47, 1
        %s873 = scalar_lea.sflag [#allocation10], %s872
        %s874 = sand.u32 %s121, 1
        %s875 = smul.addr %s874, 4
        %s876 = scalar_lea.vmem [#allocation11], %s875
        %p877 = pneg %p134
        %p878 = pneg %p131
        %p879 = pneg %p155
        %p880 = pneg %p152
        %p881 = pneg %p176
        %p882 = pneg %p173
        %p883 = pneg %p197
        %p884 = pneg %p194
        %p885 = pneg %p218
        %p886 = pneg %p215
        %p887 = pneg %p239
        %p888 = pneg %p236
        %p889 = pneg %p260
        %p890 = pneg %p257
        %p891 = pneg %p281
        %p892 = pneg %p278
        %p893 = pneg %p302
        %p894 = pneg %p299
        %p895 = pneg %p323
        %p896 = pneg %p320
        %p897 = pneg %p344
        %p898 = pneg %p341
        %p899 = pneg %p365
        %p900 = pneg %p362
        %p901 = pneg %p386
        %p902 = pneg %p383
        %p903 = pneg %p407
        %p904 = pneg %p404
        %p905 = pneg %p428
        %p906 = pneg %p425
        %p907 = pneg %p449
        %p908 = pneg %p446
        %p909 = pneg %p470
        %p910 = pneg %p467
        %p911 = pneg %p498
        %p912 = pneg %p495
        %s913 = sand.u32 %s485, 1
        %s914 = scalar_lea.sflag [#allocation8], %s913
        %s915 = sand.u32 %s485, 1
        %s916 = smul.addr %s915, 8
        %s917 = scalar_lea.vmem [#allocation36], %s916
        %p919 = scmp.eq.s32.totalorder %s52, 0
        // Predicated region
        $region173: #{tpu_custom_call.1} parent=95 // pred_check
          %p920 = pneg %p919
        $region174: #{tpu_custom_call.1} parent=95 // pred_check_branch
          %922 = sbr.rel (%p920) target = $region176
        $region175: #{tpu_custom_call.1} parent=95 // pred_region
          %v923 = vld [vmem:[%s780] sm:$0xf]
          %v924 = vld [vmem:[#allocation14] sm:$0xf]
          %v925 = vld [vmem:[#allocation14 + $0x4] sm:$0xf]
          %v926 = vld [vmem:[#allocation14 + $0x8] sm:$0xf]
          %v927 = vld [vmem:[#allocation14 + $0xc] sm:$0xf]
          %v928 = vld [vmem:[#allocation14 + $0x10] sm:$0xf]
          %v929 = vld [vmem:[#allocation14 + $0x14] sm:$0xf]
          %v930 = vld [vmem:[#allocation14 + $0x18] sm:$0xf]
          %v931 = vld [vmem:[#allocation14 + $0x1c] sm:$0xf]
          %v932 = vld [vmem:[#allocation14 + $0x20] sm:$0xf]
          %v933 = vld [vmem:[#allocation14 + $0x24] sm:$0xf]
          %v934 = vld [vmem:[#allocation14 + $0x28] sm:$0xf]
          %v935 = vld [vmem:[#allocation14 + $0x2c] sm:$0xf]
          %v936 = vld [vmem:[#allocation14 + $0x30] sm:$0xf]
          %v937 = vld [vmem:[#allocation14 + $0x34] sm:$0xf]
          %v938 = vld [vmem:[#allocation14 + $0x38] sm:$0xf]
          %v939 = vld [vmem:[#allocation14 + $0x3c] sm:$0xf]
          %v940 = vld [vmem:[#allocation23] sm:$0x1]
          %v942 = vlaneseq
          %v943 = vshrl.u32 %v942, 7
          %v944 = vsub.s32 0, %v943
          %v945 = vrot.slane %v940, %v944
          %v963 = vunpack.c.l.b16 %v924
          %v964 = vunpack.c.l.b16 %v925
          %v965 = vunpack.c.l.b16 %v926
          %v966 = vunpack.c.l.b16 %v927
          %v967 = vunpack.c.l.b16 %v928
          %v968 = vunpack.c.l.b16 %v929
          %v969 = vunpack.c.l.b16 %v930
          %v970 = vunpack.c.l.b16 %v931
          %v971 = vunpack.c.l.b16 %v932
          %v972 = vunpack.c.l.b16 %v933
          %v973 = vunpack.c.l.b16 %v934
          %v974 = vunpack.c.l.b16 %v935
          %v975 = vunpack.c.l.b16 %v936
          %v976 = vunpack.c.l.b16 %v937
          %v977 = vunpack.c.l.b16 %v938
          %v978 = vunpack.c.l.b16 %v939
          %v979 = vpack.c.b16 %v964, %v963
          %v980 = vpack.c.b16 %v966, %v965
          %v981 = vpack.c.b16 %v968, %v967
          %v982 = vpack.c.b16 %v970, %v969
          %v983 = vpack.c.b16 %v972, %v971
          %v984 = vpack.c.b16 %v974, %v973
          %v985 = vpack.c.b16 %v976, %v975
          %v986 = vpack.c.b16 %v978, %v977
          %995 = vmatprep.subr.bf16.mxu0 0
          %996 = vmatpush1.bf16.msra.mxu0 %v979
          %997 = vmatprep.subr.bf16.mxu0 0
          %998 = vmatpush1.bf16.msra.mxu0 %v980
          %999 = vmatprep.subr.bf16.mxu0 0
          %1000 = vmatpush1.bf16.msra.mxu0 %v981
          %1001 = vmatprep.subr.bf16.mxu0 0
          %1002 = vmatpush1.bf16.msra.mxu0 %v982
          %1003 = vmatprep.subr.bf16.mxu0 0
          %1004 = vmatpush1.bf16.msra.mxu0 %v983
          %1005 = vmatprep.subr.bf16.mxu0 0
          %1006 = vmatpush1.bf16.msra.mxu0 %v984
          %1007 = vmatprep.subr.bf16.mxu0 0
          %1008 = vmatpush1.bf16.msra.mxu0 %v985
          %1009 = vmatprep.subr.bf16.mxu0 0
          %1010 = vmatpush1.bf16.msra.mxu0 %v986
          %1011 = vmatprep.subr.bf16.mxu0 0
          %1012 = vmatpush1.bf16.msra.mxu0 0
          %1013 = vmatprep.subr.bf16.mxu0 0
          %1014 = vmatpush1.bf16.msra.mxu0 0
          %1015 = vmatprep.subr.bf16.mxu0 0
          %1016 = vmatpush1.bf16.msra.mxu0 0
          %1017 = vmatprep.subr.bf16.mxu0 0
          %1018 = vmatpush1.bf16.msra.mxu0 0
          %1019 = vmatprep.subr.bf16.mxu0 0
          %1020 = vmatpush1.bf16.msra.mxu0 0
          %1021 = vmatprep.subr.bf16.mxu0 0
          %1022 = vmatpush1.bf16.msra.mxu0 0
          %1023 = vmatprep.subr.bf16.mxu0 0
          %1024 = vmatpush1.bf16.msra.mxu0 0
          %1025 = vmatprep.subr.bf16.mxu0 0
          %1026 = vmatpush1.bf16.msra.mxu0 0
          %1027 = vmatprep.mubr.bf16.mxu0 0
          %1028 = vmatmul.mubr.bf16.gmra.mrb[0].mxu0 %v923
          %v1029 = vpop.f32.mrb[0].mxu0
          %v1030 = vadd.f32 %v945, %v1029
          %v1031 = vpop.f32.mrb[0].mxu0
          %v1032 = vpop.f32.mrb[0].mxu0
          %v1033 = vpop.f32.mrb[0].mxu0
          %1034 = vdwg.mxu0
          %v1035 = vpack.c.bf16 %v1030, %v1030
          %v1036 = vld [vmem:[%s789] sm:$0xf]
          %v1037 = vld [vmem:[#allocation15] sm:$0xf]
          %v1038 = vld [vmem:[#allocation15 + $0x4] sm:$0xf]
          %v1039 = vld [vmem:[#allocation15 + $0x8] sm:$0xf]
          %v1040 = vld [vmem:[#allocation15 + $0xc] sm:$0xf]
          %v1041 = vld [vmem:[#allocation15 + $0x10] sm:$0xf]
          %v1042 = vld [vmem:[#allocation15 + $0x14] sm:$0xf]
          %v1043 = vld [vmem:[#allocation15 + $0x18] sm:$0xf]
          %v1044 = vld [vmem:[#allocation15 + $0x1c] sm:$0xf]
          %v1045 = vld [vmem:[#allocation15 + $0x20] sm:$0xf]
          %v1046 = vld [vmem:[#allocation15 + $0x24] sm:$0xf]
          %v1047 = vld [vmem:[#allocation15 + $0x28] sm:$0xf]
          %v1048 = vld [vmem:[#allocation15 + $0x2c] sm:$0xf]
          %v1049 = vld [vmem:[#allocation15 + $0x30] sm:$0xf]
          %v1050 = vld [vmem:[#allocation15 + $0x34] sm:$0xf]
          %v1051 = vld [vmem:[#allocation15 + $0x38] sm:$0xf]
          %v1052 = vld [vmem:[#allocation15 + $0x3c] sm:$0xf]
          %v1053 = vld [vmem:[#allocation24] sm:$0x1]
          %v1055 = vlaneseq
          %v1056 = vshrl.u32 %v1055, 7
          %v1057 = vsub.s32 0, %v1056
          %v1058 = vrot.slane %v1053, %v1057
          %v1076 = vunpack.c.l.b16 %v1037
          %v1077 = vunpack.c.l.b16 %v1038
          %v1078 = vunpack.c.l.b16 %v1039
          %v1079 = vunpack.c.l.b16 %v1040
          %v1080 = vunpack.c.l.b16 %v1041
          %v1081 = vunpack.c.l.b16 %v1042
          %v1082 = vunpack.c.l.b16 %v1043
          %v1083 = vunpack.c.l.b16 %v1044
          %v1084 = vunpack.c.l.b16 %v1045
          %v1085 = vunpack.c.l.b16 %v1046
          %v1086 = vunpack.c.l.b16 %v1047
          %v1087 = vunpack.c.l.b16 %v1048
          %v1088 = vunpack.c.l.b16 %v1049
          %v1089 = vunpack.c.l.b16 %v1050
          %v1090 = vunpack.c.l.b16 %v1051
          %v1091 = vunpack.c.l.b16 %v1052
          %v1092 = vpack.c.b16 %v1077, %v1076
          %v1093 = vpack.c.b16 %v1079, %v1078
          %v1094 = vpack.c.b16 %v1081, %v1080
          %v1095 = vpack.c.b16 %v1083, %v1082
          %v1096 = vpack.c.b16 %v1085, %v1084
          %v1097 = vpack.c.b16 %v1087, %v1086
          %v1098 = vpack.c.b16 %v1089, %v1088
          %v1099 = vpack.c.b16 %v1091, %v1090
          %1108 = vmatprep.subr.bf16.mxu0 0
          %1109 = vmatpush1.bf16.msra.mxu0 %v1092
          %1110 = vmatprep.subr.bf16.mxu0 0
          %1111 = vmatpush1.bf16.msra.mxu0 %v1093
          %1112 = vmatprep.subr.bf16.mxu0 0
          %1113 = vmatpush1.bf16.msra.mxu0 %v1094
          %1114 = vmatprep.subr.bf16.mxu0 0
          %1115 = vmatpush1.bf16.msra.mxu0 %v1095
          %1116 = vmatprep.subr.bf16.mxu0 0
          %1117 = vmatpush1.bf16.msra.mxu0 %v1096
          %1118 = vmatprep.subr.bf16.mxu0 0
          %1119 = vmatpush1.bf16.msra.mxu0 %v1097
          %1120 = vmatprep.subr.bf16.mxu0 0
          %1121 = vmatpush1.bf16.msra.mxu0 %v1098
          %1122 = vmatprep.subr.bf16.mxu0 0
          %1123 = vmatpush1.bf16.msra.mxu0 %v1099
          %1124 = vmatprep.subr.bf16.mxu0 0
          %1125 = vmatpush1.bf16.msra.mxu0 0
          %1126 = vmatprep.subr.bf16.mxu0 0
          %1127 = vmatpush1.bf16.msra.mxu0 0
          %1128 = vmatprep.subr.bf16.mxu0 0
          %1129 = vmatpush1.bf16.msra.mxu0 0
          %1130 = vmatprep.subr.bf16.mxu0 0
          %1131 = vmatpush1.bf16.msra.mxu0 0
          %1132 = vmatprep.subr.bf16.mxu0 0
          %1133 = vmatpush1.bf16.msra.mxu0 0
          %1134 = vmatprep.subr.bf16.mxu0 0
          %1135 = vmatpush1.bf16.msra.mxu0 0
          %1136 = vmatprep.subr.bf16.mxu0 0
          %1137 = vmatpush1.bf16.msra.mxu0 0
          %1138 = vmatprep.subr.bf16.mxu0 0
          %1139 = vmatpush1.bf16.msra.mxu0 0
          %1140 = vmatprep.mubr.bf16.mxu0 0
          %1141 = vmatmul.mubr.bf16.gmra.mrb[0].mxu0 %v1036
          %v1142 = vpop.f32.mrb[0].mxu0
          %v1143 = vadd.f32 %v1058, %v1142
          %v1144 = vpop.f32.mrb[0].mxu0
          %v1145 = vpop.f32.mrb[0].mxu0
          %v1146 = vpop.f32.mrb[0].mxu0
          %1147 = vdwg.mxu0
          %v1148 = vpack.c.bf16 %v1143, %v1143
          %vm1149 = vcmask 125952
          %1150 = vst.msk [vmem:[#allocation2] sm:$0xf] %vm1149, %v1035
          %1151 = vst.msk [vmem:[#allocation3] sm:$0xf] %vm1149, %v1148
          %v1153 = vunpack.c.l.b16 %v1035
          %v1154 = vpack.c.b16 %v1153, %v1153
          %1155 = vrot.lane.b32.xlu0 %v1154, 112
          %v1156 = vpop.permute.xlu0 %1155
          %s1158 = scalar_lea.vmem [#allocation2], 4
          %1159 = vst.msk [vmem:[%s1158] sm:$0xf] %vm1149, %v1156
          %v1161 = vunpack.c.l.b16 %v1148
          %v1162 = vpack.c.b16 %v1161, %v1161
          %1163 = vrot.lane.b32.xlu0 %v1162, 112
          %v1164 = vpop.permute.xlu0 %1163
          %s1166 = scalar_lea.vmem [#allocation3], 4
          %1167 = vst.msk [vmem:[%s1166] sm:$0xf] %vm1149, %v1164
          %1168 = vrot.lane.b32.xlu0 %v1154, 96
          %v1169 = vpop.permute.xlu0 %1168
          %s1171 = scalar_lea.vmem [#allocation2], 8
          %1172 = vst.msk [vmem:[%s1171] sm:$0xf] %vm1149, %v1169
          %1173 = vrot.lane.b32.xlu0 %v1162, 96
          %v1174 = vpop.permute.xlu0 %1173
          %s1176 = scalar_lea.vmem [#allocation3], 8
          %1177 = vst.msk [vmem:[%s1176] sm:$0xf] %vm1149, %v1174
          %1178 = vrot.lane.b32.xlu0 %v1154, 80
          %v1179 = vpop.permute.xlu0 %1178
          %s1181 = scalar_lea.vmem [#allocation2], 12
          %1182 = vst.msk [vmem:[%s1181] sm:$0xf] %vm1149, %v1179
          %1183 = vrot.lane.b32.xlu0 %v1162, 80
          %v1184 = vpop.permute.xlu0 %1183
          %s1186 = scalar_lea.vmem [#allocation3], 12
          %1187 = vst.msk [vmem:[%s1186] sm:$0xf] %vm1149, %v1184
        $region176: #{tpu_custom_call.1} parent=95 // pred_fallthru
          _
        %v1188 = vld [vmem:[%s771] sm:$0xf]
        %v1189 = vld [vmem:[#allocation12] sm:$0xf]
        %v1190 = vld [vmem:[#allocation12 + $0x4] sm:$0xf]
        %v1191 = vld [vmem:[#allocation12 + $0x8] sm:$0xf]
        %v1192 = vld [vmem:[#allocation12 + $0xc] sm:$0xf]
        %v1193 = vld [vmem:[#allocation12 + $0x10] sm:$0xf]
        %v1194 = vld [vmem:[#allocation12 + $0x14] sm:$0xf]
        %v1195 = vld [vmem:[#allocation12 + $0x18] sm:$0xf]
        %v1196 = vld [vmem:[#allocation12 + $0x1c] sm:$0xf]
        %v1197 = vld [vmem:[#allocation12 + $0x20] sm:$0xf]
        %v1198 = vld [vmem:[#allocation12 + $0x24] sm:$0xf]
        %v1199 = vld [vmem:[#allocation12 + $0x28] sm:$0xf]
        %v1200 = vld [vmem:[#allocation12 + $0x2c] sm:$0xf]
        %v1201 = vld [vmem:[#allocation12 + $0x30] sm:$0xf]
        %v1202 = vld [vmem:[#allocation12 + $0x34] sm:$0xf]
        %v1203 = vld [vmem:[#allocation12 + $0x38] sm:$0xf]
        %v1204 = vld [vmem:[#allocation12 + $0x3c] sm:$0xf]
        %v1205 = vld [vmem:[#allocation21] sm:$0x1]
        %v1207 = vlaneseq
        %v1208 = vshrl.u32 %v1207, 7
        %v1209 = vsub.s32 0, %v1208
        %v1210 = vrot.slane %v1205, %v1209
        %v1228 = vunpack.c.l.b16 %v1189
        %v1229 = vunpack.c.l.b16 %v1190
        %v1230 = vunpack.c.l.b16 %v1191
        %v1231 = vunpack.c.l.b16 %v1192
        %v1232 = vunpack.c.l.b16 %v1193
        %v1233 = vunpack.c.l.b16 %v1194
        %v1234 = vunpack.c.l.b16 %v1195
        %v1235 = vunpack.c.l.b16 %v1196
        %v1236 = vunpack.c.l.b16 %v1197
        %v1237 = vunpack.c.l.b16 %v1198
        %v1238 = vunpack.c.l.b16 %v1199
        %v1239 = vunpack.c.l.b16 %v1200
        %v1240 = vunpack.c.l.b16 %v1201
        %v1241 = vunpack.c.l.b16 %v1202
        %v1242 = vunpack.c.l.b16 %v1203
        %v1243 = vunpack.c.l.b16 %v1204
        %v1244 = vpack.c.b16 %v1229, %v1228
        %v1245 = vpack.c.b16 %v1231, %v1230
        %v1246 = vpack.c.b16 %v1233, %v1232
        %v1247 = vpack.c.b16 %v1235, %v1234
        %v1248 = vpack.c.b16 %v1237, %v1236
        %v1249 = vpack.c.b16 %v1239, %v1238
        %v1250 = vpack.c.b16 %v1241, %v1240
        %v1251 = vpack.c.b16 %v1243, %v1242
        %1260 = vmatprep.subr.bf16.mxu0 0
        %1261 = vmatpush1.bf16.msra.mxu0 %v1244
        %1262 = vmatprep.subr.bf16.mxu0 0
        %1263 = vmatpush1.bf16.msra.mxu0 %v1245
        %1264 = vmatprep.subr.bf16.mxu0 0
        %1265 = vmatpush1.bf16.msra.mxu0 %v1246
        %1266 = vmatprep.subr.bf16.mxu0 0
        %1267 = vmatpush1.bf16.msra.mxu0 %v1247
        %1268 = vmatprep.subr.bf16.mxu0 0
        %1269 = vmatpush1.bf16.msra.mxu0 %v1248
        %1270 = vmatprep.subr.bf16.mxu0 0
        %1271 = vmatpush1.bf16.msra.mxu0 %v1249
        %1272 = vmatprep.subr.bf16.mxu0 0
        %1273 = vmatpush1.bf16.msra.mxu0 %v1250
        %1274 = vmatprep.subr.bf16.mxu0 0
        %1275 = vmatpush1.bf16.msra.mxu0 %v1251
        %1276 = vmatprep.subr.bf16.mxu0 0
        %1277 = vmatpush1.bf16.msra.mxu0 0
        %1278 = vmatprep.subr.bf16.mxu0 0
        %1279 = vmatpush1.bf16.msra.mxu0 0
        %1280 = vmatprep.subr.bf16.mxu0 0
        %1281 = vmatpush1.bf16.msra.mxu0 0
        %1282 = vmatprep.subr.bf16.mxu0 0
        %1283 = vmatpush1.bf16.msra.mxu0 0
        %1284 = vmatprep.subr.bf16.mxu0 0
        %1285 = vmatpush1.bf16.msra.mxu0 0
        %1286 = vmatprep.subr.bf16.mxu0 0
        %1287 = vmatpush1.bf16.msra.mxu0 0
        %1288 = vmatprep.subr.bf16.mxu0 0
        %1289 = vmatpush1.bf16.msra.mxu0 0
        %1290 = vmatprep.subr.bf16.mxu0 0
        %1291 = vmatpush1.bf16.msra.mxu0 0
        %1292 = vmatprep.mubr.bf16.mxu0 0
        %1293 = vmatmul.mubr.bf16.gmra.mrb[0].mxu0 %v1188
        %v1294 = vpop.f32.mrb[0].mxu0
        %v1295 = vadd.f32 %v1210, %v1294
        %v1296 = vpop.f32.mrb[0].mxu0
        %v1297 = vpop.f32.mrb[0].mxu0
        %v1298 = vpop.f32.mrb[0].mxu0
        %1299 = vdwg.mxu0
        %v1300 = vpack.c.bf16 %v1295, %v1295
        %vm1301 = vcmask 125952
        %1302 = vst.msk [vmem:[#allocation4] sm:$0xf] %vm1301, %v1300
        %v1304 = vunpack.c.l.b16 %v1300
        %v1305 = vpack.c.b16 %v1304, %v1304
        %1306 = vrot.lane.b32.xlu0 %v1305, 112
        %v1307 = vpop.permute.xlu0 %1306
        %s1309 = scalar_lea.vmem [#allocation4], 4
        %1310 = vst.msk [vmem:[%s1309] sm:$0xf] %vm1301, %v1307
        %1311 = vrot.lane.b32.xlu0 %v1305, 96
        %v1312 = vpop.permute.xlu0 %1311
        %s1314 = scalar_lea.vmem [#allocation4], 8
        %1315 = vst.msk [vmem:[%s1314] sm:$0xf] %vm1301, %v1312
        %1316 = vrot.lane.b32.xlu0 %v1305, 80
        %v1317 = vpop.permute.xlu0 %1316
        %s1319 = scalar_lea.vmem [#allocation4], 12
        %1320 = vst.msk [vmem:[%s1319] sm:$0xf] %vm1301, %v1317
        %v1321 = vld [vmem:[#allocation4] sm:$0xf]
        %v1322 = vld [vmem:[#allocation4 + $0x4] sm:$0xf]
        %v1323 = vld [vmem:[#allocation4 + $0x8] sm:$0xf]
        %v1324 = vld [vmem:[#allocation4 + $0xc] sm:$0xf]
        %v1325 = vld [vmem:[#allocation2] sm:$0xf]
        %v1326 = vld [vmem:[#allocation2 + $0x4] sm:$0xf]
        %v1327 = vld [vmem:[#allocation2 + $0x8] sm:$0xf]
        %v1328 = vld [vmem:[#allocation2 + $0xc] sm:$0xf]
        %vm1329 = vcmask 130048
        %v1331 = vsel %vm1329, %v1321, 0
        %v1334 = vsel %vm1329, %v1325, 0
        %1336 = vmatprep.subr.bf16.mxu0 0
        %1337 = vmatpush1.bf16.xpose.msra.mxu0 %v1334
        %1338 = vmatprep.subr.bf16.mxu0 0
        %1339 = vmatpush1.bf16.xpose.msra.mxu0 0
        %1340 = vmatprep.subr.bf16.mxu0 0
        %1341 = vmatpush1.bf16.xpose.msra.mxu0 0
        %1342 = vmatprep.subr.bf16.mxu0 0
        %1343 = vmatpush1.bf16.xpose.msra.mxu0 0
        %1344 = vmatprep.subr.bf16.mxu0 0
        %1345 = vmatpush1.bf16.xpose.msra.mxu0 0
        %1346 = vmatprep.subr.bf16.mxu0 0
        %1347 = vmatpush1.bf16.xpose.msra.mxu0 0
        %1348 = vmatprep.subr.bf16.mxu0 0
        %1349 = vmatpush1.bf16.xpose.msra.mxu0 0
        %1350 = vmatprep.subr.bf16.mxu0 0
        %1351 = vmatpush1.bf16.xpose.msra.mxu0 0
        %1352 = vmatprep.subr.bf16.mxu0 0
        %1353 = vmatpush1.bf16.xpose.msra.mxu0 0
        %1354 = vmatprep.subr.bf16.mxu0 0
        %1355 = vmatpush1.bf16.xpose.msra.mxu0 0
        %1356 = vmatprep.subr.bf16.mxu0 0
        %1357 = vmatpush1.bf16.xpose.msra.mxu0 0
        %1358 = vmatprep.subr.bf16.mxu0 0
        %1359 = vmatpush1.bf16.xpose.msra.mxu0 0
        %1360 = vmatprep.subr.bf16.mxu0 0
        %1361 = vmatpush1.bf16.xpose.msra.mxu0 0
        %1362 = vmatprep.subr.bf16.mxu0 0
        %1363 = vmatpush1.bf16.xpose.msra.mxu0 0
        %1364 = vmatprep.subr.bf16.mxu0 0
        %1365 = vmatpush1.bf16.xpose.msra.mxu0 0
        %1366 = vmatprep.subr.bf16.mxu0 0
        %1367 = vmatpush1.bf16.xpose.msra.mxu0 0
        %1368 = vmatprep.mubr.bf16.mxu0 0
        %1369 = vmatmul.mubr.bf16.gmra.mrb[0].mxu0 %v1331
        %v1370 = vpop.f32.mrb[0].mxu0
        %v1371 = vadd.f32 0.0, %v1370
        %v1372 = vpop.f32.mrb[0].mxu0
        %v1373 = vpop.f32.mrb[0].mxu0
        %v1374 = vpop.f32.mrb[0].mxu0
        %1375 = vdwg.mxu0
        %v1377 = vsel %vm1329, %v1322, 0
        %v1380 = vsel %vm1329, %v1326, 0
        %1382 = vmatprep.subr.bf16.mxu0 0
        %1383 = vmatpush1.bf16.xpose.msra.mxu0 %v1380
        %1384 = vmatprep.subr.bf16.mxu0 0
        %1385 = vmatpush1.bf16.xpose.msra.mxu0 0
        %1386 = vmatprep.subr.bf16.mxu0 0
        %1387 = vmatpush1.bf16.xpose.msra.mxu0 0
        %1388 = vmatprep.subr.bf16.mxu0 0
        %1389 = vmatpush1.bf16.xpose.msra.mxu0 0
        %1390 = vmatprep.subr.bf16.mxu0 0
        %1391 = vmatpush1.bf16.xpose.msra.mxu0 0
        %1392 = vmatprep.subr.bf16.mxu0 0
        %1393 = vmatpush1.bf16.xpose.msra.mxu0 0
        %1394 = vmatprep.subr.bf16.mxu0 0
        %1395 = vmatpush1.bf16.xpose.msra.mxu0 0
        %1396 = vmatprep.subr.bf16.mxu0 0
        %1397 = vmatpush1.bf16.xpose.msra.mxu0 0
        %1398 = vmatprep.subr.bf16.mxu0 0
        %1399 = vmatpush1.bf16.xpose.msra.mxu0 0
        %1400 = vmatprep.subr.bf16.mxu0 0
        %1401 = vmatpush1.bf16.xpose.msra.mxu0 0
        %1402 = vmatprep.subr.bf16.mxu0 0
        %1403 = vmatpush1.bf16.xpose.msra.mxu0 0
        %1404 = vmatprep.subr.bf16.mxu0 0
        %1405 = vmatpush1.bf16.xpose.msra.mxu0 0
        %1406 = vmatprep.subr.bf16.mxu0 0
        %1407 = vmatpush1.bf16.xpose.msra.mxu0 0
        %1408 = vmatprep.subr.bf16.mxu0 0
        %1409 = vmatpush1.bf16.xpose.msra.mxu0 0
        %1410 = vmatprep.subr.bf16.mxu0 0
        %1411 = vmatpush1.bf16.xpose.msra.mxu0 0
        %1412 = vmatprep.subr.bf16.mxu0 0
        %1413 = vmatpush1.bf16.xpose.msra.mxu0 0
        %1414 = vmatprep.mubr.bf16.mxu0 0
        %1415 = vmatmul.mubr.bf16.gmra.mrb[0].mxu0 %v1377
        %v1416 = vpop.f32.mrb[0].mxu0
        %v1417 = vadd.f32 0.0, %v1416
        %v1418 = vpop.f32.mrb[0].mxu0
        %v1419 = vpop.f32.mrb[0].mxu0
        %v1420 = vpop.f32.mrb[0].mxu0
        %1421 = vdwg.mxu0
        %v1423 = vsel %vm1329, %v1323, 0
        %v1426 = vsel %vm1329, %v1327, 0
        %1428 = vmatprep.subr.bf16.mxu0 0
        %1429 = vmatpush1.bf16.xpose.msra.mxu0 %v1426
        %1430 = vmatprep.subr.bf16.mxu0 0
        %1431 = vmatpush1.bf16.xpose.msra.mxu0 0
        %1432 = vmatprep.subr.bf16.mxu0 0
        %1433 = vmatpush1.bf16.xpose.msra.mxu0 0
        %1434 = vmatprep.subr.bf16.mxu0 0
        %1435 = vmatpush1.bf16.xpose.msra.mxu0 0
        %1436 = vmatprep.subr.bf16.mxu0 0
        %1437 = vmatpush1.bf16.xpose.msra.mxu0 0
        %1438 = vmatprep.subr.bf16.mxu0 0
        %1439 = vmatpush1.bf16.xpose.msra.mxu0 0
        %1440 = vmatprep.subr.bf16.mxu0 0
        %1441 = vmatpush1.bf16.xpose.msra.mxu0 0
        %1442 = vmatprep.subr.bf16.mxu0 0
        %1443 = vmatpush1.bf16.xpose.msra.mxu0 0
        %1444 = vmatprep.subr.bf16.mxu0 0
        %1445 = vmatpush1.bf16.xpose.msra.mxu0 0
        %1446 = vmatprep.subr.bf16.mxu0 0
        %1447 = vmatpush1.bf16.xpose.msra.mxu0 0
        %1448 = vmatprep.subr.bf16.mxu0 0
        %1449 = vmatpush1.bf16.xpose.msra.mxu0 0
        %1450 = vmatprep.subr.bf16.mxu0 0
        %1451 = vmatpush1.bf16.xpose.msra.mxu0 0
        %1452 = vmatprep.subr.bf16.mxu0 0
        %1453 = vmatpush1.bf16.xpose.msra.mxu0 0
        %1454 = vmatprep.subr.bf16.mxu0 0
        %1455 = vmatpush1.bf16.xpose.msra.mxu0 0
        %1456 = vmatprep.subr.bf16.mxu0 0
        %1457 = vmatpush1.bf16.xpose.msra.mxu0 0
        %1458 = vmatprep.subr.bf16.mxu0 0
        %1459 = vmatpush1.bf16.xpose.msra.mxu0 0
        %1460 = vmatprep.mubr.bf16.mxu0 0
        %1461 = vmatmul.mubr.bf16.gmra.mrb[0].mxu0 %v1423
        %v1462 = vpop.f32.mrb[0].mxu0
        %v1463 = vadd.f32 0.0, %v1462
        %v1464 = vpop.f32.mrb[0].mxu0
        %v1465 = vpop.f32.mrb[0].mxu0
        %v1466 = vpop.f32.mrb[0].mxu0
        %1467 = vdwg.mxu0
        %v1469 = vsel %vm1329, %v1324, 0
        %v1472 = vsel %vm1329, %v1328, 0
        %1474 = vmatprep.subr.bf16.mxu0 0
        %1475 = vmatpush1.bf16.xpose.msra.mxu0 %v1472
        %1476 = vmatprep.subr.bf16.mxu0 0
        %1477 = vmatpush1.bf16.xpose.msra.mxu0 0
        %1478 = vmatprep.subr.bf16.mxu0 0
        %1479 = vmatpush1.bf16.xpose.msra.mxu0 0
        %1480 = vmatprep.subr.bf16.mxu0 0
        %1481 = vmatpush1.bf16.xpose.msra.mxu0 0
        %1482 = vmatprep.subr.bf16.mxu0 0
        %1483 = vmatpush1.bf16.xpose.msra.mxu0 0
        %1484 = vmatprep.subr.bf16.mxu0 0
        %1485 = vmatpush1.bf16.xpose.msra.mxu0 0
        %1486 = vmatprep.subr.bf16.mxu0 0
        %1487 = vmatpush1.bf16.xpose.msra.mxu0 0
        %1488 = vmatprep.subr.bf16.mxu0 0
        %1489 = vmatpush1.bf16.xpose.msra.mxu0 0
        %1490 = vmatprep.subr.bf16.mxu0 0
        %1491 = vmatpush1.bf16.xpose.msra.mxu0 0
        %1492 = vmatprep.subr.bf16.mxu0 0
        %1493 = vmatpush1.bf16.xpose.msra.mxu0 0
        %1494 = vmatprep.subr.bf16.mxu0 0
        %1495 = vmatpush1.bf16.xpose.msra.mxu0 0
        %1496 = vmatprep.subr.bf16.mxu0 0
        %1497 = vmatpush1.bf16.xpose.msra.mxu0 0
        %1498 = vmatprep.subr.bf16.mxu0 0
        %1499 = vmatpush1.bf16.xpose.msra.mxu0 0
        %1500 = vmatprep.subr.bf16.mxu0 0
        %1501 = vmatpush1.bf16.xpose.msra.mxu0 0
        %1502 = vmatprep.subr.bf16.mxu0 0
        %1503 = vmatpush1.bf16.xpose.msra.mxu0 0
        %1504 = vmatprep.subr.bf16.mxu0 0
        %1505 = vmatpush1.bf16.xpose.msra.mxu0 0
        %1506 = vmatprep.mubr.bf16.mxu0 0
        %1507 = vmatmul.mubr.bf16.gmra.mrb[0].mxu0 %v1469
        %v1508 = vpop.f32.mrb[0].mxu0
        %v1509 = vadd.f32 0.0, %v1508
        %v1510 = vpop.f32.mrb[0].mxu0
        %v1511 = vpop.f32.mrb[0].mxu0
        %v1512 = vpop.f32.mrb[0].mxu0
        %1513 = vdwg.mxu0
        %vm1514 = vcmask 64512
        %v1515 = vsel %vm1514, %v1371, -inf
        %1516 = vmax.xlane.f32.xlu0 %v1515
        %v1517 = vpop.xlane.xlu0 %1516
        %v1518 = vsel %vm1514, %v1417, -inf
        %1519 = vmax.xlane.f32.xlu0 %v1518
        %v1520 = vpop.xlane.xlu0 %1519
        %v1521 = vsel %vm1514, %v1463, -inf
        %1522 = vmax.xlane.f32.xlu0 %v1521
        %v1523 = vpop.xlane.xlu0 %1522
        %v1524 = vsel %vm1514, %v1509, -inf
        %1525 = vmax.xlane.f32.xlu0 %v1524
        %v1526 = vpop.xlane.xlu0 %1525
        %v1527 = vsub.f32 %v1371, %v1517
        %v1528 = vsub.f32 %v1417, %v1520
        %v1529 = vsub.f32 %v1463, %v1523
        %v1530 = vsub.f32 %v1509, %v1526
        %v1531 = vmul.f32 %v1527, 1.442695
        %v1532 = vpow.pop %v1531
        %v1533 = vmul.f32 %v1528, 1.442695
        %v1534 = vpow.pop %v1533
        %v1535 = vmul.f32 %v1529, 1.442695
        %v1536 = vpow.pop %v1535
        %v1537 = vmul.f32 %v1530, 1.442695
        %v1538 = vpow.pop %v1537
        %v1539 = vsel %vm1514, %v1532, 0.0
        %1540 = vadd.xlane.f32.xlu0 %v1539
        %v1541 = vpop.xlane.xlu0 %1540
        %v1542 = vsel %vm1514, %v1534, 0.0
        %1543 = vadd.xlane.f32.xlu0 %v1542
        %v1544 = vpop.xlane.xlu0 %1543
        %v1545 = vsel %vm1514, %v1536, 0.0
        %1546 = vadd.xlane.f32.xlu0 %v1545
        %v1547 = vpop.xlane.xlu0 %1546
        %v1548 = vsel %vm1514, %v1538, 0.0
        %1549 = vadd.xlane.f32.xlu0 %v1548
        %v1550 = vpop.xlane.xlu0 %1549
        %v1551 = vrcp.pop %v1541
        %v1552 = vrcp.pop %v1544
        %v1553 = vrcp.pop %v1547
        %v1554 = vrcp.pop %v1550
        %v1555 = vmul.f32 %v1532, %v1551
        %v1556 = vmul.f32 %v1534, %v1552
        %v1557 = vmul.f32 %v1536, %v1553
        %v1558 = vmul.f32 %v1538, %v1554
        %v1559 = vpack.c.bf16 %v1555, %v1555
        %v1560 = vpack.c.bf16 %v1556, %v1556
        %v1561 = vpack.c.bf16 %v1557, %v1557
        %v1562 = vpack.c.bf16 %v1558, %v1558
        %v1563 = vld [vmem:[#allocation3] sm:$0xf]
        %v1564 = vld [vmem:[#allocation3 + $0x4] sm:$0xf]
        %v1565 = vld [vmem:[#allocation3 + $0x8] sm:$0xf]
        %v1566 = vld [vmem:[#allocation3 + $0xc] sm:$0xf]
        %v1568 = vsel %vm1514, %v1559, 0
        %vm1570 = vcmask 1043456
        %v1572 = vsel %vm1570, %v1563, 0
        %1574 = vmatprep.subr.bf16.mxu0 0
        %1575 = vmatpush1.bf16.msra.mxu0 %v1572
        %1576 = vmatprep.subr.bf16.mxu0 0
        %1577 = vmatpush1.bf16.msra.mxu0 0
        %1578 = vmatprep.subr.bf16.mxu0 0
        %1579 = vmatpush1.bf16.msra.mxu0 0
        %1580 = vmatprep.subr.bf16.mxu0 0
        %1581 = vmatpush1.bf16.msra.mxu0 0
        %1582 = vmatprep.subr.bf16.mxu0 0
        %1583 = vmatpush1.bf16.msra.mxu0 0
        %1584 = vmatprep.subr.bf16.mxu0 0
        %1585 = vmatpush1.bf16.msra.mxu0 0
        %1586 = vmatprep.subr.bf16.mxu0 0
        %1587 = vmatpush1.bf16.msra.mxu0 0
        %1588 = vmatprep.subr.bf16.mxu0 0
        %1589 = vmatpush1.bf16.msra.mxu0 0
        %1590 = vmatprep.subr.bf16.mxu0 0
        %1591 = vmatpush1.bf16.msra.mxu0 0
        %1592 = vmatprep.subr.bf16.mxu0 0
        %1593 = vmatpush1.bf16.msra.mxu0 0
        %1594 = vmatprep.subr.bf16.mxu0 0
        %1595 = vmatpush1.bf16.msra.mxu0 0
        %1596 = vmatprep.subr.bf16.mxu0 0
        %1597 = vmatpush1.bf16.msra.mxu0 0
        %1598 = vmatprep.subr.bf16.mxu0 0
        %1599 = vmatpush1.bf16.msra.mxu0 0
        %1600 = vmatprep.subr.bf16.mxu0 0
        %1601 = vmatpush1.bf16.msra.mxu0 0
        %1602 = vmatprep.subr.bf16.mxu0 0
        %1603 = vmatpush1.bf16.msra.mxu0 0
        %1604 = vmatprep.subr.bf16.mxu0 0
        %1605 = vmatpush1.bf16.msra.mxu0 0
        %1606 = vmatprep.mubr.bf16.mxu0 0
        %1607 = vmatmul.mubr.bf16.gmra.mrb[0].mxu0 %v1568
        %v1608 = vpop.f32.mrb[0].mxu0
        %v1609 = vadd.f32 0.0, %v1608
        %v1610 = vpop.f32.mrb[0].mxu0
        %v1611 = vpop.f32.mrb[0].mxu0
        %v1612 = vpop.f32.mrb[0].mxu0
        %1613 = vdwg.mxu0
        %v1615 = vsel %vm1514, %v1560, 0
        %v1618 = vsel %vm1570, %v1564, 0
        %1620 = vmatprep.subr.bf16.mxu0 0
        %1621 = vmatpush1.bf16.msra.mxu0 %v1618
        %1622 = vmatprep.subr.bf16.mxu0 0
        %1623 = vmatpush1.bf16.msra.mxu0 0
        %1624 = vmatprep.subr.bf16.mxu0 0
        %1625 = vmatpush1.bf16.msra.mxu0 0
        %1626 = vmatprep.subr.bf16.mxu0 0
        %1627 = vmatpush1.bf16.msra.mxu0 0
        %1628 = vmatprep.subr.bf16.mxu0 0
        %1629 = vmatpush1.bf16.msra.mxu0 0
        %1630 = vmatprep.subr.bf16.mxu0 0
        %1631 = vmatpush1.bf16.msra.mxu0 0
        %1632 = vmatprep.subr.bf16.mxu0 0
        %1633 = vmatpush1.bf16.msra.mxu0 0
        %1634 = vmatprep.subr.bf16.mxu0 0
        %1635 = vmatpush1.bf16.msra.mxu0 0
        %1636 = vmatprep.subr.bf16.mxu0 0
        %1637 = vmatpush1.bf16.msra.mxu0 0
        %1638 = vmatprep.subr.bf16.mxu0 0
        %1639 = vmatpush1.bf16.msra.mxu0 0
        %1640 = vmatprep.subr.bf16.mxu0 0
        %1641 = vmatpush1.bf16.msra.mxu0 0
        %1642 = vmatprep.subr.bf16.mxu0 0
        %1643 = vmatpush1.bf16.msra.mxu0 0
        %1644 = vmatprep.subr.bf16.mxu0 0
        %1645 = vmatpush1.bf16.msra.mxu0 0
        %1646 = vmatprep.subr.bf16.mxu0 0
        %1647 = vmatpush1.bf16.msra.mxu0 0
        %1648 = vmatprep.subr.bf16.mxu0 0
        %1649 = vmatpush1.bf16.msra.mxu0 0
        %1650 = vmatprep.subr.bf16.mxu0 0
        %1651 = vmatpush1.bf16.msra.mxu0 0
        %1652 = vmatprep.mubr.bf16.mxu0 0
        %1653 = vmatmul.mubr.bf16.gmra.mrb[0].mxu0 %v1615
        %v1654 = vpop.f32.mrb[0].mxu0
        %v1655 = vadd.f32 0.0, %v1654
        %v1656 = vpop.f32.mrb[0].mxu0
        %v1657 = vpop.f32.mrb[0].mxu0
        %v1658 = vpop.f32.mrb[0].mxu0
        %1659 = vdwg.mxu0
        %v1661 = vsel %vm1514, %v1561, 0
        %v1664 = vsel %vm1570, %v1565, 0
        %1666 = vmatprep.subr.bf16.mxu0 0
        %1667 = vmatpush1.bf16.msra.mxu0 %v1664
        %1668 = vmatprep.subr.bf16.mxu0 0
        %1669 = vmatpush1.bf16.msra.mxu0 0
        %1670 = vmatprep.subr.bf16.mxu0 0
        %1671 = vmatpush1.bf16.msra.mxu0 0
        %1672 = vmatprep.subr.bf16.mxu0 0
        %1673 = vmatpush1.bf16.msra.mxu0 0
        %1674 = vmatprep.subr.bf16.mxu0 0
        %1675 = vmatpush1.bf16.msra.mxu0 0
        %1676 = vmatprep.subr.bf16.mxu0 0
        %1677 = vmatpush1.bf16.msra.mxu0 0
        %1678 = vmatprep.subr.bf16.mxu0 0
        %1679 = vmatpush1.bf16.msra.mxu0 0
        %1680 = vmatprep.subr.bf16.mxu0 0
        %1681 = vmatpush1.bf16.msra.mxu0 0
        %1682 = vmatprep.subr.bf16.mxu0 0
        %1683 = vmatpush1.bf16.msra.mxu0 0
        %1684 = vmatprep.subr.bf16.mxu0 0
        %1685 = vmatpush1.bf16.msra.mxu0 0
        %1686 = vmatprep.subr.bf16.mxu0 0
        %1687 = vmatpush1.bf16.msra.mxu0 0
        %1688 = vmatprep.subr.bf16.mxu0 0
        %1689 = vmatpush1.bf16.msra.mxu0 0
        %1690 = vmatprep.subr.bf16.mxu0 0
        %1691 = vmatpush1.bf16.msra.mxu0 0
        %1692 = vmatprep.subr.bf16.mxu0 0
        %1693 = vmatpush1.bf16.msra.mxu0 0
        %1694 = vmatprep.subr.bf16.mxu0 0
        %1695 = vmatpush1.bf16.msra.mxu0 0
        %1696 = vmatprep.subr.bf16.mxu0 0
        %1697 = vmatpush1.bf16.msra.mxu0 0
        %1698 = vmatprep.mubr.bf16.mxu0 0
        %1699 = vmatmul.mubr.bf16.gmra.mrb[0].mxu0 %v1661
        %v1700 = vpop.f32.mrb[0].mxu0
        %v1701 = vadd.f32 0.0, %v1700
        %v1702 = vpop.f32.mrb[0].mxu0
        %v1703 = vpop.f32.mrb[0].mxu0
        %v1704 = vpop.f32.mrb[0].mxu0
        %1705 = vdwg.mxu0
        %v1707 = vsel %vm1514, %v1562, 0
        %v1710 = vsel %vm1570, %v1566, 0
        %1712 = vmatprep.subr.bf16.mxu0 0
        %1713 = vmatpush1.bf16.msra.mxu0 %v1710
        %1714 = vmatprep.subr.bf16.mxu0 0
        %1715 = vmatpush1.bf16.msra.mxu0 0
        %1716 = vmatprep.subr.bf16.mxu0 0
        %1717 = vmatpush1.bf16.msra.mxu0 0
        %1718 = vmatprep.subr.bf16.mxu0 0
        %1719 = vmatpush1.bf16.msra.mxu0 0
        %1720 = vmatprep.subr.bf16.mxu0 0
        %1721 = vmatpush1.bf16.msra.mxu0 0
        %1722 = vmatprep.subr.bf16.mxu0 0
        %1723 = vmatpush1.bf16.msra.mxu0 0
        %1724 = vmatprep.subr.bf16.mxu0 0
        %1725 = vmatpush1.bf16.msra.mxu0 0
        %1726 = vmatprep.subr.bf16.mxu0 0
        %1727 = vmatpush1.bf16.msra.mxu0 0
        %1728 = vmatprep.subr.bf16.mxu0 0
        %1729 = vmatpush1.bf16.msra.mxu0 0
        %1730 = vmatprep.subr.bf16.mxu0 0
        %1731 = vmatpush1.bf16.msra.mxu0 0
        %1732 = vmatprep.subr.bf16.mxu0 0
        %1733 = vmatpush1.bf16.msra.mxu0 0
        %1734 = vmatprep.subr.bf16.mxu0 0
        %1735 = vmatpush1.bf16.msra.mxu0 0
        %1736 = vmatprep.subr.bf16.mxu0 0
        %1737 = vmatpush1.bf16.msra.mxu0 0
        %1738 = vmatprep.subr.bf16.mxu0 0
        %1739 = vmatpush1.bf16.msra.mxu0 0
        %1740 = vmatprep.subr.bf16.mxu0 0
        %1741 = vmatpush1.bf16.msra.mxu0 0
        %1742 = vmatprep.subr.bf16.mxu0 0
        %1743 = vmatpush1.bf16.msra.mxu0 0
        %1744 = vmatprep.mubr.bf16.mxu0 0
        %1745 = vmatmul.mubr.bf16.gmra.mrb[0].mxu0 %v1707
        %v1746 = vpop.f32.mrb[0].mxu0
        %v1747 = vadd.f32 0.0, %v1746
        %v1748 = vpop.f32.mrb[0].mxu0
        %v1749 = vpop.f32.mrb[0].mxu0
        %v1750 = vpop.f32.mrb[0].mxu0
        %1751 = vdwg.mxu0
        %v1752 = vpack.c.bf16 %v1609, %v1609
        %v1753 = vpack.c.bf16 %v1655, %v1655
        %v1754 = vpack.c.bf16 %v1701, %v1701
        %v1755 = vpack.c.bf16 %v1747, %v1747
        %1756 = vst.msk [vmem:[#allocation5] sm:$0xf] %vm1301, %v1752
        %v1758 = vunpack.c.l.b16 %v1753
        %v1759 = vpack.c.b16 %v1758, %v1758
        %1760 = vrot.lane.b32.xlu0 %v1759, 16
        %v1761 = vpop.permute.xlu0 %1760
        %vm1763 = vcmask 257152
        %1764 = vst.msk [vmem:[#allocation5] sm:$0xf] %vm1763, %v1761
        %v1766 = vunpack.c.l.b16 %v1754
        %v1767 = vpack.c.b16 %v1766, %v1766
        %1768 = vrot.lane.b32.xlu0 %v1767, 32
        %v1769 = vpop.permute.xlu0 %1768
        %vm1771 = vcmask 388352
        %1772 = vst.msk [vmem:[#allocation5] sm:$0xf] %vm1771, %v1769
        %v1774 = vunpack.c.l.b16 %v1755
        %v1775 = vpack.c.b16 %v1774, %v1774
        %1776 = vrot.lane.b32.xlu0 %v1775, 48
        %v1777 = vpop.permute.xlu0 %1776
        %vm1779 = vcmask 519552
        %1780 = vst.msk [vmem:[#allocation5] sm:$0xf] %vm1779, %v1777
        %v1781 = vld [vmem:[#allocation5] sm:$0xf]
        %v1782 = vld [vmem:[#allocation17] sm:$0xf]
        %v1783 = vld [vmem:[#allocation17 + $0x4] sm:$0xf]
        %v1784 = vld [vmem:[#allocation17 + $0x8] sm:$0xf]
        %v1785 = vld [vmem:[#allocation17 + $0xc] sm:$0xf]
        %v1786 = vld [vmem:[#allocation17 + $0x10] sm:$0xf]
        %v1787 = vld [vmem:[#allocation17 + $0x14] sm:$0xf]
        %v1788 = vld [vmem:[#allocation17 + $0x18] sm:$0xf]
        %v1789 = vld [vmem:[#allocation17 + $0x1c] sm:$0xf]
        %v1790 = vld [vmem:[#allocation26] sm:$0x1]
        %v1792 = vlaneseq
        %v1793 = vshrl.u32 %v1792, 7
        %v1794 = vsub.s32 0, %v1793
        %v1795 = vrot.slane %v1790, %v1794
        %v1805 = vunpack.c.l.b16 %v1782
        %v1806 = vunpack.c.l.b16 %v1783
        %v1807 = vunpack.c.l.b16 %v1784
        %v1808 = vunpack.c.l.b16 %v1785
        %v1809 = vunpack.c.l.b16 %v1786
        %v1810 = vunpack.c.l.b16 %v1787
        %v1811 = vunpack.c.l.b16 %v1788
        %v1812 = vunpack.c.l.b16 %v1789
        %v1813 = vpack.c.b16 %v1806, %v1805
        %v1814 = vpack.c.b16 %v1808, %v1807
        %v1815 = vpack.c.b16 %v1810, %v1809
        %v1816 = vpack.c.b16 %v1812, %v1811
        %vm1821 = vcmask 523264
        %v1823 = vsel %vm1821, %v1781, 0
        %1825 = vmatprep.subr.bf16.mxu0 0
        %1826 = vmatpush1.bf16.msra.mxu0 %v1813
        %1827 = vmatprep.subr.bf16.mxu0 0
        %1828 = vmatpush1.bf16.msra.mxu0 %v1814
        %1829 = vmatprep.subr.bf16.mxu0 0
        %1830 = vmatpush1.bf16.msra.mxu0 %v1815
        %1831 = vmatprep.subr.bf16.mxu0 0
        %1832 = vmatpush1.bf16.msra.mxu0 %v1816
        %1833 = vmatprep.subr.bf16.mxu0 0
        %1834 = vmatpush1.bf16.msra.mxu0 0
        %1835 = vmatprep.subr.bf16.mxu0 0
        %1836 = vmatpush1.bf16.msra.mxu0 0
        %1837 = vmatprep.subr.bf16.mxu0 0
        %1838 = vmatpush1.bf16.msra.mxu0 0
        %1839 = vmatprep.subr.bf16.mxu0 0
        %1840 = vmatpush1.bf16.msra.mxu0 0
        %1841 = vmatprep.subr.bf16.mxu0 0
        %1842 = vmatpush1.bf16.msra.mxu0 0
        %1843 = vmatprep.subr.bf16.mxu0 0
        %1844 = vmatpush1.bf16.msra.mxu0 0
        %1845 = vmatprep.subr.bf16.mxu0 0
        %1846 = vmatpush1.bf16.msra.mxu0 0
        %1847 = vmatprep.subr.bf16.mxu0 0
        %1848 = vmatpush1.bf16.msra.mxu0 0
        %1849 = vmatprep.subr.bf16.mxu0 0
        %1850 = vmatpush1.bf16.msra.mxu0 0
        %1851 = vmatprep.subr.bf16.mxu0 0
        %1852 = vmatpush1.bf16.msra.mxu0 0
        %1853 = vmatprep.subr.bf16.mxu0 0
        %1854 = vmatpush1.bf16.msra.mxu0 0
        %1855 = vmatprep.subr.bf16.mxu0 0
        %1856 = vmatpush1.bf16.msra.mxu0 0
        %1857 = vmatprep.mubr.bf16.mxu0 0
        %1858 = vmatmul.mubr.bf16.gmra.mrb[0].mxu0 %v1823
        %v1859 = vpop.f32.mrb[0].mxu0
        %v1860 = vadd.f32 %v1795, %v1859
        %v1861 = vpop.f32.mrb[0].mxu0
        %v1862 = vpop.f32.mrb[0].mxu0
        %v1863 = vpop.f32.mrb[0].mxu0
        %1864 = vdwg.mxu0
        %v1865 = vld [vmem:[%s771] sm:$0xf]
        %v1866 = vunpack.c.l.bf16 %v1865
        %v1867 = vadd.f32 %v1860, %v1866
        %v1868 = vld [vmem:[#allocation30] sm:$0x1]
        %v1869 = vld [vmem:[#allocation32] sm:$0x1]
        %1870 = vadd.xlane.f32.xlu0 %v1867
        %v1871 = vpop.xlane.xlu0 %1870
        %v1872 = vmul.f32 %v1871, 0.03125
        %v1873 = vsub.f32 %v1867, %v1872
        %v1874 = vlaneseq
        %v1875 = vand.u32 %v1874, 127
        %vm1876 = vcmp.lt.s32.totalorder %v1875, 32
        %v1877 = vsel %vm1876, 1, 0
        %vm1878 = vcmp.eq.s32.totalorder %v1877, 1
        %v1879 = vsel %vm1878, %v1873, 0.0
        %v1880 = vmul.f32 %v1879, %v1879
        %1881 = vadd.xlane.f32.xlu0 %v1880
        %v1882 = vpop.xlane.xlu0 %1881
        %v1883 = vmul.f32 %v1882, 0.03125
        %v1884 = vadd.f32 %v1883, 1e-05
        %v1885 = vrsqrt.pop %v1884
        %v1886 = vmul.f32 %v1879, %v1885
        %v1888 = vlaneseq
        %v1889 = vshrl.u32 %v1888, 7
        %v1890 = vsub.s32 0, %v1889
        %v1891 = vrot.slane %v1868, %v1890
        %v1893 = vmul.f32 %v1886, %v1891
        %v1895 = vlaneseq
        %v1896 = vshrl.u32 %v1895, 7
        %v1897 = vsub.s32 0, %v1896
        %v1898 = vrot.slane %v1869, %v1897
        %v1900 = vadd.f32 %v1893, %v1898
        %v1901 = vpack.c.bf16 %v1900, %v1900
        %v1902 = vld [vmem:[#allocation18] sm:$0xf]
        %v1903 = vld [vmem:[#allocation18 + $0x4] sm:$0xf]
        %v1904 = vld [vmem:[#allocation18 + $0x8] sm:$0xf]
        %v1905 = vld [vmem:[#allocation18 + $0xc] sm:$0xf]
        %v1906 = vld [vmem:[#allocation18 + $0x10] sm:$0xf]
        %v1907 = vld [vmem:[#allocation18 + $0x14] sm:$0xf]
        %v1908 = vld [vmem:[#allocation18 + $0x18] sm:$0xf]
        %v1909 = vld [vmem:[#allocation18 + $0x1c] sm:$0xf]
        %v1910 = vld [vmem:[#allocation18 + $0x20] sm:$0xf]
        %v1911 = vld [vmem:[#allocation18 + $0x24] sm:$0xf]
        %v1912 = vld [vmem:[#allocation18 + $0x28] sm:$0xf]
        %v1913 = vld [vmem:[#allocation18 + $0x2c] sm:$0xf]
        %v1914 = vld [vmem:[#allocation18 + $0x30] sm:$0xf]
        %v1915 = vld [vmem:[#allocation18 + $0x34] sm:$0xf]
        %v1916 = vld [vmem:[#allocation18 + $0x38] sm:$0xf]
        %v1917 = vld [vmem:[#allocation18 + $0x3c] sm:$0xf]
        %v1918 = vld [vmem:[#allocation27] sm:$0x1]
        %v1920 = vlaneseq
        %v1921 = vshrl.u32 %v1920, 7
        %v1922 = vsub.s32 0, %v1921
        %v1923 = vrot.slane %v1918, %v1922
        %v1941 = vunpack.c.l.b16 %v1902
        %v1942 = vunpack.c.l.b16 %v1903
        %v1943 = vunpack.c.l.b16 %v1904
        %v1944 = vunpack.c.l.b16 %v1905
        %v1945 = vunpack.c.l.b16 %v1906
        %v1946 = vunpack.c.l.b16 %v1907
        %v1947 = vunpack.c.l.b16 %v1908
        %v1948 = vunpack.c.l.b16 %v1909
        %v1949 = vunpack.c.l.b16 %v1910
        %v1950 = vunpack.c.l.b16 %v1911
        %v1951 = vunpack.c.l.b16 %v1912
        %v1952 = vunpack.c.l.b16 %v1913
        %v1953 = vunpack.c.l.b16 %v1914
        %v1954 = vunpack.c.l.b16 %v1915
        %v1955 = vunpack.c.l.b16 %v1916
        %v1956 = vunpack.c.l.b16 %v1917
        %v1957 = vpack.c.b16 %v1942, %v1941
        %v1958 = vpack.c.b16 %v1944, %v1943
        %v1959 = vpack.c.b16 %v1946, %v1945
        %v1960 = vpack.c.b16 %v1948, %v1947
        %v1961 = vpack.c.b16 %v1950, %v1949
        %v1962 = vpack.c.b16 %v1952, %v1951
        %v1963 = vpack.c.b16 %v1954, %v1953
        %v1964 = vpack.c.b16 %v1956, %v1955
        %1973 = vmatprep.subr.bf16.mxu0 0
        %1974 = vmatpush1.bf16.msra.mxu0 %v1957
        %1975 = vmatprep.subr.bf16.mxu0 0
        %1976 = vmatpush1.bf16.msra.mxu0 %v1958
        %1977 = vmatprep.subr.bf16.mxu0 0
        %1978 = vmatpush1.bf16.msra.mxu0 %v1959
        %1979 = vmatprep.subr.bf16.mxu0 0
        %1980 = vmatpush1.bf16.msra.mxu0 %v1960
        %1981 = vmatprep.subr.bf16.mxu0 0
        %1982 = vmatpush1.bf16.msra.mxu0 %v1961
        %1983 = vmatprep.subr.bf16.mxu0 0
        %1984 = vmatpush1.bf16.msra.mxu0 %v1962
        %1985 = vmatprep.subr.bf16.mxu0 0
        %1986 = vmatpush1.bf16.msra.mxu0 %v1963
        %1987 = vmatprep.subr.bf16.mxu0 0
        %1988 = vmatpush1.bf16.msra.mxu0 %v1964
        %1989 = vmatprep.subr.bf16.mxu0 0
        %1990 = vmatpush1.bf16.msra.mxu0 0
        %1991 = vmatprep.subr.bf16.mxu0 0
        %1992 = vmatpush1.bf16.msra.mxu0 0
        %1993 = vmatprep.subr.bf16.mxu0 0
        %1994 = vmatpush1.bf16.msra.mxu0 0
        %1995 = vmatprep.subr.bf16.mxu0 0
        %1996 = vmatpush1.bf16.msra.mxu0 0
        %1997 = vmatprep.subr.bf16.mxu0 0
        %1998 = vmatpush1.bf16.msra.mxu0 0
        %1999 = vmatprep.subr.bf16.mxu0 0
        %2000 = vmatpush1.bf16.msra.mxu0 0
        %2001 = vmatprep.subr.bf16.mxu0 0
        %2002 = vmatpush1.bf16.msra.mxu0 0
        %2003 = vmatprep.subr.bf16.mxu0 0
        %2004 = vmatpush1.bf16.msra.mxu0 0
        %2005 = vmatprep.mubr.bf16.mxu0 0
        %2006 = vmatmul.mubr.bf16.gmra.mrb[0].mxu0 %v1901
        %v2007 = vpop.f32.mrb[0].mxu0
        %v2008 = vadd.f32 %v1923, %v2007
        %v2009 = vpop.f32.mrb[0].mxu0
        %v2010 = vpop.f32.mrb[0].mxu0
        %v2011 = vpop.f32.mrb[0].mxu0
        %2012 = vdwg.mxu0
        %v2013 = vmax.f32 %v2008, 0.0
        %v2014 = vpack.c.bf16 %v2013, %v2013
        %v2015 = vld [vmem:[#allocation20] sm:$0xf]
        %v2016 = vld [vmem:[#allocation20 + $0x4] sm:$0xf]
        %v2017 = vld [vmem:[#allocation20 + $0x8] sm:$0xf]
        %v2018 = vld [vmem:[#allocation20 + $0xc] sm:$0xf]
        %v2019 = vld [vmem:[#allocation20 + $0x10] sm:$0xf]
        %v2020 = vld [vmem:[#allocation20 + $0x14] sm:$0xf]
        %v2021 = vld [vmem:[#allocation20 + $0x18] sm:$0xf]
        %v2022 = vld [vmem:[#allocation20 + $0x1c] sm:$0xf]
        %v2023 = vld [vmem:[#allocation20 + $0x20] sm:$0xf]
        %v2024 = vld [vmem:[#allocation20 + $0x24] sm:$0xf]
        %v2025 = vld [vmem:[#allocation20 + $0x28] sm:$0xf]
        %v2026 = vld [vmem:[#allocation20 + $0x2c] sm:$0xf]
        %v2027 = vld [vmem:[#allocation20 + $0x30] sm:$0xf]
        %v2028 = vld [vmem:[#allocation20 + $0x34] sm:$0xf]
        %v2029 = vld [vmem:[#allocation20 + $0x38] sm:$0xf]
        %v2030 = vld [vmem:[#allocation20 + $0x3c] sm:$0xf]
        %v2031 = vld [vmem:[#allocation29] sm:$0x1]
        %v2033 = vlaneseq
        %v2034 = vshrl.u32 %v2033, 7
        %v2035 = vsub.s32 0, %v2034
        %v2036 = vrot.slane %v2031, %v2035
        %v2054 = vunpack.c.l.b16 %v2015
        %v2055 = vunpack.c.l.b16 %v2016
        %v2056 = vunpack.c.l.b16 %v2017
        %v2057 = vunpack.c.l.b16 %v2018
        %v2058 = vunpack.c.l.b16 %v2019
        %v2059 = vunpack.c.l.b16 %v2020
        %v2060 = vunpack.c.l.b16 %v2021
        %v2061 = vunpack.c.l.b16 %v2022
        %v2062 = vunpack.c.l.b16 %v2023
        %v2063 = vunpack.c.l.b16 %v2024
        %v2064 = vunpack.c.l.b16 %v2025
        %v2065 = vunpack.c.l.b16 %v2026
        %v2066 = vunpack.c.l.b16 %v2027
        %v2067 = vunpack.c.l.b16 %v2028
        %v2068 = vunpack.c.l.b16 %v2029
        %v2069 = vunpack.c.l.b16 %v2030
        %v2070 = vpack.c.b16 %v2055, %v2054
        %v2071 = vpack.c.b16 %v2057, %v2056
        %v2072 = vpack.c.b16 %v2059, %v2058
        %v2073 = vpack.c.b16 %v2061, %v2060
        %v2074 = vpack.c.b16 %v2063, %v2062
        %v2075 = vpack.c.b16 %v2065, %v2064
        %v2076 = vpack.c.b16 %v2067, %v2066
        %v2077 = vpack.c.b16 %v2069, %v2068
        %2086 = vmatprep.subr.bf16.mxu0 0
        %2087 = vmatpush1.bf16.msra.mxu0 %v2070
        %2088 = vmatprep.subr.bf16.mxu0 0
        %2089 = vmatpush1.bf16.msra.mxu0 %v2071
        %2090 = vmatprep.subr.bf16.mxu0 0
        %2091 = vmatpush1.bf16.msra.mxu0 %v2072
        %2092 = vmatprep.subr.bf16.mxu0 0
        %2093 = vmatpush1.bf16.msra.mxu0 %v2073
        %2094 = vmatprep.subr.bf16.mxu0 0
        %2095 = vmatpush1.bf16.msra.mxu0 %v2074
        %2096 = vmatprep.subr.bf16.mxu0 0
        %2097 = vmatpush1.bf16.msra.mxu0 %v2075
        %2098 = vmatprep.subr.bf16.mxu0 0
        %2099 = vmatpush1.bf16.msra.mxu0 %v2076
        %2100 = vmatprep.subr.bf16.mxu0 0
        %2101 = vmatpush1.bf16.msra.mxu0 %v2077
        %2102 = vmatprep.subr.bf16.mxu0 0
        %2103 = vmatpush1.bf16.msra.mxu0 0
        %2104 = vmatprep.subr.bf16.mxu0 0
        %2105 = vmatpush1.bf16.msra.mxu0 0
        %2106 = vmatprep.subr.bf16.mxu0 0
        %2107 = vmatpush1.bf16.msra.mxu0 0
        %2108 = vmatprep.subr.bf16.mxu0 0
        %2109 = vmatpush1.bf16.msra.mxu0 0
        %2110 = vmatprep.subr.bf16.mxu0 0
        %2111 = vmatpush1.bf16.msra.mxu0 0
        %2112 = vmatprep.subr.bf16.mxu0 0
        %2113 = vmatpush1.bf16.msra.mxu0 0
        %2114 = vmatprep.subr.bf16.mxu0 0
        %2115 = vmatpush1.bf16.msra.mxu0 0
        %2116 = vmatprep.subr.bf16.mxu0 0
        %2117 = vmatpush1.bf16.msra.mxu0 0
        %2118 = vmatprep.mubr.bf16.mxu0 0
        %2119 = vmatmul.mubr.bf16.gmra.mrb[0].mxu0 %v2014
        %v2120 = vpop.f32.mrb[0].mxu0
        %v2121 = vadd.f32 %v2036, %v2120
        %v2122 = vpop.f32.mrb[0].mxu0
        %v2123 = vpop.f32.mrb[0].mxu0
        %v2124 = vpop.f32.mrb[0].mxu0
        %2125 = vdwg.mxu0
        %v2126 = vadd.f32 %v2121, %v1900
        %v2127 = vld [vmem:[#allocation33] sm:$0x1]
        %v2128 = vld [vmem:[#allocation35] sm:$0x1]
        %2129 = vadd.xlane.f32.xlu0 %v2126
        %v2130 = vpop.xlane.xlu0 %2129
        %v2131 = vmul.f32 %v2130, 0.03125
        %v2132 = vsub.f32 %v2126, %v2131
        %v2133 = vsel %vm1878, %v2132, 0.0
        %v2134 = vmul.f32 %v2133, %v2133
        %2135 = vadd.xlane.f32.xlu0 %v2134
        %v2136 = vpop.xlane.xlu0 %2135
        %v2137 = vmul.f32 %v2136, 0.03125
        %v2138 = vadd.f32 %v2137, 1e-05
        %v2139 = vrsqrt.pop %v2138
        %v2140 = vmul.f32 %v2133, %v2139
        %v2142 = vlaneseq
        %v2143 = vshrl.u32 %v2142, 7
        %v2144 = vsub.s32 0, %v2143
        %v2145 = vrot.slane %v2127, %v2144
        %v2147 = vmul.f32 %v2140, %v2145
        %v2149 = vlaneseq
        %v2150 = vshrl.u32 %v2149, 7
        %v2151 = vsub.s32 0, %v2150
        %v2152 = vrot.slane %v2128, %v2151
        %v2154 = vadd.f32 %v2147, %v2152
        %2155 = vst [vmem:[%s917] sm:$0xff] %v2154
        %s2156 = sand.u32 %s485, 1
        %s2157 = scalar_lea.sflag [#allocation8], %s2156
        %s2158 = sand.u32 %s485, 1
        %s2159 = smul.addr %s2158, 8
        %s2160 = scalar_lea.vmem [#allocation36], %s2159
        // Predicated region
        $region177: #{tpu_custom_call.1} parent=95 // pred_check
          %p2161 = pneg %p495
        $region178: #{tpu_custom_call.1} parent=95 // pred_check_branch
          %2163 = sbr.rel (%p2161) target = $region180
        $region179: #{tpu_custom_call.1} parent=95 // pred_region
          %s2165 = ssub.s32 128, 128
          %2166 = vsyncadd %s2157, %s2165
          %s2167 = sadd.s32 %s52, %s51
          %s2168 = smul.addr %s2167, 128
          %s2169 = scalar_lea.hbm %s19, %s2168
          %s2171 = sshll.u32 %s2160, 4
          %s2172 = int_to_ptr.vmem [resolvable:$true] %s2171
          %2174 = dma.vmem_to_hbm [thread:$0]  %s2172, 128, %s2169, %s2157
        $region180: #{tpu_custom_call.1} parent=95 // pred_fallthru
          _
      $region96: #{tpu_custom_call.1} parent=5 // pred_fallthru
        _
      %p2175 = scmp.le.s32.totalorder 2, %s42
      // Predicated region
      $region181: #{tpu_custom_call.1} parent=5 // pred_check
        %p2176 = pneg %p2175
      $region182: #{tpu_custom_call.1} parent=5 // pred_check_branch
        %2178 = sbr.rel (%p2176) target = $region184
      $region183: #{tpu_custom_call.1} parent=5 // pred_region
        %s2179 = ssub.s32 %s42, 2
        // Predicated region
        $region185: #{tpu_custom_call.1} parent=183 // pred_check
          %p2180 = pneg %p501
        $region186: #{tpu_custom_call.1} parent=183 // pred_check_branch
          %2182 = sbr.rel (%p2180) target = $region188
        $region187: #{tpu_custom_call.1} parent=183 // pred_region
          %s2183 = sand.u32 %s486, 1
          %s2184 = scalar_lea.sflag [#allocation8], %s2183
          %s2185 = sand.u32 %s486, 1
          %s2186 = smul.addr %s2185, 8
          %s2187 = scalar_lea.vmem [#allocation36], %s2186
          %2188 = dma.done %s2184, 128
        $region188: #{tpu_custom_call.1} parent=183 // pred_fallthru
          _
      $region184: #{tpu_custom_call.1} parent=5 // pred_fallthru
        _
    $region6: #{tpu_custom_call.1} parent=1 // loop_footer
      %s46 = sadd.s32 1, %s42
    $region7: #{tpu_custom_call.1} parent=1 // loop_footer_branch
      %41 = sbr.rel target = $region3
    $region8: #{tpu_custom_call.1} parent=1 // loop_exit
      _
    %2189 = vsyncpa [#allocation7], 1
    %s2190 = scalar_lea.sflag [#allocation7], 1
    %2191 = vsyncpa %s2190, 1
    %2192 = vsyncpa [#allocation10], 1
    %s2193 = scalar_lea.sflag [#allocation10], 1
    %2194 = vsyncpa %s2193, 1
    %2195 = vsyncpa [#allocation13], 1
    %2196 = vsyncpa [#allocation16], 1
    %2197 = vsyncpa [#allocation19], 1
    %2198 = vsyncpa [#allocation22], 1
    %2199 = vsyncpa [#allocation25], 1
    %2200 = vsyncpa [#allocation28], 1
    %2201 = vsyncpa [#allocation31], 1
    %2202 = vsyncpa [#allocation34], 1
    %2203 = vsyncpa [#allocation8], 1
    %s2204 = scalar_lea.sflag [#allocation8], 1
    %2205 = vsyncpa %s2204, 1

// kernel: tpu_custom_call.1
$region0: #{tpu_custom_call.1}
  #allocation0 [shape = 'u32[]', space=smem, size = 0x4, offset = 0x4, fixed_abs, tag = 'smem constant byte address 0x4 - core index']
  #allocation1 [shape = 'u32[144,128]{1,0:T(1,128)}', space=vmem, size = 0x12000, scoped, tag = 'internal scratch']
  #allocation2 [shape = 'bf16[4,8,16]{2,1,0:T(8,128)(2,1)}', space=vmem, size = 0x2000, scoped, tag = 'scratch operand']
  #allocation3 [shape = 'bf16[4,8,16]{2,1,0:T(8,128)(2,1)}', space=vmem, size = 0x2000, scoped, tag = 'scratch operand']
  #allocation4 [shape = 'bf16[4,8,16]{2,1,0:T(8,128)(2,1)}', space=vmem, size = 0x2000, scoped, tag = 'scratch operand']
  #allocation5 [shape = 'bf16[8,64]{1,0:T(8,128)(2,1)}', space=vmem, size = 0x800, scoped, tag = 'scratch operand']
  %s0 = inlined_call_operand.hbm [shape: bf16[2,8,128], index: 0, kind: input, shape index: {}]
  %s1 = inlined_call_operand.hbm [shape: bf16[2,8,128], index: 1, kind: input, shape index: {}]
  %s2 = inlined_call_operand.hbm [shape: bf16[2,8,128], index: 2, kind: input, shape index: {}]
  %s3 = inlined_call_operand.hbm [shape: bf16[128,64], index: 3, kind: input, shape index: {}]
  %s4 = inlined_call_operand.hbm [shape: bf16[128,64], index: 4, kind: input, shape index: {}]
  %s5 = inlined_call_operand.hbm [shape: bf16[128,64], index: 5, kind: input, shape index: {}]
  %s6 = inlined_call_operand.hbm [shape: bf16[64,128], index: 6, kind: input, shape index: {}]
  %s7 = inlined_call_operand.hbm [shape: bf16[128,128], index: 7, kind: input, shape index: {}]
  %s8 = inlined_call_operand.hbm [shape: bf16[128,128], index: 8, kind: input, shape index: {}]
  %s9 = inlined_call_operand.hbm [shape: f32[1,64], index: 9, kind: input, shape index: {}]
  %s10 = inlined_call_operand.hbm [shape: f32[1,64], index: 10, kind: input, shape index: {}]
  %s11 = inlined_call_operand.hbm [shape: f32[1,64], index: 11, kind: input, shape index: {}]
  %s12 = inlined_call_operand.hbm [shape: f32[1,128], index: 12, kind: input, shape index: {}]
  %s13 = inlined_call_operand.hbm [shape: f32[1,128], index: 13, kind: input, shape index: {}]
  %s14 = inlined_call_operand.hbm [shape: f32[1,128], index: 14, kind: input, shape index: {}]
  %s15 = inlined_call_operand.hbm [shape: f32[1,128], index: 15, kind: input, shape index: {}]
  %s16 = inlined_call_operand.hbm [shape: f32[1,128], index: 16, kind: input, shape index: {}]
  %s17 = inlined_call_operand.hbm [shape: f32[1,128], index: 17, kind: input, shape index: {}]
  %s18 = inlined_call_operand.hbm [shape: f32[1,128], index: 18, kind: input, shape index: {}]
  %s19 = inlined_call_operand.hbm [shape: f32[2,8,128], index: 19, kind: output, shape index: {}]
  %s20 = sld [smem:[#allocation0]]
  $region189: #{tpu_custom_call.1} parent=0
    _
  %s22 = ssub.s32 1, %s20
  %s23 = scalar_select 0, %s22, %s20
  $region1: #{tpu_custom_call.1} parent=0
    #allocation6 [shape = 'u8[4096]{0}', space=vmem, size = 0x1000, scoped, tag = 'input window, operand 0']
    #allocation7 [shape = 's32[2]{0}', space=sflag, size = 0x8, scoped, tag = 'scoped memory for tpu_custom_call.1']
    #allocation8 [shape = 's32[2]{0}', space=sflag, size = 0x8, scoped, tag = 'scoped memory for tpu_custom_call.1']
    #allocation9 [shape = 'u8[4096]{0}', space=vmem, size = 0x1000, scoped, tag = 'input window, operand 1']
    #allocation10 [shape = 's32[2]{0}', space=sflag, size = 0x8, scoped, tag = 'scoped memory for tpu_custom_call.1']
    #allocation11 [shape = 'u8[4096]{0}', space=vmem, size = 0x1000, scoped, tag = 'input window, operand 2']
    #allocation12 [shape = 'u8[32768]{0}', space=vmem, size = 0x8000, scoped, tag = 'input window, operand 3, single buffered']
    #allocation13 [shape = 's32[1]{0}', space=sflag, size = 0x4, scoped, tag = 'scoped memory for tpu_custom_call.1']
    #allocation14 [shape = 'u8[32768]{0}', space=vmem, size = 0x8000, scoped, tag = 'input window, operand 4, single buffered']
    #allocation15 [shape = 'u8[32768]{0}', space=vmem, size = 0x8000, scoped, tag = 'input window, operand 5, single buffered']
    #allocation16 [shape = 's32[1]{0}', space=sflag, size = 0x4, scoped, tag = 'scoped memory for tpu_custom_call.1']
    #allocation17 [shape = 'u8[16384]{0}', space=vmem, size = 0x4000, scoped, tag = 'input window, operand 6, single buffered']
    #allocation18 [shape = 'u8[32768]{0}', space=vmem, size = 0x8000, scoped, tag = 'input window, operand 7, single buffered']
    #allocation19 [shape = 's32[1]{0}', space=sflag, size = 0x4, scoped, tag = 'scoped memory for tpu_custom_call.1']
    #allocation20 [shape = 'u8[32768]{0}', space=vmem, size = 0x8000, scoped, tag = 'input window, operand 8, single buffered']
    #allocation21 [shape = 'u8[512]{0}', space=vmem, size = 0x400, scoped, tag = 'input window, operand 9, single buffered']
    #allocation22 [shape = 's32[1]{0}', space=sflag, size = 0x4, scoped, tag = 'scoped memory for tpu_custom_call.1']
    #allocation23 [shape = 'u8[512]{0}', space=vmem, size = 0x400, scoped, tag = 'input window, operand 10, single buffered']
    #allocation24 [shape = 'u8[512]{0}', space=vmem, size = 0x400, scoped, tag = 'input window, operand 11, single buffered']
    #allocation25 [shape = 's32[1]{0}', space=sflag, size = 0x4, scoped, tag = 'scoped memory for tpu_custom_call.1']
    #allocation26 [shape = 'u8[512]{0}', space=vmem, size = 0x400, scoped, tag = 'input window, operand 12, single buffered']
    #allocation27 [shape = 'u8[512]{0}', space=vmem, size = 0x400, scoped, tag = 'input window, operand 13, single buffered']
    #allocation28 [shape = 's32[1]{0}', space=sflag, size = 0x4, scoped, tag = 'scoped memory for tpu_custom_call.1']
    #allocation29 [shape = 'u8[512]{0}', space=vmem, size = 0x400, scoped, tag = 'input window, operand 14, single buffered']
    #allocation30 [shape = 'u8[512]{0}', space=vmem, size = 0x400, scoped, tag = 'input window, operand 15, single buffered']
    #allocation31 [shape = 's32[1]{0}', space=sflag, size = 0x4, scoped, tag = 'scoped memory for tpu_custom_call.1']
    #allocation32 [shape = 'u8[512]{0}', space=vmem, size = 0x400, scoped, tag = 'input window, operand 16, single buffered']
    #allocation33 [shape = 'u8[512]{0}', space=vmem, size = 0x400, scoped, tag = 'input window, operand 17, single buffered']
    #allocation34 [shape = 's32[1]{0}', space=sflag, size = 0x4, scoped, tag = 'scoped memory for tpu_custom_call.1']
    #allocation35 [shape = 'u8[512]{0}', space=vmem, size = 0x400, scoped, tag = 'input window, operand 18, single buffered']
    #allocation36 [shape = 'u8[8192]{0}', space=vmem, size = 0x2000, scoped, tag = 'output window, operand 0']
    %24 = vsyncpa [#allocation7], 0
    %s25 = scalar_lea.sflag [#allocation7], 1
    %26 = vsyncpa %s25, 0
    %27 = vsyncpa [#allocation10], 0
    %s28 = scalar_lea.sflag [#allocation10], 1
    %29 = vsyncpa %s28, 0
    %30 = vsyncpa [#allocation13], 0
    %31 = vsyncpa [#allocation16], 0
    %32 = vsyncpa [#allocation19], 0
    %33 = vsyncpa [#allocation22], 0
    %34 = vsyncpa [#allocation25], 0
    %35 = vsyncpa [#allocation28], 0
    %36 = vsyncpa [#allocation31], 0
    %37 = vsyncpa [#allocation34], 0
    %38 = vsyncpa [#allocation8], 0
    %s39 = scalar_lea.sflag [#allocation8], 1
    %40 = vsyncpa %s39, 0
    loop: start=0, step=1, limit=4
    $region2: #{tpu_custom_call.1} parent=1 // loop_pre_header
      _
    $region3: #{tpu_custom_call.1} parent=1 // loop_header
      %s42 = sphi 0, %s46
      %p43 = scmp.ge.s32.totalorder %s42, 4
      %s49 = sphi 0, %s61
      %s50 = sphi 0, %s57
      %s51 = sphi 0, %s49
      %s52 = sphi 0, %s50
      %s53 = sphi 0, %s51
      %s54 = sphi 0, %s52
      %s66 = sphi 0, %s68
      %s69 = sphi 0, %s66
      %s70 = sphi 0, %s69
      %s86 = sphi 0, %s70
      %s92 = sphi 0, %s94
      %s95 = sphi 0, %s92
      %s96 = sphi 0, %s95
      %s112 = sphi 0, %s96
      %s118 = sphi 0, %s120
      %s121 = sphi 0, %s118
      %s122 = sphi 0, %s121
      %s138 = sphi 0, %s122
      %s142 = sphi 0, %s142
      %s144 = sphi 0, %s142
      %s145 = sphi 0, %s144
      %s159 = sphi 0, %s145
      %s163 = sphi 0, %s163
      %s165 = sphi 0, %s163
      %s166 = sphi 0, %s165
      %s180 = sphi 0, %s166
      %s184 = sphi 0, %s184
      %s186 = sphi 0, %s184
      %s187 = sphi 0, %s186
      %s201 = sphi 0, %s187
      %s205 = sphi 0, %s205
      %s207 = sphi 0, %s205
      %s208 = sphi 0, %s207
      %s222 = sphi 0, %s208
      %s226 = sphi 0, %s226
      %s228 = sphi 0, %s226
      %s229 = sphi 0, %s228
      %s243 = sphi 0, %s229
      %s247 = sphi 0, %s247
      %s249 = sphi 0, %s247
      %s250 = sphi 0, %s249
      %s264 = sphi 0, %s250
      %s268 = sphi 0, %s268
      %s270 = sphi 0, %s268
      %s271 = sphi 0, %s270
      %s285 = sphi 0, %s271
      %s289 = sphi 0, %s289
      %s291 = sphi 0, %s289
      %s292 = sphi 0, %s291
      %s306 = sphi 0, %s292
      %s310 = sphi 0, %s310
      %s312 = sphi 0, %s310
      %s313 = sphi 0, %s312
      %s327 = sphi 0, %s313
      %s331 = sphi 0, %s331
      %s333 = sphi 0, %s331
      %s334 = sphi 0, %s333
      %s348 = sphi 0, %s334
      %s352 = sphi 0, %s352
      %s354 = sphi 0, %s352
      %s355 = sphi 0, %s354
      %s369 = sphi 0, %s355
      %s373 = sphi 0, %s373
      %s375 = sphi 0, %s373
      %s376 = sphi 0, %s375
      %s390 = sphi 0, %s376
      %s394 = sphi 0, %s394
      %s396 = sphi 0, %s394
      %s397 = sphi 0, %s396
      %s411 = sphi 0, %s397
      %s415 = sphi 0, %s415
      %s417 = sphi 0, %s415
      %s418 = sphi 0, %s417
      %s432 = sphi 0, %s418
      %s436 = sphi 0, %s436
      %s438 = sphi 0, %s436
      %s439 = sphi 0, %s438
      %s453 = sphi 0, %s439
      %s457 = sphi 0, %s457
      %s459 = sphi 0, %s457
      %s460 = sphi 0, %s459
      %s474 = sphi 0, %s460
      %s482 = sphi 0, %s484
      %s485 = sphi 0, %s482
      %s486 = sphi 0, %s485
      %s502 = sphi 0, %s486
    $region4: #{tpu_custom_call.1} parent=1 // loop_header_branch
      %45 = sbr.rel (%p43) target = $region8
    $region5: #{tpu_custom_call.1} parent=1 // loop_body
      %s47 = ssub.s32 %s42, 1
      %s48 = ssub.s32 %s42, 2
      %s55 = sadd.s32 1, %s50
      %p56 = scmp.ge.s32.totalorder %s55, 1
      %s57 = scalar_select %p56, 0, %s55
      %s58 = sadd.s32 1, %s49
      %s59 = scalar_select %p56, %s58, %s49
      %p60 = scmp.ge.s32.totalorder %s59, 2
      %s61 = scalar_select %p60, 0, %s59
      %s62 = ssub.s32 %s49, %s61
      %s63 = ssub.s32 %s50, %s57
      %s64 = sor.u32 %s62, %s63
      %p65 = scmp.eq.s32.totalorder %s64, 0
      %s67 = sadd.s32 %s66, 1
      %s68 = scalar_select %p65, %s66, %s67
      %p71 = pneg %p65
      %p72 = scmp.eq.s32.totalorder %s42, 1
      %p73 = por %p71, %p72
      %p74 = scmp.ne.s32.totalorder %s66, %s69
      %p75 = scmp.eq.s32.totalorder %s42, 0
      %p76 = por %p74, %p75
      %p77 = scmp.ne.s32.totalorder %s66, %s69
      %p78 = scmp.eq.s32.totalorder %s47, 1
      %p79 = por %p77, %p78
      %p80 = scmp.ne.s32.totalorder %s69, %s70
      %p81 = scmp.eq.s32.totalorder %s47, 0
      %p82 = por %p80, %p81
      %p83 = scmp.ne.s32.totalorder %s69, %s70
      %p84 = scmp.eq.s32.totalorder %s48, 1
      %p85 = por %p83, %p84
      %p87 = scmp.ne.s32.totalorder %s70, %s86
      %p88 = scmp.eq.s32.totalorder %s48, 0
      %p89 = por %p87, %p88
      %s90 = ssub.s32 %s49, %s61
      %p91 = scmp.eq.s32.totalorder %s90, 0
      %s93 = sadd.s32 %s92, 1
      %s94 = scalar_select %p91, %s92, %s93
      %p97 = pneg %p91
      %p98 = scmp.eq.s32.totalorder %s42, 1
      %p99 = por %p97, %p98
      %p100 = scmp.ne.s32.totalorder %s92, %s95
      %p101 = scmp.eq.s32.totalorder %s42, 0
      %p102 = por %p100, %p101
      %p103 = scmp.ne.s32.totalorder %s92, %s95
      %p104 = scmp.eq.s32.totalorder %s47, 1
      %p105 = por %p103, %p104
      %p106 = scmp.ne.s32.totalorder %s95, %s96
      %p107 = scmp.eq.s32.totalorder %s47, 0
      %p108 = por %p106, %p107
      %p109 = scmp.ne.s32.totalorder %s95, %s96
      %p110 = scmp.eq.s32.totalorder %s48, 1
      %p111 = por %p109, %p110
      %p113 = scmp.ne.s32.totalorder %s96, %s112
      %p114 = scmp.eq.s32.totalorder %s48, 0
      %p115 = por %p113, %p114
      %s116 = ssub.s32 %s49, %s61
      %p117 = scmp.eq.s32.totalorder %s116, 0
      %s119 = sadd.s32 %s118, 1
      %s120 = scalar_select %p117, %s118, %s119
      %p123 = pneg %p117
      %p124 = scmp.eq.s32.totalorder %s42, 1
      %p125 = por %p123, %p124
      %p126 = scmp.ne.s32.totalorder %s118, %s121
      %p127 = scmp.eq.s32.totalorder %s42, 0
      %p128 = por %p126, %p127
      %p129 = scmp.ne.s32.totalorder %s118, %s121
      %p130 = scmp.eq.s32.totalorder %s47, 1
      %p131 = por %p129, %p130
      %p132 = scmp.ne.s32.totalorder %s121, %s122
      %p133 = scmp.eq.s32.totalorder %s47, 0
      %p134 = por %p132, %p133
      %p135 = scmp.ne.s32.totalorder %s121, %s122
      %p136 = scmp.eq.s32.totalorder %s48, 1
      %p137 = por %p135, %p136
      %p139 = scmp.ne.s32.totalorder %s122, %s138
      %p140 = scmp.eq.s32.totalorder %s48, 0
      %p141 = por %p139, %p140
      %s143 = sadd.s32 %s142, 1
      %p146 = scmp.eq.s32.totalorder %s42, 1
      %p147 = scmp.ne.s32.totalorder %s142, %s144
      %p148 = scmp.eq.s32.totalorder %s42, 0
      %p149 = por %p147, %p148
      %p150 = scmp.ne.s32.totalorder %s142, %s144
      %p151 = scmp.eq.s32.totalorder %s47, 1
      %p152 = por %p150, %p151
      %p153 = scmp.ne.s32.totalorder %s144, %s145
      %p154 = scmp.eq.s32.totalorder %s47, 0
      %p155 = por %p153, %p154
      %p156 = scmp.ne.s32.totalorder %s144, %s145
      %p157 = scmp.eq.s32.totalorder %s48, 1
      %p158 = por %p156, %p157
      %p160 = scmp.ne.s32.totalorder %s145, %s159
      %p161 = scmp.eq.s32.totalorder %s48, 0
      %p162 = por %p160, %p161
      %s164 = sadd.s32 %s163, 1
      %p167 = scmp.eq.s32.totalorder %s42, 1
      %p168 = scmp.ne.s32.totalorder %s163, %s165
      %p169 = scmp.eq.s32.totalorder %s42, 0
      %p170 = por %p168, %p169
      %p171 = scmp.ne.s32.totalorder %s163, %s165
      %p172 = scmp.eq.s32.totalorder %s47, 1
      %p173 = por %p171, %p172
      %p174 = scmp.ne.s32.totalorder %s165, %s166
      %p175 = scmp.eq.s32.totalorder %s47, 0
      %p176 = por %p174, %p175
      %p177 = scmp.ne.s32.totalorder %s165, %s166
      %p178 = scmp.eq.s32.totalorder %s48, 1
      %p179 = por %p177, %p178
      %p181 = scmp.ne.s32.totalorder %s166, %s180
      %p182 = scmp.eq.s32.totalorder %s48, 0
      %p183 = por %p181, %p182
      %s185 = sadd.s32 %s184, 1
      %p188 = scmp.eq.s32.totalorder %s42, 1
      %p189 = scmp.ne.s32.totalorder %s184, %s186
      %p190 = scmp.eq.s32.totalorder %s42, 0
      %p191 = por %p189, %p190
      %p192 = scmp.ne.s32.totalorder %s184, %s186
      %p193 = scmp.eq.s32.totalorder %s47, 1
      %p194 = por %p192, %p193
      %p195 = scmp.ne.s32.totalorder %s186, %s187
      %p196 = scmp.eq.s32.totalorder %s47, 0
      %p197 = por %p195, %p196
      %p198 = scmp.ne.s32.totalorder %s186, %s187
      %p199 = scmp.eq.s32.totalorder %s48, 1
      %p200 = por %p198, %p199
      %p202 = scmp.ne.s32.totalorder %s187, %s201
      %p203 = scmp.eq.s32.totalorder %s48, 0
      %p204 = por %p202, %p203
      %s206 = sadd.s32 %s205, 1
      %p209 = scmp.eq.s32.totalorder %s42, 1
      %p210 = scmp.ne.s32.totalorder %s205, %s207
      %p211 = scmp.eq.s32.totalorder %s42, 0
      %p212 = por %p210, %p211
      %p213 = scmp.ne.s32.totalorder %s205, %s207
      %p214 = scmp.eq.s32.totalorder %s47, 1
      %p215 = por %p213, %p214
      %p216 = scmp.ne.s32.totalorder %s207, %s208
      %p217 = scmp.eq.s32.totalorder %s47, 0
      %p218 = por %p216, %p217
      %p219 = scmp.ne.s32.totalorder %s207, %s208
      %p220 = scmp.eq.s32.totalorder %s48, 1
      %p221 = por %p219, %p220
      %p223 = scmp.ne.s32.totalorder %s208, %s222
      %p224 = scmp.eq.s32.totalorder %s48, 0
      %p225 = por %p223, %p224
      %s227 = sadd.s32 %s226, 1
      %p230 = scmp.eq.s32.totalorder %s42, 1
      %p231 = scmp.ne.s32.totalorder %s226, %s228
      %p232 = scmp.eq.s32.totalorder %s42, 0
      %p233 = por %p231, %p232
      %p234 = scmp.ne.s32.totalorder %s226, %s228
      %p235 = scmp.eq.s32.totalorder %s47, 1
      %p236 = por %p234, %p235
      %p237 = scmp.ne.s32.totalorder %s228, %s229
      %p238 = scmp.eq.s32.totalorder %s47, 0
      %p239 = por %p237, %p238
      %p240 = scmp.ne.s32.totalorder %s228, %s229
      %p241 = scmp.eq.s32.totalorder %s48, 1
      %p242 = por %p240, %p241
      %p244 = scmp.ne.s32.totalorder %s229, %s243
      %p245 = scmp.eq.s32.totalorder %s48, 0
      %p246 = por %p244, %p245
      %s248 = sadd.s32 %s247, 1
      %p251 = scmp.eq.s32.totalorder %s42, 1
      %p252 = scmp.ne.s32.totalorder %s247, %s249
      %p253 = scmp.eq.s32.totalorder %s42, 0
      %p254 = por %p252, %p253
      %p255 = scmp.ne.s32.totalorder %s247, %s249
      %p256 = scmp.eq.s32.totalorder %s47, 1
      %p257 = por %p255, %p256
      %p258 = scmp.ne.s32.totalorder %s249, %s250
      %p259 = scmp.eq.s32.totalorder %s47, 0
      %p260 = por %p258, %p259
      %p261 = scmp.ne.s32.totalorder %s249, %s250
      %p262 = scmp.eq.s32.totalorder %s48, 1
      %p263 = por %p261, %p262
      %p265 = scmp.ne.s32.totalorder %s250, %s264
      %p266 = scmp.eq.s32.totalorder %s48, 0
      %p267 = por %p265, %p266
      %s269 = sadd.s32 %s268, 1
      %p272 = scmp.eq.s32.totalorder %s42, 1
      %p273 = scmp.ne.s32.totalorder %s268, %s270
      %p274 = scmp.eq.s32.totalorder %s42, 0
      %p275 = por %p273, %p274
      %p276 = scmp.ne.s32.totalorder %s268, %s270
      %p277 = scmp.eq.s32.totalorder %s47, 1
      %p278 = por %p276, %p277
      %p279 = scmp.ne.s32.totalorder %s270, %s271
      %p280 = scmp.eq.s32.totalorder %s47, 0
      %p281 = por %p279, %p280
      %p282 = scmp.ne.s32.totalorder %s270, %s271
      %p283 = scmp.eq.s32.totalorder %s48, 1
      %p284 = por %p282, %p283
      %p286 = scmp.ne.s32.totalorder %s271, %s285
      %p287 = scmp.eq.s32.totalorder %s48, 0
      %p288 = por %p286, %p287
      %s290 = sadd.s32 %s289, 1
      %p293 = scmp.eq.s32.totalorder %s42, 1
      %p294 = scmp.ne.s32.totalorder %s289, %s291
      %p295 = scmp.eq.s32.totalorder %s42, 0
      %p296 = por %p294, %p295
      %p297 = scmp.ne.s32.totalorder %s289, %s291
      %p298 = scmp.eq.s32.totalorder %s47, 1
      %p299 = por %p297, %p298
      %p300 = scmp.ne.s32.totalorder %s291, %s292
      %p301 = scmp.eq.s32.totalorder %s47, 0
      %p302 = por %p300, %p301
      %p303 = scmp.ne.s32.totalorder %s291, %s292
      %p304 = scmp.eq.s32.totalorder %s48, 1
      %p305 = por %p303, %p304
      %p307 = scmp.ne.s32.totalorder %s292, %s306
      %p308 = scmp.eq.s32.totalorder %s48, 0
      %p309 = por %p307, %p308
      %s311 = sadd.s32 %s310, 1
      %p314 = scmp.eq.s32.totalorder %s42, 1
      %p315 = scmp.ne.s32.totalorder %s310, %s312
      %p316 = scmp.eq.s32.totalorder %s42, 0
      %p317 = por %p315, %p316
      %p318 = scmp.ne.s32.totalorder %s310, %s312
      %p319 = scmp.eq.s32.totalorder %s47, 1
      %p320 = por %p318, %p319
      %p321 = scmp.ne.s32.totalorder %s312, %s313
      %p322 = scmp.eq.s32.totalorder %s47, 0
      %p323 = por %p321, %p322
      %p324 = scmp.ne.s32.totalorder %s312, %s313
      %p325 = scmp.eq.s32.totalorder %s48, 1
      %p326 = por %p324, %p325
      %p328 = scmp.ne.s32.totalorder %s313, %s327
      %p329 = scmp.eq.s32.totalorder %s48, 0
      %p330 = por %p328, %p329
      %s332 = sadd.s32 %s331, 1
      %p335 = scmp.eq.s32.totalorder %s42, 1
      %p336 = scmp.ne.s32.totalorder %s331, %s333
      %p337 = scmp.eq.s32.totalorder %s42, 0
      %p338 = por %p336, %p337
      %p339 = scmp.ne.s32.totalorder %s331, %s333
      %p340 = scmp.eq.s32.totalorder %s47, 1
      %p341 = por %p339, %p340
      %p342 = scmp.ne.s32.totalorder %s333, %s334
      %p343 = scmp.eq.s32.totalorder %s47, 0
      %p344 = por %p342, %p343
      %p345 = scmp.ne.s32.totalorder %s333, %s334
      %p346 = scmp.eq.s32.totalorder %s48, 1
      %p347 = por %p345, %p346
      %p349 = scmp.ne.s32.totalorder %s334, %s348
      %p350 = scmp.eq.s32.totalorder %s48, 0
      %p351 = por %p349, %p350
      %s353 = sadd.s32 %s352, 1
      %p356 = scmp.eq.s32.totalorder %s42, 1
      %p357 = scmp.ne.s32.totalorder %s352, %s354
      %p358 = scmp.eq.s32.totalorder %s42, 0
      %p359 = por %p357, %p358
      %p360 = scmp.ne.s32.totalorder %s352, %s354
      %p361 = scmp.eq.s32.totalorder %s47, 1
      %p362 = por %p360, %p361
      %p363 = scmp.ne.s32.totalorder %s354, %s355
      %p364 = scmp.eq.s32.totalorder %s47, 0
      %p365 = por %p363, %p364
      %p366 = scmp.ne.s32.totalorder %s354, %s355
      %p367 = scmp.eq.s32.totalorder %s48, 1
      %p368 = por %p366, %p367
      %p370 = scmp.ne.s32.totalorder %s355, %s369
      %p371 = scmp.eq.s32.totalorder %s48, 0
      %p372 = por %p370, %p371
      %s374 = sadd.s32 %s373, 1
      %p377 = scmp.eq.s32.totalorder %s42, 1
      %p378 = scmp.ne.s32.totalorder %s373, %s375
      %p379 = scmp.eq.s32.totalorder %s42, 0
      %p380 = por %p378, %p379
      %p381 = scmp.ne.s32.totalorder %s373, %s375
      %p382 = scmp.eq.s32.totalorder %s47, 1
      %p383 = por %p381, %p382
      %p384 = scmp.ne.s32.totalorder %s375, %s376
      %p385 = scmp.eq.s32.totalorder %s47, 0
      %p386 = por %p384, %p385
      %p387 = scmp.ne.s32.totalorder %s375, %s376
      %p388 = scmp.eq.s32.totalorder %s48, 1
      %p389 = por %p387, %p388
      %p391 = scmp.ne.s32.totalorder %s376, %s390
      %p392 = scmp.eq.s32.totalorder %s48, 0
      %p393 = por %p391, %p392
      %s395 = sadd.s32 %s394, 1
      %p398 = scmp.eq.s32.totalorder %s42, 1
      %p399 = scmp.ne.s32.totalorder %s394, %s396
      %p400 = scmp.eq.s32.totalorder %s42, 0
      %p401 = por %p399, %p400
      %p402 = scmp.ne.s32.totalorder %s394, %s396
      %p403 = scmp.eq.s32.totalorder %s47, 1
      %p404 = por %p402, %p403
      %p405 = scmp.ne.s32.totalorder %s396, %s397
      %p406 = scmp.eq.s32.totalorder %s47, 0
      %p407 = por %p405, %p406
      %p408 = scmp.ne.s32.totalorder %s396, %s397
      %p409 = scmp.eq.s32.totalorder %s48, 1
      %p410 = por %p408, %p409
      %p412 = scmp.ne.s32.totalorder %s397, %s411
      %p413 = scmp.eq.s32.totalorder %s48, 0
      %p414 = por %p412, %p413
      %s416 = sadd.s32 %s415, 1
      %p419 = scmp.eq.s32.totalorder %s42, 1
      %p420 = scmp.ne.s32.totalorder %s415, %s417
      %p421 = scmp.eq.s32.totalorder %s42, 0
      %p422 = por %p420, %p421
      %p423 = scmp.ne.s32.totalorder %s415, %s417
      %p424 = scmp.eq.s32.totalorder %s47, 1
      %p425 = por %p423, %p424
      %p426 = scmp.ne.s32.totalorder %s417, %s418
      %p427 = scmp.eq.s32.totalorder %s47, 0
      %p428 = por %p426, %p427
      %p429 = scmp.ne.s32.totalorder %s417, %s418
      %p430 = scmp.eq.s32.totalorder %s48, 1
      %p431 = por %p429, %p430
      %p433 = scmp.ne.s32.totalorder %s418, %s432
      %p434 = scmp.eq.s32.totalorder %s48, 0
      %p435 = por %p433, %p434
      %s437 = sadd.s32 %s436, 1
      %p440 = scmp.eq.s32.totalorder %s42, 1
      %p441 = scmp.ne.s32.totalorder %s436, %s438
      %p442 = scmp.eq.s32.totalorder %s42, 0
      %p443 = por %p441, %p442
      %p444 = scmp.ne.s32.totalorder %s436, %s438
      %p445 = scmp.eq.s32.totalorder %s47, 1
      %p446 = por %p444, %p445
      %p447 = scmp.ne.s32.totalorder %s438, %s439
      %p448 = scmp.eq.s32.totalorder %s47, 0
      %p449 = por %p447, %p448
      %p450 = scmp.ne.s32.totalorder %s438, %s439
      %p451 = scmp.eq.s32.totalorder %s48, 1
      %p452 = por %p450, %p451
      %p454 = scmp.ne.s32.totalorder %s439, %s453
      %p455 = scmp.eq.s32.totalorder %s48, 0
      %p456 = por %p454, %p455
      %s458 = sadd.s32 %s457, 1
      %p461 = scmp.eq.s32.totalorder %s42, 1
      %p462 = scmp.ne.s32.totalorder %s457, %s459
      %p463 = scmp.eq.s32.totalorder %s42, 0
      %p464 = por %p462, %p463
      %p465 = scmp.ne.s32.totalorder %s457, %s459
      %p466 = scmp.eq.s32.totalorder %s47, 1
      %p467 = por %p465, %p466
      %p468 = scmp.ne.s32.totalorder %s459, %s460
      %p469 = scmp.eq.s32.totalorder %s47, 0
      %p470 = por %p468, %p469
      %p471 = scmp.ne.s32.totalorder %s459, %s460
      %p472 = scmp.eq.s32.totalorder %s48, 1
      %p473 = por %p471, %p472
      %p475 = scmp.ne.s32.totalorder %s460, %s474
      %p476 = scmp.eq.s32.totalorder %s48, 0
      %p477 = por %p475, %p476
      %s478 = ssub.s32 %s49, %s61
      %s479 = ssub.s32 %s50, %s57
      %s480 = sor.u32 %s478, %s479
      %p481 = scmp.eq.s32.totalorder %s480, 0
      %s483 = sadd.s32 %s482, 1
      %s484 = scalar_select %p481, %s482, %s483
      %p487 = pneg %p481
      %p488 = scmp.eq.s32.totalorder %s42, 1
      %p489 = por %p487, %p488
      %p490 = scmp.ne.s32.totalorder %s482, %s485
      %p491 = scmp.eq.s32.totalorder %s42, 0
      %p492 = por %p490, %p491
      %p493 = scmp.ne.s32.totalorder %s482, %s485
      %p494 = scmp.eq.s32.totalorder %s47, 1
      %p495 = por %p493, %p494
      %p496 = scmp.ne.s32.totalorder %s485, %s486
      %p497 = scmp.eq.s32.totalorder %s47, 0
      %p498 = por %p496, %p497
      %p499 = scmp.ne.s32.totalorder %s485, %s486
      %p500 = scmp.eq.s32.totalorder %s48, 1
      %p501 = por %p499, %p500
      %p503 = scmp.ne.s32.totalorder %s486, %s502
      %p504 = scmp.eq.s32.totalorder %s48, 0
      %p505 = por %p503, %p504
      %p506 = scmp.le.s32.totalorder 1, %s42
      %p507 = scmp.lt.s32.totalorder %s42, 3
      %p508 = pnand %p506, %p507
      %p509 = pneg %p508
      // Predicated region
      $region9: #{tpu_custom_call.1} parent=5 // pred_check
        _
      $region10: #{tpu_custom_call.1} parent=5 // pred_check_branch
        %511 = sbr.rel (%p508) target = $region12
      $region11: #{tpu_custom_call.1} parent=5 // pred_region
        %s512 = ssub.s32 %s42, 1
        // Predicated region
        $region13: #{tpu_custom_call.1} parent=11 // pred_check
          %p513 = pneg %p155
        $region14: #{tpu_custom_call.1} parent=11 // pred_check_branch
          %515 = sbr.rel (%p513) target = $region16
        $region15: #{tpu_custom_call.1} parent=11 // pred_region
          %s517 = ssub.s32 1024, 1024
          %518 = vsyncadd [#allocation13], %s517
          %s519 = sshll.u32 [#allocation12], 4
          %s520 = int_to_ptr.vmem [resolvable:$true] %s519
          %525 = dma.hbm_to_vmem [thread:$0]  %s3, 1024, %s520, [#allocation13], 64, 64, 4
        $region16: #{tpu_custom_call.1} parent=11 // pred_fallthru
          _
        // Predicated region
        $region17: #{tpu_custom_call.1} parent=11 // pred_check
          %p526 = pneg %p176
        $region18: #{tpu_custom_call.1} parent=11 // pred_check_branch
          %528 = sbr.rel (%p526) target = $region20
        $region19: #{tpu_custom_call.1} parent=11 // pred_region
          %s530 = ssub.s32 1024, 1024
          %531 = vsyncadd [#allocation13], %s530
          %s532 = sshll.u32 [#allocation14], 4
          %s533 = int_to_ptr.vmem [resolvable:$true] %s532
          %538 = dma.hbm_to_vmem [thread:$0]  %s4, 1024, %s533, [#allocation13], 64, 64, 4
        $region20: #{tpu_custom_call.1} parent=11 // pred_fallthru
          _
        // Predicated region
        $region21: #{tpu_custom_call.1} parent=11 // pred_check
          %p539 = pneg %p197
        $region22: #{tpu_custom_call.1} parent=11 // pred_check_branch
          %541 = sbr.rel (%p539) target = $region24
        $region23: #{tpu_custom_call.1} parent=11 // pred_region
          %s543 = ssub.s32 1024, 1024
          %544 = vsyncadd [#allocation16], %s543
          %s545 = sshll.u32 [#allocation15], 4
          %s546 = int_to_ptr.vmem [resolvable:$true] %s545
          %551 = dma.hbm_to_vmem [thread:$0]  %s5, 1024, %s546, [#allocation16], 64, 64, 4
        $region24: #{tpu_custom_call.1} parent=11 // pred_fallthru
          _
        // Predicated region
        $region25: #{tpu_custom_call.1} parent=11 // pred_check
          %p552 = pneg %p218
        $region26: #{tpu_custom_call.1} parent=11 // pred_check_branch
          %554 = sbr.rel (%p552) target = $region28
        $region27: #{tpu_custom_call.1} parent=11 // pred_region
          %s556 = ssub.s32 512, 512
          %557 = vsyncadd [#allocation16], %s556
          %s558 = sshll.u32 [#allocation17], 4
          %s559 = int_to_ptr.vmem [resolvable:$true] %s558
          %564 = dma.hbm_to_vmem [thread:$0]  %s6, 512, %s559, [#allocation16], 64, 64, 4
        $region28: #{tpu_custom_call.1} parent=11 // pred_fallthru
          _
        // Predicated region
        $region29: #{tpu_custom_call.1} parent=11 // pred_check
          %p565 = pneg %p239
        $region30: #{tpu_custom_call.1} parent=11 // pred_check_branch
          %567 = sbr.rel (%p565) target = $region32
        $region31: #{tpu_custom_call.1} parent=11 // pred_region
          %s569 = ssub.s32 1024, 1024
          %570 = vsyncadd [#allocation19], %s569
          %s571 = sshll.u32 [#allocation18], 4
          %s572 = int_to_ptr.vmem [resolvable:$true] %s571
          %577 = dma.hbm_to_vmem [thread:$0]  %s7, 1024, %s572, [#allocation19], 64, 64, 4
        $region32: #{tpu_custom_call.1} parent=11 // pred_fallthru
          _
        // Predicated region
        $region33: #{tpu_custom_call.1} parent=11 // pred_check
          %p578 = pneg %p260
        $region34: #{tpu_custom_call.1} parent=11 // pred_check_branch
          %580 = sbr.rel (%p578) target = $region36
        $region35: #{tpu_custom_call.1} parent=11 // pred_region
          %s582 = ssub.s32 1024, 1024
          %583 = vsyncadd [#allocation19], %s582
          %s584 = sshll.u32 [#allocation20], 4
          %s585 = int_to_ptr.vmem [resolvable:$true] %s584
          %590 = dma.hbm_to_vmem [thread:$0]  %s8, 1024, %s585, [#allocation19], 64, 64, 4
        $region36: #{tpu_custom_call.1} parent=11 // pred_fallthru
          _
        // Predicated region
        $region37: #{tpu_custom_call.1} parent=11 // pred_check
          %p591 = pneg %p281
        $region38: #{tpu_custom_call.1} parent=11 // pred_check_branch
          %593 = sbr.rel (%p591) target = $region40
        $region39: #{tpu_custom_call.1} parent=11 // pred_region
          %s595 = ssub.s32 16, 16
          %596 = vsyncadd [#allocation22], %s595
          %s598 = sshll.u32 [#allocation21], 4
          %s599 = int_to_ptr.vmem [resolvable:$true] %s598
          %601 = dma.hbm_to_vmem [thread:$0]  %s9, 16, %s599, [#allocation22]
        $region40: #{tpu_custom_call.1} parent=11 // pred_fallthru
          _
        // Predicated region
        $region41: #{tpu_custom_call.1} parent=11 // pred_check
          %p602 = pneg %p302
        $region42: #{tpu_custom_call.1} parent=11 // pred_check_branch
          %604 = sbr.rel (%p602) target = $region44
        $region43: #{tpu_custom_call.1} parent=11 // pred_region
          %s606 = ssub.s32 16, 16
          %607 = vsyncadd [#allocation22], %s606
          %s609 = sshll.u32 [#allocation23], 4
          %s610 = int_to_ptr.vmem [resolvable:$true] %s609
          %612 = dma.hbm_to_vmem [thread:$0]  %s10, 16, %s610, [#allocation22]
        $region44: #{tpu_custom_call.1} parent=11 // pred_fallthru
          _
        // Predicated region
        $region45: #{tpu_custom_call.1} parent=11 // pred_check
          %p613 = pneg %p323
        $region46: #{tpu_custom_call.1} parent=11 // pred_check_branch
          %615 = sbr.rel (%p613) target = $region48
        $region47: #{tpu_custom_call.1} parent=11 // pred_region
          %s617 = ssub.s32 16, 16
          %618 = vsyncadd [#allocation25], %s617
          %s620 = sshll.u32 [#allocation24], 4
          %s621 = int_to_ptr.vmem [resolvable:$true] %s620
          %623 = dma.hbm_to_vmem [thread:$0]  %s11, 16, %s621, [#allocation25]
        $region48: #{tpu_custom_call.1} parent=11 // pred_fallthru
          _
        // Predicated region
        $region49: #{tpu_custom_call.1} parent=11 // pred_check
          %p624 = pneg %p344
        $region50: #{tpu_custom_call.1} parent=11 // pred_check_branch
          %626 = sbr.rel (%p624) target = $region52
        $region51: #{tpu_custom_call.1} parent=11 // pred_region
          %s628 = ssub.s32 16, 16
          %629 = vsyncadd [#allocation25], %s628
          %s631 = sshll.u32 [#allocation26], 4
          %s632 = int_to_ptr.vmem [resolvable:$true] %s631
          %634 = dma.hbm_to_vmem [thread:$0]  %s12, 16, %s632, [#allocation25]
        $region52: #{tpu_custom_call.1} parent=11 // pred_fallthru
          _
        // Predicated region
        $region53: #{tpu_custom_call.1} parent=11 // pred_check
          %p635 = pneg %p365
        $region54: #{tpu_custom_call.1} parent=11 // pred_check_branch
          %637 = sbr.rel (%p635) target = $region56
        $region55: #{tpu_custom_call.1} parent=11 // pred_region
          %s639 = ssub.s32 16, 16
          %640 = vsyncadd [#allocation28], %s639
          %s642 = sshll.u32 [#allocation27], 4
          %s643 = int_to_ptr.vmem [resolvable:$true] %s642
          %645 = dma.hbm_to_vmem [thread:$0]  %s13, 16, %s643, [#allocation28]
        $region56: #{tpu_custom_call.1} parent=11 // pred_fallthru
          _
        // Predicated region
        $region57: #{tpu_custom_call.1} parent=11 // pred_check
          %p646 = pneg %p386
        $region58: #{tpu_custom_call.1} parent=11 // pred_check_branch
          %648 = sbr.rel (%p646) target = $region60
        $region59: #{tpu_custom_call.1} parent=11 // pred_region
          %s650 = ssub.s32 16, 16
          %651 = vsyncadd [#allocation28], %s650
          %s653 = sshll.u32 [#allocation29], 4
          %s654 = int_to_ptr.vmem [resolvable:$true] %s653
          %656 = dma.hbm_to_vmem [thread:$0]  %s14, 16, %s654, [#allocation28]
        $region60: #{tpu_custom_call.1} parent=11 // pred_fallthru
          _
        // Predicated region
        $region61: #{tpu_custom_call.1} parent=11 // pred_check
          %p657 = pneg %p407
        $region62: #{tpu_custom_call.1} parent=11 // pred_check_branch
          %659 = sbr.rel (%p657) target = $region64
        $region63: #{tpu_custom_call.1} parent=11 // pred_region
          %s661 = ssub.s32 16, 16
          %662 = vsyncadd [#allocation31], %s661
          %s664 = sshll.u32 [#allocation30], 4
          %s665 = int_to_ptr.vmem [resolvable:$true] %s664
          %667 = dma.hbm_to_vmem [thread:$0]  %s15, 16, %s665, [#allocation31]
        $region64: #{tpu_custom_call.1} parent=11 // pred_fallthru
          _
        // Predicated region
        $region65: #{tpu_custom_call.1} parent=11 // pred_check
          %p668 = pneg %p428
        $region66: #{tpu_custom_call.1} parent=11 // pred_check_branch
          %670 = sbr.rel (%p668) target = $region68
        $region67: #{tpu_custom_call.1} parent=11 // pred_region
          %s672 = ssub.s32 16, 16
          %673 = vsyncadd [#allocation31], %s672
          %s675 = sshll.u32 [#allocation32], 4
          %s676 = int_to_ptr.vmem [resolvable:$true] %s675
          %678 = dma.hbm_to_vmem [thread:$0]  %s16, 16, %s676, [#allocation31]
        $region68: #{tpu_custom_call.1} parent=11 // pred_fallthru
          _
        // Predicated region
        $region69: #{tpu_custom_call.1} parent=11 // pred_check
          %p679 = pneg %p449
        $region70: #{tpu_custom_call.1} parent=11 // pred_check_branch
          %681 = sbr.rel (%p679) target = $region72
        $region71: #{tpu_custom_call.1} parent=11 // pred_region
          %s683 = ssub.s32 16, 16
          %684 = vsyncadd [#allocation34], %s683
          %s686 = sshll.u32 [#allocation33], 4
          %s687 = int_to_ptr.vmem [resolvable:$true] %s686
          %689 = dma.hbm_to_vmem [thread:$0]  %s17, 16, %s687, [#allocation34]
        $region72: #{tpu_custom_call.1} parent=11 // pred_fallthru
          _
        // Predicated region
        $region73: #{tpu_custom_call.1} parent=11 // pred_check
          %p690 = pneg %p470
        $region74: #{tpu_custom_call.1} parent=11 // pred_check_branch
          %692 = sbr.rel (%p690) target = $region76
        $region75: #{tpu_custom_call.1} parent=11 // pred_region
          %s694 = ssub.s32 16, 16
          %695 = vsyncadd [#allocation34], %s694
          %s697 = sshll.u32 [#allocation35], 4
          %s698 = int_to_ptr.vmem [resolvable:$true] %s697
          %700 = dma.hbm_to_vmem [thread:$0]  %s18, 16, %s698, [#allocation34]
        $region76: #{tpu_custom_call.1} parent=11 // pred_fallthru
          _
      $region12: #{tpu_custom_call.1} parent=5 // pred_fallthru
        _
      %p701 = scmp.lt.s32.totalorder %s42, 2
      // Predicated region
      $region77: #{tpu_custom_call.1} parent=5 // pred_check
        %p702 = pneg %p701
      $region78: #{tpu_custom_call.1} parent=5 // pred_check_branch
        %704 = sbr.rel (%p702) target = $region80
      $region79: #{tpu_custom_call.1} parent=5 // pred_region
        // Predicated region
        $region81: #{tpu_custom_call.1} parent=79 // pred_check
          %p705 = pneg %p76
        $region82: #{tpu_custom_call.1} parent=79 // pred_check_branch
          %707 = sbr.rel (%p705) target = $region84
        $region83: #{tpu_custom_call.1} parent=79 // pred_region
          %s708 = sand.u32 %s66, 1
          %s709 = scalar_lea.sflag [#allocation7], %s708
          %s710 = sand.u32 %s66, 1
          %s711 = smul.addr %s710, 4
          %s712 = scalar_lea.vmem [#allocation6], %s711
          %s714 = ssub.s32 64, 64
          %715 = vsyncadd %s709, %s714
          %s716 = sadd.s32 %s50, %s49
          %s717 = smul.addr %s716, 64
          %s718 = scalar_lea.hbm %s0, %s717
          %s720 = sshll.u32 %s712, 4
          %s721 = int_to_ptr.vmem [resolvable:$true] %s720
          %723 = dma.hbm_to_vmem [thread:$0]  %s718, 64, %s721, %s709
        $region84: #{tpu_custom_call.1} parent=79 // pred_fallthru
          _
        // Predicated region
        $region85: #{tpu_custom_call.1} parent=79 // pred_check
          %p724 = pneg %p102
        $region86: #{tpu_custom_call.1} parent=79 // pred_check_branch
          %726 = sbr.rel (%p724) target = $region88
        $region87: #{tpu_custom_call.1} parent=79 // pred_region
          %s727 = sand.u32 %s42, 1
          %s728 = scalar_lea.sflag [#allocation10], %s727
          %s729 = sand.u32 %s92, 1
          %s730 = smul.addr %s729, 4
          %s731 = scalar_lea.vmem [#allocation9], %s730
          %s733 = ssub.s32 64, 64
          %734 = vsyncadd %s728, %s733
          %s735 = smul.addr %s49, 64
          %s736 = scalar_lea.hbm %s1, %s735
          %s738 = sshll.u32 %s731, 4
          %s739 = int_to_ptr.vmem [resolvable:$true] %s738
          %741 = dma.hbm_to_vmem [thread:$0]  %s736, 64, %s739, %s728
        $region88: #{tpu_custom_call.1} parent=79 // pred_fallthru
          _
        // Predicated region
        $region89: #{tpu_custom_call.1} parent=79 // pred_check
          %p742 = pneg %p128
        $region90: #{tpu_custom_call.1} parent=79 // pred_check_branch
          %744 = sbr.rel (%p742) target = $region92
        $region91: #{tpu_custom_call.1} parent=79 // pred_region
          %s745 = sand.u32 %s42, 1
          %s746 = scalar_lea.sflag [#allocation10], %s745
          %s747 = sand.u32 %s118, 1
          %s748 = smul.addr %s747, 4
          %s749 = scalar_lea.vmem [#allocation11], %s748
          %s751 = ssub.s32 64, 64
          %752 = vsyncadd %s746, %s751
          %s753 = smul.addr %s49, 64
          %s754 = scalar_lea.hbm %s2, %s753
          %s756 = sshll.u32 %s749, 4
          %s757 = int_to_ptr.vmem [resolvable:$true] %s756
          %759 = dma.hbm_to_vmem [thread:$0]  %s754, 64, %s757, %s746
        $region92: #{tpu_custom_call.1} parent=79 // pred_fallthru
          _
      $region80: #{tpu_custom_call.1} parent=5 // pred_fallthru
        _
      %p760 = scmp.le.s32.totalorder 1, %s42
      %p761 = scmp.lt.s32.totalorder %s42, 3
      %p762 = pnand %p760, %p761
      %p763 = pneg %p762
      // Predicated region
      $region93: #{tpu_custom_call.1} parent=5 // pred_check
        _
      $region94: #{tpu_custom_call.1} parent=5 // pred_check_branch
        %765 = sbr.rel (%p762) target = $region96
      $region95: #{tpu_custom_call.1} parent=5 // pred_region
        %s766 = ssub.s32 %s42, 1
        %s767 = sand.u32 %s69, 1
        %s768 = scalar_lea.sflag [#allocation7], %s767
        %s769 = sand.u32 %s69, 1
        %s770 = smul.addr %s769, 4
        %s771 = scalar_lea.vmem [#allocation6], %s770
        // Predicated region
        $region97: #{tpu_custom_call.1} parent=95 // pred_check
          %p772 = pneg %p82
        $region98: #{tpu_custom_call.1} parent=95 // pred_check_branch
          %774 = sbr.rel (%p772) target = $region100
        $region99: #{tpu_custom_call.1} parent=95 // pred_region
          %775 = dma.done %s768, 64
        $region100: #{tpu_custom_call.1} parent=95 // pred_fallthru
          _
        %s776 = sand.u32 %s47, 1
        %s777 = scalar_lea.sflag [#allocation10], %s776
        %s778 = sand.u32 %s95, 1
        %s779 = smul.addr %s778, 4
        %s780 = scalar_lea.vmem [#allocation9], %s779
        // Predicated region
        $region101: #{tpu_custom_call.1} parent=95 // pred_check
          %p781 = pneg %p108
        $region102: #{tpu_custom_call.1} parent=95 // pred_check_branch
          %783 = sbr.rel (%p781) target = $region104
        $region103: #{tpu_custom_call.1} parent=95 // pred_region
          %784 = dma.done %s777, 64
        $region104: #{tpu_custom_call.1} parent=95 // pred_fallthru
          _
        %s785 = sand.u32 %s47, 1
        %s786 = scalar_lea.sflag [#allocation10], %s785
        %s787 = sand.u32 %s121, 1
        %s788 = smul.addr %s787, 4
        %s789 = scalar_lea.vmem [#allocation11], %s788
        // Predicated region
        $region105: #{tpu_custom_call.1} parent=95 // pred_check
          %p790 = pneg %p134
        $region106: #{tpu_custom_call.1} parent=95 // pred_check_branch
          %792 = sbr.rel (%p790) target = $region108
        $region107: #{tpu_custom_call.1} parent=95 // pred_region
          %793 = dma.done %s786, 64
        $region108: #{tpu_custom_call.1} parent=95 // pred_fallthru
          _
        // Predicated region
        $region109: #{tpu_custom_call.1} parent=95 // pred_check
          %p794 = pneg %p155
        $region110: #{tpu_custom_call.1} parent=95 // pred_check_branch
          %796 = sbr.rel (%p794) target = $region112
        $region111: #{tpu_custom_call.1} parent=95 // pred_region
          %797 = dma.done [#allocation13], 1024
        $region112: #{tpu_custom_call.1} parent=95 // pred_fallthru
          _
        // Predicated region
        $region113: #{tpu_custom_call.1} parent=95 // pred_check
          %p798 = pneg %p176
        $region114: #{tpu_custom_call.1} parent=95 // pred_check_branch
          %800 = sbr.rel (%p798) target = $region116
        $region115: #{tpu_custom_call.1} parent=95 // pred_region
          %801 = dma.done [#allocation13], 1024
        $region116: #{tpu_custom_call.1} parent=95 // pred_fallthru
          _
        // Predicated region
        $region117: #{tpu_custom_call.1} parent=95 // pred_check
          %p802 = pneg %p197
        $region118: #{tpu_custom_call.1} parent=95 // pred_check_branch
          %804 = sbr.rel (%p802) target = $region120
        $region119: #{tpu_custom_call.1} parent=95 // pred_region
          %805 = dma.done [#allocation16], 1024
        $region120: #{tpu_custom_call.1} parent=95 // pred_fallthru
          _
        // Predicated region
        $region121: #{tpu_custom_call.1} parent=95 // pred_check
          %p806 = pneg %p218
        $region122: #{tpu_custom_call.1} parent=95 // pred_check_branch
          %808 = sbr.rel (%p806) target = $region124
        $region123: #{tpu_custom_call.1} parent=95 // pred_region
          %809 = dma.done [#allocation16], 512
        $region124: #{tpu_custom_call.1} parent=95 // pred_fallthru
          _
        // Predicated region
        $region125: #{tpu_custom_call.1} parent=95 // pred_check
          %p810 = pneg %p239
        $region126: #{tpu_custom_call.1} parent=95 // pred_check_branch
          %812 = sbr.rel (%p810) target = $region128
        $region127: #{tpu_custom_call.1} parent=95 // pred_region
          %813 = dma.done [#allocation19], 1024
        $region128: #{tpu_custom_call.1} parent=95 // pred_fallthru
          _
        // Predicated region
        $region129: #{tpu_custom_call.1} parent=95 // pred_check
          %p814 = pneg %p260
        $region130: #{tpu_custom_call.1} parent=95 // pred_check_branch
          %816 = sbr.rel (%p814) target = $region132
        $region131: #{tpu_custom_call.1} parent=95 // pred_region
          %817 = dma.done [#allocation19], 1024
        $region132: #{tpu_custom_call.1} parent=95 // pred_fallthru
          _
        // Predicated region
        $region133: #{tpu_custom_call.1} parent=95 // pred_check
          %p818 = pneg %p281
        $region134: #{tpu_custom_call.1} parent=95 // pred_check_branch
          %820 = sbr.rel (%p818) target = $region136
        $region135: #{tpu_custom_call.1} parent=95 // pred_region
          %821 = dma.done [#allocation22], 16
        $region136: #{tpu_custom_call.1} parent=95 // pred_fallthru
          _
        // Predicated region
        $region137: #{tpu_custom_call.1} parent=95 // pred_check
          %p822 = pneg %p302
        $region138: #{tpu_custom_call.1} parent=95 // pred_check_branch
          %824 = sbr.rel (%p822) target = $region140
        $region139: #{tpu_custom_call.1} parent=95 // pred_region
          %825 = dma.done [#allocation22], 16
        $region140: #{tpu_custom_call.1} parent=95 // pred_fallthru
          _
        // Predicated region
        $region141: #{tpu_custom_call.1} parent=95 // pred_check
          %p826 = pneg %p323
        $region142: #{tpu_custom_call.1} parent=95 // pred_check_branch
          %828 = sbr.rel (%p826) target = $region144
        $region143: #{tpu_custom_call.1} parent=95 // pred_region
          %829 = dma.done [#allocation25], 16
        $region144: #{tpu_custom_call.1} parent=95 // pred_fallthru
          _
        // Predicated region
        $region145: #{tpu_custom_call.1} parent=95 // pred_check
          %p830 = pneg %p344
        $region146: #{tpu_custom_call.1} parent=95 // pred_check_branch
          %832 = sbr.rel (%p830) target = $region148
        $region147: #{tpu_custom_call.1} parent=95 // pred_region
          %833 = dma.done [#allocation25], 16
        $region148: #{tpu_custom_call.1} parent=95 // pred_fallthru
          _
        // Predicated region
        $region149: #{tpu_custom_call.1} parent=95 // pred_check
          %p834 = pneg %p365
        $region150: #{tpu_custom_call.1} parent=95 // pred_check_branch
          %836 = sbr.rel (%p834) target = $region152
        $region151: #{tpu_custom_call.1} parent=95 // pred_region
          %837 = dma.done [#allocation28], 16
        $region152: #{tpu_custom_call.1} parent=95 // pred_fallthru
          _
        // Predicated region
        $region153: #{tpu_custom_call.1} parent=95 // pred_check
          %p838 = pneg %p386
        $region154: #{tpu_custom_call.1} parent=95 // pred_check_branch
          %840 = sbr.rel (%p838) target = $region156
        $region155: #{tpu_custom_call.1} parent=95 // pred_region
          %841 = dma.done [#allocation28], 16
        $region156: #{tpu_custom_call.1} parent=95 // pred_fallthru
          _
        // Predicated region
        $region157: #{tpu_custom_call.1} parent=95 // pred_check
          %p842 = pneg %p407
        $region158: #{tpu_custom_call.1} parent=95 // pred_check_branch
          %844 = sbr.rel (%p842) target = $region160
        $region159: #{tpu_custom_call.1} parent=95 // pred_region
          %845 = dma.done [#allocation31], 16
        $region160: #{tpu_custom_call.1} parent=95 // pred_fallthru
          _
        // Predicated region
        $region161: #{tpu_custom_call.1} parent=95 // pred_check
          %p846 = pneg %p428
        $region162: #{tpu_custom_call.1} parent=95 // pred_check_branch
          %848 = sbr.rel (%p846) target = $region164
        $region163: #{tpu_custom_call.1} parent=95 // pred_region
          %849 = dma.done [#allocation31], 16
        $region164: #{tpu_custom_call.1} parent=95 // pred_fallthru
          _
        // Predicated region
        $region165: #{tpu_custom_call.1} parent=95 // pred_check
          %p850 = pneg %p449
        $region166: #{tpu_custom_call.1} parent=95 // pred_check_branch
          %852 = sbr.rel (%p850) target = $region168
        $region167: #{tpu_custom_call.1} parent=95 // pred_region
          %853 = dma.done [#allocation34], 16
        $region168: #{tpu_custom_call.1} parent=95 // pred_fallthru
          _
        // Predicated region
        $region169: #{tpu_custom_call.1} parent=95 // pred_check
          %p854 = pneg %p470
        $region170: #{tpu_custom_call.1} parent=95 // pred_check_branch
          %856 = sbr.rel (%p854) target = $region172
        $region171: #{tpu_custom_call.1} parent=95 // pred_region
          %857 = dma.done [#allocation34], 16
        $region172: #{tpu_custom_call.1} parent=95 // pred_fallthru
          _
        %s858 = sand.u32 %s69, 1
        %s859 = scalar_lea.sflag [#allocation7], %s858
        %s860 = sand.u32 %s69, 1
        %s861 = smul.addr %s860, 4
        %s862 = scalar_lea.vmem [#allocation6], %s861
        %p863 = pneg %p82
        %p864 = pneg %p79
        %s865 = sand.u32 %s47, 1
        %s866 = scalar_lea.sflag [#allocation10], %s865
        %s867 = sand.u32 %s95, 1
        %s868 = smul.addr %s867, 4
        %s869 = scalar_lea.vmem [#allocation9], %s868
        %p870 = pneg %p108
        %p871 = pneg %p105
        %s872 = sand.u32 %s47, 1
        %s873 = scalar_lea.sflag [#allocation10], %s872
        %s874 = sand.u32 %s121, 1
        %s875 = smul.addr %s874, 4
        %s876 = scalar_lea.vmem [#allocation11], %s875
        %p877 = pneg %p134
        %p878 = pneg %p131
        %p879 = pneg %p155
        %p880 = pneg %p152
        %p881 = pneg %p176
        %p882 = pneg %p173
        %p883 = pneg %p197
        %p884 = pneg %p194
        %p885 = pneg %p218
        %p886 = pneg %p215
        %p887 = pneg %p239
        %p888 = pneg %p236
        %p889 = pneg %p260
        %p890 = pneg %p257
        %p891 = pneg %p281
        %p892 = pneg %p278
        %p893 = pneg %p302
        %p894 = pneg %p299
        %p895 = pneg %p323
        %p896 = pneg %p320
        %p897 = pneg %p344
        %p898 = pneg %p341
        %p899 = pneg %p365
        %p900 = pneg %p362
        %p901 = pneg %p386
        %p902 = pneg %p383
        %p903 = pneg %p407
        %p904 = pneg %p404
        %p905 = pneg %p428
        %p906 = pneg %p425
        %p907 = pneg %p449
        %p908 = pneg %p446
        %p909 = pneg %p470
        %p910 = pneg %p467
        %p911 = pneg %p498
        %p912 = pneg %p495
        %s913 = sand.u32 %s485, 1
        %s914 = scalar_lea.sflag [#allocation8], %s913
        %s915 = sand.u32 %s485, 1
        %s916 = smul.addr %s915, 8
        %s917 = scalar_lea.vmem [#allocation36], %s916
        %p919 = scmp.eq.s32.totalorder %s52, 0
        // Predicated region
        $region173: #{tpu_custom_call.1} parent=95 // pred_check
          %p920 = pneg %p919
        $region174: #{tpu_custom_call.1} parent=95 // pred_check_branch
          %922 = sbr.rel (%p920) target = $region176
        $region175: #{tpu_custom_call.1} parent=95 // pred_region
          %v923 = vld [vmem:[%s780] sm:$0xf]
          %v924 = vld [vmem:[#allocation14] sm:$0xf]
          %v925 = vld [vmem:[#allocation14 + $0x4] sm:$0xf]
          %v926 = vld [vmem:[#allocation14 + $0x8] sm:$0xf]
          %v927 = vld [vmem:[#allocation14 + $0xc] sm:$0xf]
          %v928 = vld [vmem:[#allocation14 + $0x10] sm:$0xf]
          %v929 = vld [vmem:[#allocation14 + $0x14] sm:$0xf]
          %v930 = vld [vmem:[#allocation14 + $0x18] sm:$0xf]
          %v931 = vld [vmem:[#allocation14 + $0x1c] sm:$0xf]
          %v932 = vld [vmem:[#allocation14 + $0x20] sm:$0xf]
          %v933 = vld [vmem:[#allocation14 + $0x24] sm:$0xf]
          %v934 = vld [vmem:[#allocation14 + $0x28] sm:$0xf]
          %v935 = vld [vmem:[#allocation14 + $0x2c] sm:$0xf]
          %v936 = vld [vmem:[#allocation14 + $0x30] sm:$0xf]
          %v937 = vld [vmem:[#allocation14 + $0x34] sm:$0xf]
          %v938 = vld [vmem:[#allocation14 + $0x38] sm:$0xf]
          %v939 = vld [vmem:[#allocation14 + $0x3c] sm:$0xf]
          %v940 = vld [vmem:[#allocation23] sm:$0x1]
          %v942 = vlaneseq
          %v943 = vshrl.u32 %v942, 7
          %v944 = vsub.s32 0, %v943
          %v945 = vrot.slane %v940, %v944
          %v963 = vunpack.c.l.b16 %v924
          %v964 = vunpack.c.l.b16 %v925
          %v965 = vunpack.c.l.b16 %v926
          %v966 = vunpack.c.l.b16 %v927
          %v967 = vunpack.c.l.b16 %v928
          %v968 = vunpack.c.l.b16 %v929
          %v969 = vunpack.c.l.b16 %v930
          %v970 = vunpack.c.l.b16 %v931
          %v971 = vunpack.c.l.b16 %v932
          %v972 = vunpack.c.l.b16 %v933
          %v973 = vunpack.c.l.b16 %v934
          %v974 = vunpack.c.l.b16 %v935
          %v975 = vunpack.c.l.b16 %v936
          %v976 = vunpack.c.l.b16 %v937
          %v977 = vunpack.c.l.b16 %v938
          %v978 = vunpack.c.l.b16 %v939
          %v979 = vpack.c.b16 %v964, %v963
          %v980 = vpack.c.b16 %v966, %v965
          %v981 = vpack.c.b16 %v968, %v967
          %v982 = vpack.c.b16 %v970, %v969
          %v983 = vpack.c.b16 %v972, %v971
          %v984 = vpack.c.b16 %v974, %v973
          %v985 = vpack.c.b16 %v976, %v975
          %v986 = vpack.c.b16 %v978, %v977
          %995 = vmatprep.subr.bf16.mxu0 0
          %996 = vmatpush1.bf16.msra.mxu0 %v979
          %997 = vmatprep.subr.bf16.mxu0 0
          %998 = vmatpush1.bf16.msra.mxu0 %v980
          %999 = vmatprep.subr.bf16.mxu0 0
          %1000 = vmatpush1.bf16.msra.mxu0 %v981
          %1001 = vmatprep.subr.bf16.mxu0 0
          %1002 = vmatpush1.bf16.msra.mxu0 %v982
          %1003 = vmatprep.subr.bf16.mxu0 0
          %1004 = vmatpush1.bf16.msra.mxu0 %v983
          %1005 = vmatprep.subr.bf16.mxu0 0
          %1006 = vmatpush1.bf16.msra.mxu0 %v984
          %1007 = vmatprep.subr.bf16.mxu0 0
          %1008 = vmatpush1.bf16.msra.mxu0 %v985
          %1009 = vmatprep.subr.bf16.mxu0 0
          %1010 = vmatpush1.bf16.msra.mxu0 %v986
          %1011 = vmatprep.subr.bf16.mxu0 0
          %1012 = vmatpush1.bf16.msra.mxu0 0
          %1013 = vmatprep.subr.bf16.mxu0 0
          %1014 = vmatpush1.bf16.msra.mxu0 0
          %1015 = vmatprep.subr.bf16.mxu0 0
          %1016 = vmatpush1.bf16.msra.mxu0 0
          %1017 = vmatprep.subr.bf16.mxu0 0
          %1018 = vmatpush1.bf16.msra.mxu0 0
          %1019 = vmatprep.subr.bf16.mxu0 0
          %1020 = vmatpush1.bf16.msra.mxu0 0
          %1021 = vmatprep.subr.bf16.mxu0 0
          %1022 = vmatpush1.bf16.msra.mxu0 0
          %1023 = vmatprep.subr.bf16.mxu0 0
          %1024 = vmatpush1.bf16.msra.mxu0 0
          %1025 = vmatprep.subr.bf16.mxu0 0
          %1026 = vmatpush1.bf16.msra.mxu0 0
          %1027 = vmatprep.mubr.bf16.mxu0 0
          %1028 = vmatmul.mubr.bf16.gmra.mrb[0].mxu0 %v923
          %v1029 = vpop.f32.mrb[0].mxu0
          %v1030 = vadd.f32 %v945, %v1029
          %v1031 = vpop.f32.mrb[0].mxu0
          %v1032 = vpop.f32.mrb[0].mxu0
          %v1033 = vpop.f32.mrb[0].mxu0
          %1034 = vdwg.mxu0
          %v1035 = vpack.c.bf16 %v1030, %v1030
          %v1036 = vld [vmem:[%s789] sm:$0xf]
          %v1037 = vld [vmem:[#allocation15] sm:$0xf]
          %v1038 = vld [vmem:[#allocation15 + $0x4] sm:$0xf]
          %v1039 = vld [vmem:[#allocation15 + $0x8] sm:$0xf]
          %v1040 = vld [vmem:[#allocation15 + $0xc] sm:$0xf]
          %v1041 = vld [vmem:[#allocation15 + $0x10] sm:$0xf]
          %v1042 = vld [vmem:[#allocation15 + $0x14] sm:$0xf]
          %v1043 = vld [vmem:[#allocation15 + $0x18] sm:$0xf]
          %v1044 = vld [vmem:[#allocation15 + $0x1c] sm:$0xf]
          %v1045 = vld [vmem:[#allocation15 + $0x20] sm:$0xf]
          %v1046 = vld [vmem:[#allocation15 + $0x24] sm:$0xf]
          %v1047 = vld [vmem:[#allocation15 + $0x28] sm:$0xf]
          %v1048 = vld [vmem:[#allocation15 + $0x2c] sm:$0xf]
          %v1049 = vld [vmem:[#allocation15 + $0x30] sm:$0xf]
          %v1050 = vld [vmem:[#allocation15 + $0x34] sm:$0xf]
          %v1051 = vld [vmem:[#allocation15 + $0x38] sm:$0xf]
          %v1052 = vld [vmem:[#allocation15 + $0x3c] sm:$0xf]
          %v1053 = vld [vmem:[#allocation24] sm:$0x1]
          %v1055 = vlaneseq
          %v1056 = vshrl.u32 %v1055, 7
          %v1057 = vsub.s32 0, %v1056
          %v1058 = vrot.slane %v1053, %v1057
          %v1076 = vunpack.c.l.b16 %v1037
          %v1077 = vunpack.c.l.b16 %v1038
          %v1078 = vunpack.c.l.b16 %v1039
          %v1079 = vunpack.c.l.b16 %v1040
          %v1080 = vunpack.c.l.b16 %v1041
          %v1081 = vunpack.c.l.b16 %v1042
          %v1082 = vunpack.c.l.b16 %v1043
          %v1083 = vunpack.c.l.b16 %v1044
          %v1084 = vunpack.c.l.b16 %v1045
          %v1085 = vunpack.c.l.b16 %v1046
          %v1086 = vunpack.c.l.b16 %v1047
          %v1087 = vunpack.c.l.b16 %v1048
          %v1088 = vunpack.c.l.b16 %v1049
          %v1089 = vunpack.c.l.b16 %v1050
          %v1090 = vunpack.c.l.b16 %v1051
          %v1091 = vunpack.c.l.b16 %v1052
          %v1092 = vpack.c.b16 %v1077, %v1076
          %v1093 = vpack.c.b16 %v1079, %v1078
          %v1094 = vpack.c.b16 %v1081, %v1080
          %v1095 = vpack.c.b16 %v1083, %v1082
          %v1096 = vpack.c.b16 %v1085, %v1084
          %v1097 = vpack.c.b16 %v1087, %v1086
          %v1098 = vpack.c.b16 %v1089, %v1088
          %v1099 = vpack.c.b16 %v1091, %v1090
          %1108 = vmatprep.subr.bf16.mxu0 0
          %1109 = vmatpush1.bf16.msra.mxu0 %v1092
          %1110 = vmatprep.subr.bf16.mxu0 0
          %1111 = vmatpush1.bf16.msra.mxu0 %v1093
          %1112 = vmatprep.subr.bf16.mxu0 0
          %1113 = vmatpush1.bf16.msra.mxu0 %v1094
          %1114 = vmatprep.subr.bf16.mxu0 0
          %1115 = vmatpush1.bf16.msra.mxu0 %v1095
          %1116 = vmatprep.subr.bf16.mxu0 0
          %1117 = vmatpush1.bf16.msra.mxu0 %v1096
          %1118 = vmatprep.subr.bf16.mxu0 0
          %1119 = vmatpush1.bf16.msra.mxu0 %v1097
          %1120 = vmatprep.subr.bf16.mxu0 0
          %1121 = vmatpush1.bf16.msra.mxu0 %v1098
          %1122 = vmatprep.subr.bf16.mxu0 0
          %1123 = vmatpush1.bf16.msra.mxu0 %v1099
          %1124 = vmatprep.subr.bf16.mxu0 0
          %1125 = vmatpush1.bf16.msra.mxu0 0
          %1126 = vmatprep.subr.bf16.mxu0 0
          %1127 = vmatpush1.bf16.msra.mxu0 0
          %1128 = vmatprep.subr.bf16.mxu0 0
          %1129 = vmatpush1.bf16.msra.mxu0 0
          %1130 = vmatprep.subr.bf16.mxu0 0
          %1131 = vmatpush1.bf16.msra.mxu0 0
          %1132 = vmatprep.subr.bf16.mxu0 0
          %1133 = vmatpush1.bf16.msra.mxu0 0
          %1134 = vmatprep.subr.bf16.mxu0 0
          %1135 = vmatpush1.bf16.msra.mxu0 0
          %1136 = vmatprep.subr.bf16.mxu0 0
          %1137 = vmatpush1.bf16.msra.mxu0 0
          %1138 = vmatprep.subr.bf16.mxu0 0
          %1139 = vmatpush1.bf16.msra.mxu0 0
          %1140 = vmatprep.mubr.bf16.mxu0 0
          %1141 = vmatmul.mubr.bf16.gmra.mrb[0].mxu0 %v1036
          %v1142 = vpop.f32.mrb[0].mxu0
          %v1143 = vadd.f32 %v1058, %v1142
          %v1144 = vpop.f32.mrb[0].mxu0
          %v1145 = vpop.f32.mrb[0].mxu0
          %v1146 = vpop.f32.mrb[0].mxu0
          %1147 = vdwg.mxu0
          %v1148 = vpack.c.bf16 %v1143, %v1143
          %vm1149 = vcmask 125952
          %1150 = vst.msk [vmem:[#allocation2] sm:$0xf] %vm1149, %v1035
          %1151 = vst.msk [vmem:[#allocation3] sm:$0xf] %vm1149, %v1148
          %v1153 = vunpack.c.l.b16 %v1035
          %v1154 = vpack.c.b16 %v1153, %v1153
          %1155 = vrot.lane.b32.xlu0 %v1154, 112
          %v1156 = vpop.permute.xlu0 %1155
          %s1158 = scalar_lea.vmem [#allocation2], 4
          %1159 = vst.msk [vmem:[%s1158] sm:$0xf] %vm1149, %v1156
          %v1161 = vunpack.c.l.b16 %v1148
          %v1162 = vpack.c.b16 %v1161, %v1161
          %1163 = vrot.lane.b32.xlu0 %v1162, 112
          %v1164 = vpop.permute.xlu0 %1163
          %s1166 = scalar_lea.vmem [#allocation3], 4
          %1167 = vst.msk [vmem:[%s1166] sm:$0xf] %vm1149, %v1164
          %1168 = vrot.lane.b32.xlu0 %v1154, 96
          %v1169 = vpop.permute.xlu0 %1168
          %s1171 = scalar_lea.vmem [#allocation2], 8
          %1172 = vst.msk [vmem:[%s1171] sm:$0xf] %vm1149, %v1169
          %1173 = vrot.lane.b32.xlu0 %v1162, 96
          %v1174 = vpop.permute.xlu0 %1173
          %s1176 = scalar_lea.vmem [#allocation3], 8
          %1177 = vst.msk [vmem:[%s1176] sm:$0xf] %vm1149, %v1174
          %1178 = vrot.lane.b32.xlu0 %v1154, 80
          %v1179 = vpop.permute.xlu0 %1178
          %s1181 = scalar_lea.vmem [#allocation2], 12
          %1182 = vst.msk [vmem:[%s1181] sm:$0xf] %vm1149, %v1179
          %1183 = vrot.lane.b32.xlu0 %v1162, 80
          %v1184 = vpop.permute.xlu0 %1183
          %s1186 = scalar_lea.vmem [#allocation3], 12
          %1187 = vst.msk [vmem:[%s1186] sm:$0xf] %vm1149, %v1184
        $region176: #{tpu_custom_call.1} parent=95 // pred_fallthru
          _
        %v1188 = vld [vmem:[%s771] sm:$0xf]
        %v1189 = vld [vmem:[#allocation12] sm:$0xf]
        %v1190 = vld [vmem:[#allocation12 + $0x4] sm:$0xf]
        %v1191 = vld [vmem:[#allocation12 + $0x8] sm:$0xf]
        %v1192 = vld [vmem:[#allocation12 + $0xc] sm:$0xf]
        %v1193 = vld [vmem:[#allocation12 + $0x10] sm:$0xf]
        %v1194 = vld [vmem:[#allocation12 + $0x14] sm:$0xf]
        %v1195 = vld [vmem:[#allocation12 + $0x18] sm:$0xf]
        %v1196 = vld [vmem:[#allocation12 + $0x1c] sm:$0xf]
        %v1197 = vld [vmem:[#allocation12 + $0x20] sm:$0xf]
        %v1198 = vld [vmem:[#allocation12 + $0x24] sm:$0xf]
        %v1199 = vld [vmem:[#allocation12 + $0x28] sm:$0xf]
        %v1200 = vld [vmem:[#allocation12 + $0x2c] sm:$0xf]
        %v1201 = vld [vmem:[#allocation12 + $0x30] sm:$0xf]
        %v1202 = vld [vmem:[#allocation12 + $0x34] sm:$0xf]
        %v1203 = vld [vmem:[#allocation12 + $0x38] sm:$0xf]
        %v1204 = vld [vmem:[#allocation12 + $0x3c] sm:$0xf]
        %v1205 = vld [vmem:[#allocation21] sm:$0x1]
        %v1207 = vlaneseq
        %v1208 = vshrl.u32 %v1207, 7
        %v1209 = vsub.s32 0, %v1208
        %v1210 = vrot.slane %v1205, %v1209
        %v1228 = vunpack.c.l.b16 %v1189
        %v1229 = vunpack.c.l.b16 %v1190
        %v1230 = vunpack.c.l.b16 %v1191
        %v1231 = vunpack.c.l.b16 %v1192
        %v1232 = vunpack.c.l.b16 %v1193
        %v1233 = vunpack.c.l.b16 %v1194
        %v1234 = vunpack.c.l.b16 %v1195
        %v1235 = vunpack.c.l.b16 %v1196
        %v1236 = vunpack.c.l.b16 %v1197
        %v1237 = vunpack.c.l.b16 %v1198
        %v1238 = vunpack.c.l.b16 %v1199
        %v1239 = vunpack.c.l.b16 %v1200
        %v1240 = vunpack.c.l.b16 %v1201
        %v1241 = vunpack.c.l.b16 %v1202
        %v1242 = vunpack.c.l.b16 %v1203
        %v1243 = vunpack.c.l.b16 %v1204
        %v1244 = vpack.c.b16 %v1229, %v1228
        %v1245 = vpack.c.b16 %v1231, %v1230
        %v1246 = vpack.c.b16 %v1233, %v1232
        %v1247 = vpack.c.b16 %v1235, %v1234
        %v1248 = vpack.c.b16 %v1237, %v1236
        %v1249 = vpack.c.b16 %v1239, %v1238
        %v1250 = vpack.c.b16 %v1241, %v1240
        %v1251 = vpack.c.b16 %v1243, %v1242
        %1260 = vmatprep.subr.bf16.mxu0 0
        %1261 = vmatpush1.bf16.msra.mxu0 %v1244
        %1262 = vmatprep.subr.bf16.mxu0 0
        %1263 = vmatpush1.bf16.msra.mxu0 %v1245
        %1264 = vmatprep.subr.bf16.mxu0 0
        %1265 = vmatpush1.bf16.msra.mxu0 %v1246
        %1266 = vmatprep.subr.bf16.mxu0 0
        %1267 = vmatpush1.bf16.msra.mxu0 %v1247
        %1268 = vmatprep.subr.bf16.mxu0 0
        %1269 = vmatpush1.bf16.msra.mxu0 %v1248
        %1270 = vmatprep.subr.bf16.mxu0 0
        %1271 = vmatpush1.bf16.msra.mxu0 %v1249
        %1272 = vmatprep.subr.bf16.mxu0 0
        %1273 = vmatpush1.bf16.msra.mxu0 %v1250
        %1274 = vmatprep.subr.bf16.mxu0 0
        %1275 = vmatpush1.bf16.msra.mxu0 %v1251
        %1276 = vmatprep.subr.bf16.mxu0 0
        %1277 = vmatpush1.bf16.msra.mxu0 0
        %1278 = vmatprep.subr.bf16.mxu0 0
        %1279 = vmatpush1.bf16.msra.mxu0 0
        %1280 = vmatprep.subr.bf16.mxu0 0
        %1281 = vmatpush1.bf16.msra.mxu0 0
        %1282 = vmatprep.subr.bf16.mxu0 0
        %1283 = vmatpush1.bf16.msra.mxu0 0
        %1284 = vmatprep.subr.bf16.mxu0 0
        %1285 = vmatpush1.bf16.msra.mxu0 0
        %1286 = vmatprep.subr.bf16.mxu0 0
        %1287 = vmatpush1.bf16.msra.mxu0 0
        %1288 = vmatprep.subr.bf16.mxu0 0
        %1289 = vmatpush1.bf16.msra.mxu0 0
        %1290 = vmatprep.subr.bf16.mxu0 0
        %1291 = vmatpush1.bf16.msra.mxu0 0
        %1292 = vmatprep.mubr.bf16.mxu0 0
        %1293 = vmatmul.mubr.bf16.gmra.mrb[0].mxu0 %v1188
        %v1294 = vpop.f32.mrb[0].mxu0
        %v1295 = vadd.f32 %v1210, %v1294
        %v1296 = vpop.f32.mrb[0].mxu0
        %v1297 = vpop.f32.mrb[0].mxu0
        %v1298 = vpop.f32.mrb[0].mxu0
        %1299 = vdwg.mxu0
        %v1300 = vpack.c.bf16 %v1295, %v1295
        %vm1301 = vcmask 125952
        %1302 = vst.msk [vmem:[#allocation4] sm:$0xf] %vm1301, %v1300
        %v1304 = vunpack.c.l.b16 %v1300
        %v1305 = vpack.c.b16 %v1304, %v1304
        %1306 = vrot.lane.b32.xlu0 %v1305, 112
        %v1307 = vpop.permute.xlu0 %1306
        %s1309 = scalar_lea.vmem [#allocation4], 4
        %1310 = vst.msk [vmem:[%s1309] sm:$0xf] %vm1301, %v1307
        %1311 = vrot.lane.b32.xlu0 %v1305, 96
        %v1312 = vpop.permute.xlu0 %1311
        %s1314 = scalar_lea.vmem [#allocation4], 8
        %1315 = vst.msk [vmem:[%s1314] sm:$0xf] %vm1301, %v1312
        %1316 = vrot.lane.b32.xlu0 %v1305, 80
        %v1317 = vpop.permute.xlu0 %1316
        %s1319 = scalar_lea.vmem [#allocation4], 12
        %1320 = vst.msk [vmem:[%s1319] sm:$0xf] %vm1301, %v1317
        %v1321 = vld [vmem:[#allocation4] sm:$0xf]
        %v1322 = vld [vmem:[#allocation4 + $0x4] sm:$0xf]
        %v1323 = vld [vmem:[#allocation4 + $0x8] sm:$0xf]
        %v1324 = vld [vmem:[#allocation4 + $0xc] sm:$0xf]
        %v1325 = vld [vmem:[#allocation2] sm:$0xf]
        %v1326 = vld [vmem:[#allocation2 + $0x4] sm:$0xf]
        %v1327 = vld [vmem:[#allocation2 + $0x8] sm:$0xf]
        %v1328 = vld [vmem:[#allocation2 + $0xc] sm:$0xf]
        %vm1329 = vcmask 130048
        %v1331 = vsel %vm1329, %v1321, 0
        %v1334 = vsel %vm1329, %v1325, 0
        %1336 = vmatprep.subr.bf16.mxu0 0
        %1337 = vmatpush1.bf16.xpose.msra.mxu0 %v1334
        %1338 = vmatprep.subr.bf16.mxu0 0
        %1339 = vmatpush1.bf16.xpose.msra.mxu0 0
        %1340 = vmatprep.subr.bf16.mxu0 0
        %1341 = vmatpush1.bf16.xpose.msra.mxu0 0
        %1342 = vmatprep.subr.bf16.mxu0 0
        %1343 = vmatpush1.bf16.xpose.msra.mxu0 0
        %1344 = vmatprep.subr.bf16.mxu0 0
        %1345 = vmatpush1.bf16.xpose.msra.mxu0 0
        %1346 = vmatprep.subr.bf16.mxu0 0
        %1347 = vmatpush1.bf16.xpose.msra.mxu0 0
        %1348 = vmatprep.subr.bf16.mxu0 0
        %1349 = vmatpush1.bf16.xpose.msra.mxu0 0
        %1350 = vmatprep.subr.bf16.mxu0 0
        %1351 = vmatpush1.bf16.xpose.msra.mxu0 0
        %1352 = vmatprep.subr.bf16.mxu0 0
        %1353 = vmatpush1.bf16.xpose.msra.mxu0 0
        %1354 = vmatprep.subr.bf16.mxu0 0
        %1355 = vmatpush1.bf16.xpose.msra.mxu0 0
        %1356 = vmatprep.subr.bf16.mxu0 0
        %1357 = vmatpush1.bf16.xpose.msra.mxu0 0
        %1358 = vmatprep.subr.bf16.mxu0 0
        %1359 = vmatpush1.bf16.xpose.msra.mxu0 0
        %1360 = vmatprep.subr.bf16.mxu0 0
        %1361 = vmatpush1.bf16.xpose.msra.mxu0 0
        %1362 = vmatprep.subr.bf16.mxu0 0
        %1363 = vmatpush1.bf16.xpose.msra.mxu0 0
        %1364 = vmatprep.subr.bf16.mxu0 0
        %1365 = vmatpush1.bf16.xpose.msra.mxu0 0
        %1366 = vmatprep.subr.bf16.mxu0 0
        %1367 = vmatpush1.bf16.xpose.msra.mxu0 0
        %1368 = vmatprep.mubr.bf16.mxu0 0
        %1369 = vmatmul.mubr.bf16.gmra.mrb[0].mxu0 %v1331
        %v1370 = vpop.f32.mrb[0].mxu0
        %v1371 = vadd.f32 0.0, %v1370
        %v1372 = vpop.f32.mrb[0].mxu0
        %v1373 = vpop.f32.mrb[0].mxu0
        %v1374 = vpop.f32.mrb[0].mxu0
        %1375 = vdwg.mxu0
        %v1377 = vsel %vm1329, %v1322, 0
        %v1380 = vsel %vm1329, %v1326, 0
        %1382 = vmatprep.subr.bf16.mxu0 0
        %1383 = vmatpush1.bf16.xpose.msra.mxu0 %v1380
        %1384 = vmatprep.subr.bf16.mxu0 0
        %1385 = vmatpush1.bf16.xpose.msra.mxu0 0
        %1386 = vmatprep.subr.bf16.mxu0 0
        %1387 = vmatpush1.bf16.xpose.msra.mxu0 0
        %1388 = vmatprep.subr.bf16.mxu0 0
        %1389 = vmatpush1.bf16.xpose.msra.mxu0 0
        %1390 = vmatprep.subr.bf16.mxu0 0
        %1391 = vmatpush1.bf16.xpose.msra.mxu0 0
        %1392 = vmatprep.subr.bf16.mxu0 0
        %1393 = vmatpush1.bf16.xpose.msra.mxu0 0
        %1394 = vmatprep.subr.bf16.mxu0 0
        %1395 = vmatpush1.bf16.xpose.msra.mxu0 0
        %1396 = vmatprep.subr.bf16.mxu0 0
        %1397 = vmatpush1.bf16.xpose.msra.mxu0 0
        %1398 = vmatprep.subr.bf16.mxu0 0
        %1399 = vmatpush1.bf16.xpose.msra.mxu0 0
        %1400 = vmatprep.subr.bf16.mxu0 0
        %1401 = vmatpush1.bf16.xpose.msra.mxu0 0
        %1402 = vmatprep.subr.bf16.mxu0 0
        %1403 = vmatpush1.bf16.xpose.msra.mxu0 0
        %1404 = vmatprep.subr.bf16.mxu0 0
        %1405 = vmatpush1.bf16.xpose.msra.mxu0 0
        %1406 = vmatprep.subr.bf16.mxu0 0
        %1407 = vmatpush1.bf16.xpose.msra.mxu0 0
        %1408 = vmatprep.subr.bf16.mxu0 0
        %1409 = vmatpush1.bf16.xpose.msra.mxu0 0
        %1410 = vmatprep.subr.bf16.mxu0 0
        %1411 = vmatpush1.bf16.xpose.msra.mxu0 0
        %1412 = vmatprep.subr.bf16.mxu0 0
        %1413 = vmatpush1.bf16.xpose.msra.mxu0 0
        %1414 = vmatprep.mubr.bf16.mxu0 0
        %1415 = vmatmul.mubr.bf16.gmra.mrb[0].mxu0 %v1377
        %v1416 = vpop.f32.mrb[0].mxu0
        %v1417 = vadd.f32 0.0, %v1416
        %v1418 = vpop.f32.mrb[0].mxu0
        %v1419 = vpop.f32.mrb[0].mxu0
        %v1420 = vpop.f32.mrb[0].mxu0
        %1421 = vdwg.mxu0
        %v1423 = vsel %vm1329, %v1323, 0
        %v1426 = vsel %vm1329, %v1327, 0
        %1428 = vmatprep.subr.bf16.mxu0 0
        %1429 = vmatpush1.bf16.xpose.msra.mxu0 %v1426
        %1430 = vmatprep.subr.bf16.mxu0 0
        %1431 = vmatpush1.bf16.xpose.msra.mxu0 0
        %1432 = vmatprep.subr.bf16.mxu0 0
        %1433 = vmatpush1.bf16.xpose.msra.mxu0 0
        %1434 = vmatprep.subr.bf16.mxu0 0
        %1435 = vmatpush1.bf16.xpose.msra.mxu0 0
        %1436 = vmatprep.subr.bf16.mxu0 0
        %1437 = vmatpush1.bf16.xpose.msra.mxu0 0
        %1438 = vmatprep.subr.bf16.mxu0 0
        %1439 = vmatpush1.bf16.xpose.msra.mxu0 0
        %1440 = vmatprep.subr.bf16.mxu0 0
        %1441 = vmatpush1.bf16.xpose.msra.mxu0 0
        %1442 = vmatprep.subr.bf16.mxu0 0
        %1443 = vmatpush1.bf16.xpose.msra.mxu0 0
        %1444 = vmatprep.subr.bf16.mxu0 0
        %1445 = vmatpush1.bf16.xpose.msra.mxu0 0
        %1446 = vmatprep.subr.bf16.mxu0 0
        %1447 = vmatpush1.bf16.xpose.msra.mxu0 0
        %1448 = vmatprep.subr.bf16.mxu0 0
        %1449 = vmatpush1.bf16.xpose.msra.mxu0 0
        %1450 = vmatprep.subr.bf16.mxu0 0
        %1451 = vmatpush1.bf16.xpose.msra.mxu0 0
        %1452 = vmatprep.subr.bf16.mxu0 0
        %1453 = vmatpush1.bf16.xpose.msra.mxu0 0
        %1454 = vmatprep.subr.bf16.mxu0 0
        %1455 = vmatpush1.bf16.xpose.msra.mxu0 0
        %1456 = vmatprep.subr.bf16.mxu0 0
        %1457 = vmatpush1.bf16.xpose.msra.mxu0 0
        %1458 = vmatprep.subr.bf16.mxu0 0
        %1459 = vmatpush1.bf16.xpose.msra.mxu0 0
        %1460 = vmatprep.mubr.bf16.mxu0 0
        %1461 = vmatmul.mubr.bf16.gmra.mrb[0].mxu0 %v1423
        %v1462 = vpop.f32.mrb[0].mxu0
        %v1463 = vadd.f32 0.0, %v1462
        %v1464 = vpop.f32.mrb[0].mxu0
        %v1465 = vpop.f32.mrb[0].mxu0
        %v1466 = vpop.f32.mrb[0].mxu0
        %1467 = vdwg.mxu0
        %v1469 = vsel %vm1329, %v1324, 0
        %v1472 = vsel %vm1329, %v1328, 0
        %1474 = vmatprep.subr.bf16.mxu0 0
        %1475 = vmatpush1.bf16.xpose.msra.mxu0 %v1472
        %1476 = vmatprep.subr.bf16.mxu0 0
        %1477 = vmatpush1.bf16.xpose.msra.mxu0 0
        %1478 = vmatprep.subr.bf16.mxu0 0
        %1479 = vmatpush1.bf16.xpose.msra.mxu0 0
        %1480 = vmatprep.subr.bf16.mxu0 0
        %1481 = vmatpush1.bf16.xpose.msra.mxu0 0
        %1482 = vmatprep.subr.bf16.mxu0 0
        %1483 = vmatpush1.bf16.xpose.msra.mxu0 0
        %1484 = vmatprep.subr.bf16.mxu0 0
        %1485 = vmatpush1.bf16.xpose.msra.mxu0 0
        %1486 = vmatprep.subr.bf16.mxu0 0
        %1487 = vmatpush1.bf16.xpose.msra.mxu0 0
        %1488 = vmatprep.subr.bf16.mxu0 0
        %1489 = vmatpush1.bf16.xpose.msra.mxu0 0
        %1490 = vmatprep.subr.bf16.mxu0 0
        %1491 = vmatpush1.bf16.xpose.msra.mxu0 0
        %1492 = vmatprep.subr.bf16.mxu0 0
        %1493 = vmatpush1.bf16.xpose.msra.mxu0 0
        %1494 = vmatprep.subr.bf16.mxu0 0
        %1495 = vmatpush1.bf16.xpose.msra.mxu0 0
        %1496 = vmatprep.subr.bf16.mxu0 0
        %1497 = vmatpush1.bf16.xpose.msra.mxu0 0
        %1498 = vmatprep.subr.bf16.mxu0 0
        %1499 = vmatpush1.bf16.xpose.msra.mxu0 0
        %1500 = vmatprep.subr.bf16.mxu0 0
        %1501 = vmatpush1.bf16.xpose.msra.mxu0 0
        %1502 = vmatprep.subr.bf16.mxu0 0
        %1503 = vmatpush1.bf16.xpose.msra.mxu0 0
        %1504 = vmatprep.subr.bf16.mxu0 0
        %1505 = vmatpush1.bf16.xpose.msra.mxu0 0
        %1506 = vmatprep.mubr.bf16.mxu0 0
        %1507 = vmatmul.mubr.bf16.gmra.mrb[0].mxu0 %v1469
        %v1508 = vpop.f32.mrb[0].mxu0
        %v1509 = vadd.f32 0.0, %v1508
        %v1510 = vpop.f32.mrb[0].mxu0
        %v1511 = vpop.f32.mrb[0].mxu0
        %v1512 = vpop.f32.mrb[0].mxu0
        %1513 = vdwg.mxu0
        %vm1514 = vcmask 64512
        %v1515 = vsel %vm1514, %v1371, -inf
        %1516 = vmax.xlane.f32.xlu0 %v1515
        %v1517 = vpop.xlane.xlu0 %1516
        %v1518 = vsel %vm1514, %v1417, -inf
        %1519 = vmax.xlane.f32.xlu0 %v1518
        %v1520 = vpop.xlane.xlu0 %1519
        %v1521 = vsel %vm1514, %v1463, -inf
        %1522 = vmax.xlane.f32.xlu0 %v1521
        %v1523 = vpop.xlane.xlu0 %1522
        %v1524 = vsel %vm1514, %v1509, -inf
        %1525 = vmax.xlane.f32.xlu0 %v1524
        %v1526 = vpop.xlane.xlu0 %1525
        %v1527 = vsub.f32 %v1371, %v1517
        %v1528 = vsub.f32 %v1417, %v1520
        %v1529 = vsub.f32 %v1463, %v1523
        %v1530 = vsub.f32 %v1509, %v1526
        %v1531 = vmul.f32 %v1527, 1.442695
        %v1532 = vpow.pop %v1531
        %v1533 = vmul.f32 %v1528, 1.442695
        %v1534 = vpow.pop %v1533
        %v1535 = vmul.f32 %v1529, 1.442695
        %v1536 = vpow.pop %v1535
        %v1537 = vmul.f32 %v1530, 1.442695
        %v1538 = vpow.pop %v1537
        %v1539 = vsel %vm1514, %v1532, 0.0
        %1540 = vadd.xlane.f32.xlu0 %v1539
        %v1541 = vpop.xlane.xlu0 %1540
        %v1542 = vsel %vm1514, %v1534, 0.0
        %1543 = vadd.xlane.f32.xlu0 %v1542
        %v1544 = vpop.xlane.xlu0 %1543
        %v1545 = vsel %vm1514, %v1536, 0.0
        %1546 = vadd.xlane.f32.xlu0 %v1545
        %v1547 = vpop.xlane.xlu0 %1546
        %v1548 = vsel %vm1514, %v1538, 0.0
        %1549 = vadd.xlane.f32.xlu0 %v1548
        %v1550 = vpop.xlane.xlu0 %1549
        %v1551 = vrcp.pop %v1541
        %v1552 = vrcp.pop %v1544
        %v1553 = vrcp.pop %v1547
        %v1554 = vrcp.pop %v1550
        %v1555 = vmul.f32 %v1532, %v1551
        %v1556 = vmul.f32 %v1534, %v1552
        %v1557 = vmul.f32 %v1536, %v1553
        %v1558 = vmul.f32 %v1538, %v1554
        %v1559 = vpack.c.bf16 %v1555, %v1555
        %v1560 = vpack.c.bf16 %v1556, %v1556
        %v1561 = vpack.c.bf16 %v1557, %v1557
        %v1562 = vpack.c.bf16 %v1558, %v1558
        %v1563 = vld [vmem:[#allocation3] sm:$0xf]
        %v1564 = vld [vmem:[#allocation3 + $0x4] sm:$0xf]
        %v1565 = vld [vmem:[#allocation3 + $0x8] sm:$0xf]
        %v1566 = vld [vmem:[#allocation3 + $0xc] sm:$0xf]
        %v1568 = vsel %vm1514, %v1559, 0
        %vm1570 = vcmask 1043456
        %v1572 = vsel %vm1570, %v1563, 0
        %1574 = vmatprep.subr.bf16.mxu0 0
        %1575 = vmatpush1.bf16.msra.mxu0 %v1572
        %1576 = vmatprep.subr.bf16.mxu0 0
        %1577 = vmatpush1.bf16.msra.mxu0 0
        %1578 = vmatprep.subr.bf16.mxu0 0
        %1579 = vmatpush1.bf16.msra.mxu0 0
        %1580 = vmatprep.subr.bf16.mxu0 0
        %1581 = vmatpush1.bf16.msra.mxu0 0
        %1582 = vmatprep.subr.bf16.mxu0 0
        %1583 = vmatpush1.bf16.msra.mxu0 0
        %1584 = vmatprep.subr.bf16.mxu0 0
        %1585 = vmatpush1.bf16.msra.mxu0 0
        %1586 = vmatprep.subr.bf16.mxu0 0
        %1587 = vmatpush1.bf16.msra.mxu0 0
        %1588 = vmatprep.subr.bf16.mxu0 0
        %1589 = vmatpush1.bf16.msra.mxu0 0
        %1590 = vmatprep.subr.bf16.mxu0 0
        %1591 = vmatpush1.bf16.msra.mxu0 0
        %1592 = vmatprep.subr.bf16.mxu0 0
        %1593 = vmatpush1.bf16.msra.mxu0 0
        %1594 = vmatprep.subr.bf16.mxu0 0
        %1595 = vmatpush1.bf16.msra.mxu0 0
        %1596 = vmatprep.subr.bf16.mxu0 0
        %1597 = vmatpush1.bf16.msra.mxu0 0
        %1598 = vmatprep.subr.bf16.mxu0 0
        %1599 = vmatpush1.bf16.msra.mxu0 0
        %1600 = vmatprep.subr.bf16.mxu0 0
        %1601 = vmatpush1.bf16.msra.mxu0 0
        %1602 = vmatprep.subr.bf16.mxu0 0
        %1603 = vmatpush1.bf16.msra.mxu0 0
        %1604 = vmatprep.subr.bf16.mxu0 0
        %1605 = vmatpush1.bf16.msra.mxu0 0
        %1606 = vmatprep.mubr.bf16.mxu0 0
        %1607 = vmatmul.mubr.bf16.gmra.mrb[0].mxu0 %v1568
        %v1608 = vpop.f32.mrb[0].mxu0
        %v1609 = vadd.f32 0.0, %v1608
        %v1610 = vpop.f32.mrb[0].mxu0
        %v1611 = vpop.f32.mrb[0].mxu0
        %v1612 = vpop.f32.mrb[0].mxu0
        %1613 = vdwg.mxu0
        %v1615 = vsel %vm1514, %v1560, 0
        %v1618 = vsel %vm1570, %v1564, 0
        %1620 = vmatprep.subr.bf16.mxu0 0
        %1621 = vmatpush1.bf16.msra.mxu0 %v1618
        %1622 = vmatprep.subr.bf16.mxu0 0
        %1623 = vmatpush1.bf16.msra.mxu0 0
        %1624 = vmatprep.subr.bf16.mxu0 0
        %1625 = vmatpush1.bf16.msra.mxu0 0
        %1626 = vmatprep.subr.bf16.mxu0 0
        %1627 = vmatpush1.bf16.msra.mxu0 0
        %1628 = vmatprep.subr.bf16.mxu0 0
        %1629 = vmatpush1.bf16.msra.mxu0 0
        %1630 = vmatprep.subr.bf16.mxu0 0
        %1631 = vmatpush1.bf16.msra.mxu0 0
        %1632 = vmatprep.subr.bf16.mxu0 0
        %1633 = vmatpush1.bf16.msra.mxu0 0
        %1634 = vmatprep.subr.bf16.mxu0 0
        %1635 = vmatpush1.bf16.msra.mxu0 0
        %1636 = vmatprep.subr.bf16.mxu0 0
        %1637 = vmatpush1.bf16.msra.mxu0 0
        %1638 = vmatprep.subr.bf16.mxu0 0
        %1639 = vmatpush1.bf16.msra.mxu0 0
        %1640 = vmatprep.subr.bf16.mxu0 0
        %1641 = vmatpush1.bf16.msra.mxu0 0
        %1642 = vmatprep.subr.bf16.mxu0 0
        %1643 = vmatpush1.bf16.msra.mxu0 0
        %1644 = vmatprep.subr.bf16.mxu0 0
        %1645 = vmatpush1.bf16.msra.mxu0 0
        %1646 = vmatprep.subr.bf16.mxu0 0
        %1647 = vmatpush1.bf16.msra.mxu0 0
        %1648 = vmatprep.subr.bf16.mxu0 0
        %1649 = vmatpush1.bf16.msra.mxu0 0
        %1650 = vmatprep.subr.bf16.mxu0 0
        %1651 = vmatpush1.bf16.msra.mxu0 0
        %1652 = vmatprep.mubr.bf16.mxu0 0
        %1653 = vmatmul.mubr.bf16.gmra.mrb[0].mxu0 %v1615
        %v1654 = vpop.f32.mrb[0].mxu0
        %v1655 = vadd.f32 0.0, %v1654
        %v1656 = vpop.f32.mrb[0].mxu0
        %v1657 = vpop.f32.mrb[0].mxu0
        %v1658 = vpop.f32.mrb[0].mxu0
        %1659 = vdwg.mxu0
        %v1661 = vsel %vm1514, %v1561, 0
        %v1664 = vsel %vm1570, %v1565, 0
        %1666 = vmatprep.subr.bf16.mxu0 0
        %1667 = vmatpush1.bf16.msra.mxu0 %v1664
        %1668 = vmatprep.subr.bf16.mxu0 0
        %1669 = vmatpush1.bf16.msra.mxu0 0
        %1670 = vmatprep.subr.bf16.mxu0 0
        %1671 = vmatpush1.bf16.msra.mxu0 0
        %1672 = vmatprep.subr.bf16.mxu0 0
        %1673 = vmatpush1.bf16.msra.mxu0 0
        %1674 = vmatprep.subr.bf16.mxu0 0
        %1675 = vmatpush1.bf16.msra.mxu0 0
        %1676 = vmatprep.subr.bf16.mxu0 0
        %1677 = vmatpush1.bf16.msra.mxu0 0
        %1678 = vmatprep.subr.bf16.mxu0 0
        %1679 = vmatpush1.bf16.msra.mxu0 0
        %1680 = vmatprep.subr.bf16.mxu0 0
        %1681 = vmatpush1.bf16.msra.mxu0 0
        %1682 = vmatprep.subr.bf16.mxu0 0
        %1683 = vmatpush1.bf16.msra.mxu0 0
        %1684 = vmatprep.subr.bf16.mxu0 0
        %1685 = vmatpush1.bf16.msra.mxu0 0
        %1686 = vmatprep.subr.bf16.mxu0 0
        %1687 = vmatpush1.bf16.msra.mxu0 0
        %1688 = vmatprep.subr.bf16.mxu0 0
        %1689 = vmatpush1.bf16.msra.mxu0 0
        %1690 = vmatprep.subr.bf16.mxu0 0
        %1691 = vmatpush1.bf16.msra.mxu0 0
        %1692 = vmatprep.subr.bf16.mxu0 0
        %1693 = vmatpush1.bf16.msra.mxu0 0
        %1694 = vmatprep.subr.bf16.mxu0 0
        %1695 = vmatpush1.bf16.msra.mxu0 0
        %1696 = vmatprep.subr.bf16.mxu0 0
        %1697 = vmatpush1.bf16.msra.mxu0 0
        %1698 = vmatprep.mubr.bf16.mxu0 0
        %1699 = vmatmul.mubr.bf16.gmra.mrb[0].mxu0 %v1661
        %v1700 = vpop.f32.mrb[0].mxu0
        %v1701 = vadd.f32 0.0, %v1700
        %v1702 = vpop.f32.mrb[0].mxu0
        %v1703 = vpop.f32.mrb[0].mxu0
        %v1704 = vpop.f32.mrb[0].mxu0
        %1705 = vdwg.mxu0
        %v1707 = vsel %vm1514, %v1562, 0
        %v1710 = vsel %vm1570, %v1566, 0
        %1712 = vmatprep.subr.bf16.mxu0 0
        %1713 = vmatpush1.bf16.msra.mxu0 %v1710
        %1714 = vmatprep.subr.bf16.mxu0 0
        %1715 = vmatpush1.bf16.msra.mxu0 0
        %1716 = vmatprep.subr.bf16.mxu0 0
        %1717 = vmatpush1.bf16.msra.mxu0 0
        %1718 = vmatprep.subr.bf16.mxu0 0
        %1719 = vmatpush1.bf16.msra.mxu0 0
        %1720 = vmatprep.subr.bf16.mxu0 0
        %1721 = vmatpush1.bf16.msra.mxu0 0
        %1722 = vmatprep.subr.bf16.mxu0 0
        %1723 = vmatpush1.bf16.msra.mxu0 0
        %1724 = vmatprep.subr.bf16.mxu0 0
        %1725 = vmatpush1.bf16.msra.mxu0 0
        %1726 = vmatprep.subr.bf16.mxu0 0
        %1727 = vmatpush1.bf16.msra.mxu0 0
        %1728 = vmatprep.subr.bf16.mxu0 0
        %1729 = vmatpush1.bf16.msra.mxu0 0
        %1730 = vmatprep.subr.bf16.mxu0 0
        %1731 = vmatpush1.bf16.msra.mxu0 0
        %1732 = vmatprep.subr.bf16.mxu0 0
        %1733 = vmatpush1.bf16.msra.mxu0 0
        %1734 = vmatprep.subr.bf16.mxu0 0
        %1735 = vmatpush1.bf16.msra.mxu0 0
        %1736 = vmatprep.subr.bf16.mxu0 0
        %1737 = vmatpush1.bf16.msra.mxu0 0
        %1738 = vmatprep.subr.bf16.mxu0 0
        %1739 = vmatpush1.bf16.msra.mxu0 0
        %1740 = vmatprep.subr.bf16.mxu0 0
        %1741 = vmatpush1.bf16.msra.mxu0 0
        %1742 = vmatprep.subr.bf16.mxu0 0
        %1743 = vmatpush1.bf16.msra.mxu0 0
        %1744 = vmatprep.mubr.bf16.mxu0 0
        %1745 = vmatmul.mubr.bf16.gmra.mrb[0].mxu0 %v1707
        %v1746 = vpop.f32.mrb[0].mxu0
        %v1747 = vadd.f32 0.0, %v1746
        %v1748 = vpop.f32.mrb[0].mxu0
        %v1749 = vpop.f32.mrb[0].mxu0
        %v1750 = vpop.f32.mrb[0].mxu0
        %1751 = vdwg.mxu0
        %v1752 = vpack.c.bf16 %v1609, %v1609
        %v1753 = vpack.c.bf16 %v1655, %v1655
        %v1754 = vpack.c.bf16 %v1701, %v1701
        %v1755 = vpack.c.bf16 %v1747, %v1747
        %1756 = vst.msk [vmem:[#allocation5] sm:$0xf] %vm1301, %v1752
        %v1758 = vunpack.c.l.b16 %v1753
        %v1759 = vpack.c.b16 %v1758, %v1758
        %1760 = vrot.lane.b32.xlu0 %v1759, 16
        %v1761 = vpop.permute.xlu0 %1760
        %vm1763 = vcmask 257152
        %1764 = vst.msk [vmem:[#allocation5] sm:$0xf] %vm1763, %v1761
        %v1766 = vunpack.c.l.b16 %v1754
        %v1767 = vpack.c.b16 %v1766, %v1766
        %1768 = vrot.lane.b32.xlu0 %v1767, 32
        %v1769 = vpop.permute.xlu0 %1768
        %vm1771 = vcmask 388352
        %1772 = vst.msk [vmem:[#allocation5] sm:$0xf] %vm1771, %v1769
        %v1774 = vunpack.c.l.b16 %v1755
        %v1775 = vpack.c.b16 %v1774, %v1774
        %1776 = vrot.lane.b32.xlu0 %v1775, 48
        %v1777 = vpop.permute.xlu0 %1776
        %vm1779 = vcmask 519552
        %1780 = vst.msk [vmem:[#allocation5] sm:$0xf] %vm1779, %v1777
        %v1781 = vld [vmem:[#allocation5] sm:$0xf]
        %v1782 = vld [vmem:[#allocation17] sm:$0xf]
        %v1783 = vld [vmem:[#allocation17 + $0x4] sm:$0xf]
        %v1784 = vld [vmem:[#allocation17 + $0x8] sm:$0xf]
        %v1785 = vld [vmem:[#allocation17 + $0xc] sm:$0xf]
        %v1786 = vld [vmem:[#allocation17 + $0x10] sm:$0xf]
        %v1787 = vld [vmem:[#allocation17 + $0x14] sm:$0xf]
        %v1788 = vld [vmem:[#allocation17 + $0x18] sm:$0xf]
        %v1789 = vld [vmem:[#allocation17 + $0x1c] sm:$0xf]
        %v1790 = vld [vmem:[#allocation26] sm:$0x1]
        %v1792 = vlaneseq
        %v1793 = vshrl.u32 %v1792, 7
        %v1794 = vsub.s32 0, %v1793
        %v1795 = vrot.slane %v1790, %v1794
        %v1805 = vunpack.c.l.b16 %v1782
        %v1806 = vunpack.c.l.b16 %v1783
        %v1807 = vunpack.c.l.b16 %v1784
        %v1808 = vunpack.c.l.b16 %v1785
        %v1809 = vunpack.c.l.b16 %v1786
        %v1810 = vunpack.c.l.b16 %v1787
        %v1811 = vunpack.c.l.b16 %v1788
        %v1812 = vunpack.c.l.b16 %v1789
        %v1813 = vpack.c.b16 %v1806, %v1805
        %v1814 = vpack.c.b16 %v1808, %v1807
        %v1815 = vpack.c.b16 %v1810, %v1809
        %v1816 = vpack.c.b16 %v1812, %v1811
        %vm1821 = vcmask 523264
        %v1823 = vsel %vm1821, %v1781, 0
        %1825 = vmatprep.subr.bf16.mxu0 0
        %1826 = vmatpush1.bf16.msra.mxu0 %v1813
        %1827 = vmatprep.subr.bf16.mxu0 0
        %1828 = vmatpush1.bf16.msra.mxu0 %v1814
        %1829 = vmatprep.subr.bf16.mxu0 0
        %1830 = vmatpush1.bf16.msra.mxu0 %v1815
        %1831 = vmatprep.subr.bf16.mxu0 0
        %1832 = vmatpush1.bf16.msra.mxu0 %v1816
        %1833 = vmatprep.subr.bf16.mxu0 0
        %1834 = vmatpush1.bf16.msra.mxu0 0
        %1835 = vmatprep.subr.bf16.mxu0 0
        %1836 = vmatpush1.bf16.msra.mxu0 0
        %1837 = vmatprep.subr.bf16.mxu0 0
        %1838 = vmatpush1.bf16.msra.mxu0 0
        %1839 = vmatprep.subr.bf16.mxu0 0
        %1840 = vmatpush1.bf16.msra.mxu0 0
        %1841 = vmatprep.subr.bf16.mxu0 0
        %1842 = vmatpush1.bf16.msra.mxu0 0
        %1843 = vmatprep.subr.bf16.mxu0 0
        %1844 = vmatpush1.bf16.msra.mxu0 0
        %1845 = vmatprep.subr.bf16.mxu0 0
        %1846 = vmatpush1.bf16.msra.mxu0 0
        %1847 = vmatprep.subr.bf16.mxu0 0
        %1848 = vmatpush1.bf16.msra.mxu0 0
        %1849 = vmatprep.subr.bf16.mxu0 0
        %1850 = vmatpush1.bf16.msra.mxu0 0
        %1851 = vmatprep.subr.bf16.mxu0 0
        %1852 = vmatpush1.bf16.msra.mxu0 0
        %1853 = vmatprep.subr.bf16.mxu0 0
        %1854 = vmatpush1.bf16.msra.mxu0 0
        %1855 = vmatprep.subr.bf16.mxu0 0
        %1856 = vmatpush1.bf16.msra.mxu0 0
        %1857 = vmatprep.mubr.bf16.mxu0 0
        %1858 = vmatmul.mubr.bf16.gmra.mrb[0].mxu0 %v1823
        %v1859 = vpop.f32.mrb[0].mxu0
        %v1860 = vadd.f32 %v1795, %v1859
        %v1861 = vpop.f32.mrb[0].mxu0
        %v1862 = vpop.f32.mrb[0].mxu0
        %v1863 = vpop.f32.mrb[0].mxu0
        %1864 = vdwg.mxu0
        %v1865 = vld [vmem:[%s771] sm:$0xf]
        %v1866 = vunpack.c.l.bf16 %v1865
        %v1867 = vadd.f32 %v1860, %v1866
        %v1868 = vld [vmem:[#allocation30] sm:$0x1]
        %v1869 = vld [vmem:[#allocation32] sm:$0x1]
        %1870 = vadd.xlane.f32.xlu0 %v1867
        %v1871 = vpop.xlane.xlu0 %1870
        %v1872 = vmul.f32 %v1871, 0.03125
        %v1873 = vsub.f32 %v1867, %v1872
        %v1874 = vlaneseq
        %v1875 = vand.u32 %v1874, 127
        %vm1876 = vcmp.lt.s32.totalorder %v1875, 32
        %v1877 = vsel %vm1876, 1, 0
        %vm1878 = vcmp.eq.s32.totalorder %v1877, 1
        %v1879 = vsel %vm1878, %v1873, 0.0
        %v1880 = vmul.f32 %v1879, %v1879
        %1881 = vadd.xlane.f32.xlu0 %v1880
        %v1882 = vpop.xlane.xlu0 %1881
        %v1883 = vmul.f32 %v1882, 0.03125
        %v1884 = vadd.f32 %v1883, 1e-05
        %v1885 = vrsqrt.pop %v1884
        %v1886 = vmul.f32 %v1879, %v1885
        %v1888 = vlaneseq
        %v1889 = vshrl.u32 %v1888, 7
        %v1890 = vsub.s32 0, %v1889
        %v1891 = vrot.slane %v1868, %v1890
        %v1893 = vmul.f32 %v1886, %v1891
        %v1895 = vlaneseq
        %v1896 = vshrl.u32 %v1895, 7
        %v1897 = vsub.s32 0, %v1896
        %v1898 = vrot.slane %v1869, %v1897
        %v1900 = vadd.f32 %v1893, %v1898
        %v1901 = vpack.c.bf16 %v1900, %v1900
        %v1902 = vld [vmem:[#allocation18] sm:$0xf]
        %v1903 = vld [vmem:[#allocation18 + $0x4] sm:$0xf]
        %v1904 = vld [vmem:[#allocation18 + $0x8] sm:$0xf]
        %v1905 = vld [vmem:[#allocation18 + $0xc] sm:$0xf]
        %v1906 = vld [vmem:[#allocation18 + $0x10] sm:$0xf]
        %v1907 = vld [vmem:[#allocation18 + $0x14] sm:$0xf]
        %v1908 = vld [vmem:[#allocation18 + $0x18] sm:$0xf]
        %v1909 = vld [vmem:[#allocation18 + $0x1c] sm:$0xf]
        %v1910 = vld [vmem:[#allocation18 + $0x20] sm:$0xf]
        %v1911 = vld [vmem:[#allocation18 + $0x24] sm:$0xf]
        %v1912 = vld [vmem:[#allocation18 + $0x28] sm:$0xf]
        %v1913 = vld [vmem:[#allocation18 + $0x2c] sm:$0xf]
        %v1914 = vld [vmem:[#allocation18 + $0x30] sm:$0xf]
        %v1915 = vld [vmem:[#allocation18 + $0x34] sm:$0xf]
        %v1916 = vld [vmem:[#allocation18 + $0x38] sm:$0xf]
        %v1917 = vld [vmem:[#allocation18 + $0x3c] sm:$0xf]
        %v1918 = vld [vmem:[#allocation27] sm:$0x1]
        %v1920 = vlaneseq
        %v1921 = vshrl.u32 %v1920, 7
        %v1922 = vsub.s32 0, %v1921
        %v1923 = vrot.slane %v1918, %v1922
        %v1941 = vunpack.c.l.b16 %v1902
        %v1942 = vunpack.c.l.b16 %v1903
        %v1943 = vunpack.c.l.b16 %v1904
        %v1944 = vunpack.c.l.b16 %v1905
        %v1945 = vunpack.c.l.b16 %v1906
        %v1946 = vunpack.c.l.b16 %v1907
        %v1947 = vunpack.c.l.b16 %v1908
        %v1948 = vunpack.c.l.b16 %v1909
        %v1949 = vunpack.c.l.b16 %v1910
        %v1950 = vunpack.c.l.b16 %v1911
        %v1951 = vunpack.c.l.b16 %v1912
        %v1952 = vunpack.c.l.b16 %v1913
        %v1953 = vunpack.c.l.b16 %v1914
        %v1954 = vunpack.c.l.b16 %v1915
        %v1955 = vunpack.c.l.b16 %v1916
        %v1956 = vunpack.c.l.b16 %v1917
        %v1957 = vpack.c.b16 %v1942, %v1941
        %v1958 = vpack.c.b16 %v1944, %v1943
        %v1959 = vpack.c.b16 %v1946, %v1945
        %v1960 = vpack.c.b16 %v1948, %v1947
        %v1961 = vpack.c.b16 %v1950, %v1949
        %v1962 = vpack.c.b16 %v1952, %v1951
        %v1963 = vpack.c.b16 %v1954, %v1953
        %v1964 = vpack.c.b16 %v1956, %v1955
        %1973 = vmatprep.subr.bf16.mxu0 0
        %1974 = vmatpush1.bf16.msra.mxu0 %v1957
        %1975 = vmatprep.subr.bf16.mxu0 0
        %1976 = vmatpush1.bf16.msra.mxu0 %v1958
        %1977 = vmatprep.subr.bf16.mxu0 0
        %1978 = vmatpush1.bf16.msra.mxu0 %v1959
        %1979 = vmatprep.subr.bf16.mxu0 0
        %1980 = vmatpush1.bf16.msra.mxu0 %v1960
        %1981 = vmatprep.subr.bf16.mxu0 0
        %1982 = vmatpush1.bf16.msra.mxu0 %v1961
        %1983 = vmatprep.subr.bf16.mxu0 0
        %1984 = vmatpush1.bf16.msra.mxu0 %v1962
        %1985 = vmatprep.subr.bf16.mxu0 0
        %1986 = vmatpush1.bf16.msra.mxu0 %v1963
        %1987 = vmatprep.subr.bf16.mxu0 0
        %1988 = vmatpush1.bf16.msra.mxu0 %v1964
        %1989 = vmatprep.subr.bf16.mxu0 0
        %1990 = vmatpush1.bf16.msra.mxu0 0
        %1991 = vmatprep.subr.bf16.mxu0 0
        %1992 = vmatpush1.bf16.msra.mxu0 0
        %1993 = vmatprep.subr.bf16.mxu0 0
        %1994 = vmatpush1.bf16.msra.mxu0 0
        %1995 = vmatprep.subr.bf16.mxu0 0
        %1996 = vmatpush1.bf16.msra.mxu0 0
        %1997 = vmatprep.subr.bf16.mxu0 0
        %1998 = vmatpush1.bf16.msra.mxu0 0
        %1999 = vmatprep.subr.bf16.mxu0 0
        %2000 = vmatpush1.bf16.msra.mxu0 0
        %2001 = vmatprep.subr.bf16.mxu0 0
        %2002 = vmatpush1.bf16.msra.mxu0 0
        %2003 = vmatprep.subr.bf16.mxu0 0
        %2004 = vmatpush1.bf16.msra.mxu0 0
        %2005 = vmatprep.mubr.bf16.mxu0 0
        %2006 = vmatmul.mubr.bf16.gmra.mrb[0].mxu0 %v1901
        %v2007 = vpop.f32.mrb[0].mxu0
        %v2008 = vadd.f32 %v1923, %v2007
        %v2009 = vpop.f32.mrb[0].mxu0
        %v2010 = vpop.f32.mrb[0].mxu0
        %v2011 = vpop.f32.mrb[0].mxu0
        %2012 = vdwg.mxu0
        %v2013 = vmax.f32 %v2008, 0.0
        %v2014 = vpack.c.bf16 %v2013, %v2013
        %v2015 = vld [vmem:[#allocation20] sm:$0xf]
        %v2016 = vld [vmem:[#allocation20 + $0x4] sm:$0xf]
        %v2017 = vld [vmem:[#allocation20 + $0x8] sm:$0xf]
        %v2018 = vld [vmem:[#allocation20 + $0xc] sm:$0xf]
        %v2019 = vld [vmem:[#allocation20 + $0x10] sm:$0xf]
        %v2020 = vld [vmem:[#allocation20 + $0x14] sm:$0xf]
        %v2021 = vld [vmem:[#allocation20 + $0x18] sm:$0xf]
        %v2022 = vld [vmem:[#allocation20 + $0x1c] sm:$0xf]
        %v2023 = vld [vmem:[#allocation20 + $0x20] sm:$0xf]
        %v2024 = vld [vmem:[#allocation20 + $0x24] sm:$0xf]
        %v2025 = vld [vmem:[#allocation20 + $0x28] sm:$0xf]
        %v2026 = vld [vmem:[#allocation20 + $0x2c] sm:$0xf]
        %v2027 = vld [vmem:[#allocation20 + $0x30] sm:$0xf]
        %v2028 = vld [vmem:[#allocation20 + $0x34] sm:$0xf]
        %v2029 = vld [vmem:[#allocation20 + $0x38] sm:$0xf]
        %v2030 = vld [vmem:[#allocation20 + $0x3c] sm:$0xf]
        %v2031 = vld [vmem:[#allocation29] sm:$0x1]
        %v2033 = vlaneseq
        %v2034 = vshrl.u32 %v2033, 7
        %v2035 = vsub.s32 0, %v2034
        %v2036 = vrot.slane %v2031, %v2035
        %v2054 = vunpack.c.l.b16 %v2015
        %v2055 = vunpack.c.l.b16 %v2016
        %v2056 = vunpack.c.l.b16 %v2017
        %v2057 = vunpack.c.l.b16 %v2018
        %v2058 = vunpack.c.l.b16 %v2019
        %v2059 = vunpack.c.l.b16 %v2020
        %v2060 = vunpack.c.l.b16 %v2021
        %v2061 = vunpack.c.l.b16 %v2022
        %v2062 = vunpack.c.l.b16 %v2023
        %v2063 = vunpack.c.l.b16 %v2024
        %v2064 = vunpack.c.l.b16 %v2025
        %v2065 = vunpack.c.l.b16 %v2026
        %v2066 = vunpack.c.l.b16 %v2027
        %v2067 = vunpack.c.l.b16 %v2028
        %v2068 = vunpack.c.l.b16 %v2029
        %v2069 = vunpack.c.l.b16 %v2030
        %v2070 = vpack.c.b16 %v2055, %v2054
        %v2071 = vpack.c.b16 %v2057, %v2056
        %v2072 = vpack.c.b16 %v2059, %v2058
        %v2073 = vpack.c.b16 %v2061, %v2060
        %v2074 = vpack.c.b16 %v2063, %v2062
        %v2075 = vpack.c.b16 %v2065, %v2064
        %v2076 = vpack.c.b16 %v2067, %v2066
        %v2077 = vpack.c.b16 %v2069, %v2068
        %2086 = vmatprep.subr.bf16.mxu0 0
        %2087 = vmatpush1.bf16.msra.mxu0 %v2070
        %2088 = vmatprep.subr.bf16.mxu0 0
        %2089 = vmatpush1.bf16.msra.mxu0 %v2071
        %2090 = vmatprep.subr.bf16.mxu0 0
        %2091 = vmatpush1.bf16.msra.mxu0 %v2072
        %2092 = vmatprep.subr.bf16.mxu0 0
        %2093 = vmatpush1.bf16.msra.mxu0 %v2073
        %2094 = vmatprep.subr.bf16.mxu0 0
        %2095 = vmatpush1.bf16.msra.mxu0 %v2074
        %2096 = vmatprep.subr.bf16.mxu0 0
        %2097 = vmatpush1.bf16.msra.mxu0 %v2075
        %2098 = vmatprep.subr.bf16.mxu0 0
        %2099 = vmatpush1.bf16.msra.mxu0 %v2076
        %2100 = vmatprep.subr.bf16.mxu0 0
        %2101 = vmatpush1.bf16.msra.mxu0 %v2077
        %2102 = vmatprep.subr.bf16.mxu0 0
        %2103 = vmatpush1.bf16.msra.mxu0 0
        %2104 = vmatprep.subr.bf16.mxu0 0
        %2105 = vmatpush1.bf16.msra.mxu0 0
        %2106 = vmatprep.subr.bf16.mxu0 0
        %2107 = vmatpush1.bf16.msra.mxu0 0
        %2108 = vmatprep.subr.bf16.mxu0 0
        %2109 = vmatpush1.bf16.msra.mxu0 0
        %2110 = vmatprep.subr.bf16.mxu0 0
        %2111 = vmatpush1.bf16.msra.mxu0 0
        %2112 = vmatprep.subr.bf16.mxu0 0
        %2113 = vmatpush1.bf16.msra.mxu0 0
        %2114 = vmatprep.subr.bf16.mxu0 0
        %2115 = vmatpush1.bf16.msra.mxu0 0
        %2116 = vmatprep.subr.bf16.mxu0 0
        %2117 = vmatpush1.bf16.msra.mxu0 0
        %2118 = vmatprep.mubr.bf16.mxu0 0
        %2119 = vmatmul.mubr.bf16.gmra.mrb[0].mxu0 %v2014
        %v2120 = vpop.f32.mrb[0].mxu0
        %v2121 = vadd.f32 %v2036, %v2120
        %v2122 = vpop.f32.mrb[0].mxu0
        %v2123 = vpop.f32.mrb[0].mxu0
        %v2124 = vpop.f32.mrb[0].mxu0
        %2125 = vdwg.mxu0
        %v2126 = vadd.f32 %v2121, %v1900
        %v2127 = vld [vmem:[#allocation33] sm:$0x1]
        %v2128 = vld [vmem:[#allocation35] sm:$0x1]
        %2129 = vadd.xlane.f32.xlu0 %v2126
        %v2130 = vpop.xlane.xlu0 %2129
        %v2131 = vmul.f32 %v2130, 0.03125
        %v2132 = vsub.f32 %v2126, %v2131
        %v2133 = vsel %vm1878, %v2132, 0.0
        %v2134 = vmul.f32 %v2133, %v2133
        %2135 = vadd.xlane.f32.xlu0 %v2134
        %v2136 = vpop.xlane.xlu0 %2135
        %v2137 = vmul.f32 %v2136, 0.03125
        %v2138 = vadd.f32 %v2137, 1e-05
        %v2139 = vrsqrt.pop %v2138
        %v2140 = vmul.f32 %v2133, %v2139
        %v2142 = vlaneseq
        %v2143 = vshrl.u32 %v2142, 7
        %v2144 = vsub.s32 0, %v2143
        %v2145 = vrot.slane %v2127, %v2144
        %v2147 = vmul.f32 %v2140, %v2145
        %v2149 = vlaneseq
        %v2150 = vshrl.u32 %v2149, 7
        %v2151 = vsub.s32 0, %v2150
        %v2152 = vrot.slane %v2128, %v2151
        %v2154 = vadd.f32 %v2147, %v2152
        %2155 = vst [vmem:[%s917] sm:$0xff] %v2154
        %s2156 = sand.u32 %s485, 1
        %s2157 = scalar_lea.sflag [#allocation8], %s2156
        %s2158 = sand.u32 %s485, 1
        %s2159 = smul.addr %s2158, 8
        %s2160 = scalar_lea.vmem [#allocation36], %s2159
        // Predicated region
        $region177: #{tpu_custom_call.1} parent=95 // pred_check
          %p2161 = pneg %p495
        $region178: #{tpu_custom_call.1} parent=95 // pred_check_branch
          %2163 = sbr.rel (%p2161) target = $region180
        $region179: #{tpu_custom_call.1} parent=95 // pred_region
          %s2165 = ssub.s32 128, 128
          %2166 = vsyncadd %s2157, %s2165
          %s2167 = sadd.s32 %s52, %s51
          %s2168 = smul.addr %s2167, 128
          %s2169 = scalar_lea.hbm %s19, %s2168
          %s2171 = sshll.u32 %s2160, 4
          %s2172 = int_to_ptr.vmem [resolvable:$true] %s2171
          %2174 = dma.vmem_to_hbm [thread:$0]  %s2172, 128, %s2169, %s2157
        $region180: #{tpu_custom_call.1} parent=95 // pred_fallthru
          _
      $region96: #{tpu_custom_call.1} parent=5 // pred_fallthru
        _
      %p2175 = scmp.le.s32.totalorder 2, %s42
      // Predicated region
      $region181: #{tpu_custom_call.1} parent=5 // pred_check
        %p2176 = pneg %p2175
      $region182: #{tpu_custom_call.1} parent=5 // pred_check_branch
        %2178 = sbr.rel (%p2176) target = $region184
      $region183: #{tpu_custom_call.1} parent=5 // pred_region
        %s2179 = ssub.s32 %s42, 2
        // Predicated region
        $region185: #{tpu_custom_call.1} parent=183 // pred_check
          %p2180 = pneg %p501
        $region186: #{tpu_custom_call.1} parent=183 // pred_check_branch
          %2182 = sbr.rel (%p2180) target = $region188
        $region187: #{tpu_custom_call.1} parent=183 // pred_region
          %s2183 = sand.u32 %s486, 1
          %s2184 = scalar_lea.sflag [#allocation8], %s2183
          %s2185 = sand.u32 %s486, 1
          %s2186 = smul.addr %s2185, 8
          %s2187 = scalar_lea.vmem [#allocation36], %s2186
          %2188 = dma.done %s2184, 128
        $region188: #{tpu_custom_call.1} parent=183 // pred_fallthru
          _
      $region184: #{tpu_custom_call.1} parent=5 // pred_fallthru
        _
    $region6: #{tpu_custom_call.1} parent=1 // loop_footer
      %s46 = sadd.s32 1, %s42
    $region7: #{tpu_custom_call.1} parent=1 // loop_footer_branch
      %41 = sbr.rel target = $region3
    $region8: #{tpu_custom_call.1} parent=1 // loop_exit
      _
    %2189 = vsyncpa [#allocation7], 1
    %s2190 = scalar_lea.sflag [#allocation7], 1
    %2191 = vsyncpa %s2190, 1
    %2192 = vsyncpa [#allocation10], 1
    %s2193 = scalar_lea.sflag [#allocation10], 1
    %2194 = vsyncpa %s2193, 1
    %2195 = vsyncpa [#allocation13], 1
    %2196 = vsyncpa [#allocation16], 1
    %2197 = vsyncpa [#allocation19], 1
    %2198 = vsyncpa [#allocation22], 1
    %2199 = vsyncpa [#allocation25], 1
    %2200 = vsyncpa [#allocation28], 1
    %2201 = vsyncpa [#allocation31], 1
    %2202 = vsyncpa [#allocation34], 1
    %2203 = vsyncpa [#allocation8], 1
    %s2204 = scalar_lea.sflag [#allocation8], 1
    %2205 = vsyncpa %s2204, 1

</llo_original>
